<compile_context>
chip_gen: v7x
topology: tpu7x:2x2x1
jax: 0.10.0
libtpu: 0.0.40
codegen_flags: <defaults>
</compile_context>

<pallas_src>
import functools

import jax
import jax.numpy as jnp
from jax import lax
from jax.experimental import pallas as pl
from jax.experimental.pallas import tpu as pltpu


def _round_up(x, m):
    return ((x + m - 1) // m) * m


# ---------------------------------------------------------------------------
# Host-side weight preparation (pure JAX, runs once under jit)
# ---------------------------------------------------------------------------
def _conv1_weights(w, b, dtype):
    # w: (10, 1, 5, 5) = (co, ci=1, kh, kw) torch layout, b: (10,)
    # Kernel LHS row (b, p) = concat over rb of x[b, 2p + j_rb, 0:28], where
    # rb = par*3 + m and j_rb = 2m + par  ->  j = [0, 2, 4, 1, 3, 5].
    # Output col = hpar*256 + s*128 + (owp*10 + co); output pixel
    # (oh = 2p+hpar, ow = 2*owp+s, co).  Lanes 120..127 of each 128-block = 0.
    wk = w[:, 0].astype(jnp.float32)                                   # (co, kh, kw)
    j = jnp.array([0, 2, 4, 1, 3, 5])
    kh = j[:, None] - jnp.arange(2)[None, :]                           # (rb, hpar)
    Hm = (kh[:, :, None] == jnp.arange(5)[None, None, :]).astype(jnp.float32)
    ow = 2 * jnp.arange(12)[None, :] + jnp.arange(2)[:, None]          # (s, owp)
    kw = jnp.arange(28)[:, None, None] - ow[None, :, :]                # (iw, s, owp)
    Wm = (kw[..., None] == jnp.arange(5)).astype(jnp.float32)          # (iw, s, owp, kw)
    t = jnp.einsum("rhk,iswl,okl->rihswo", Hm, Wm, wk)                 # (6,28,2,2,12,10)
    t = t.reshape(6, 28, 2, 2, 120)
    t = jnp.pad(t, ((0, 0), (0, 0), (0, 0), (0, 0), (0, 8)))           # 120 -> 128 lanes
    t = t.reshape(168, 512).astype(dtype)
    brow = jnp.pad(jnp.tile(b.astype(jnp.float32), 12), (0, 8)).reshape(1, 128)
    return t, brow


def _conv2_weights(w, b, dtype):
    # w: (20, 10, 5, 5), b: (20,)
    # Rows: kh*128 + (iw*10 + ci)  (rows 120..127 of each kh block are zero),
    # cols: s*128 + (owp*20 + co)  (lanes 80..127 of each 128-block are zero).
    wt = jnp.transpose(w.astype(jnp.float32), (2, 3, 1, 0))            # (kh, kw, ci, co)
    iw = jnp.arange(12)[:, None]
    ow = jnp.arange(8)[None, :]
    kw = iw - ow
    valid = ((kw >= 0) & (kw < 5)).astype(jnp.float32)
    t = wt[:, jnp.clip(kw, 0, 4), :, :] * valid[None, :, :, None, None]  # (5,12,8,10,20)
    t = jnp.transpose(t, (0, 1, 3, 2, 4))                              # (kh, iw, ci, ow, co)
    t = t.reshape(5, 12, 10, 4, 2, 20)                                 # ow -> (owp, s)
    t = jnp.transpose(t, (0, 1, 2, 4, 3, 5))                           # (kh, iw, ci, s, owp, co)
    t = t.reshape(5, 120, 2, 80)
    t = jnp.pad(t, ((0, 0), (0, 8), (0, 0), (0, 48)))                  # 120->128 rows, 80->128 cols
    t = t.reshape(640, 256).astype(dtype)
    brow = jnp.pad(jnp.tile(b.astype(jnp.float32), 4), (0, 48)).reshape(1, 128)
    return t, brow


def _fc_weights(p, dtype):
    # PyTorch view(-1,320) flattens NCHW as c*16 + h*4 + w; the kernel produces
    # one pooled conv2 row per h with lane = w*20 + c (padded to 128).
    wf1 = p["fc1_w"].astype(jnp.float32).reshape(50, 20, 4, 4)          # (o, c, h, w)
    wf1 = jnp.transpose(wf1, (2, 3, 1, 0)).reshape(4, 80, 50)           # (h, w*20+c, o)
    wf1 = jnp.pad(wf1, ((0, 0), (0, 48), (0, 0))).astype(dtype)         # (4, 128, 50)
    wf2 = jnp.transpose(p["fc2_w"].astype(jnp.float32)).astype(dtype)   # (50, 10)
    return (wf1, p["fc1_b"].astype(jnp.float32).reshape(1, 50),
            wf2, p["fc2_b"].astype(jnp.float32).reshape(1, 10))


# ---------------------------------------------------------------------------
# Fused kernel: conv1 -> pool -> relu -> conv2 -> pool -> relu -> fc1 -> relu
#               -> fc2 -> log_softmax            (one batch tile of tb images)
# ---------------------------------------------------------------------------
def net_fused_kernel(xe_ref, xo_ref, w1_ref, b1_ref, w2_ref, b2_ref,
                     wf1_ref, bf1_ref, wf2_ref, bf2_ref,
                     o_ref, h1_s, pw2_s):
    f32 = jnp.float32
    bf16 = jnp.bfloat16
    tb = xe_ref.shape[0]

    # ---- conv1: single im2col matmul; whole 2x2 pool lives in the lane dim ---
    # LHS row (b, p) holds the 6 input rows {2p .. 2p+5}; rows p=12..15 are
    # padding (never consumed).  16 rows / image keeps every reshape layout-
    # preserving (multiple of the bf16 sublane pack of 16).
    pieces = [xe_ref[:, m:m + 16, :].astype(bf16) for m in range(3)]
    pieces += [xo_ref[:, m:m + 16, :].astype(bf16) for m in range(3)]
    lhs1 = jnp.concatenate(pieces, axis=2).reshape(tb * 16, 6 * 28)     # (tb*16, 168)
    acc1 = jnp.dot(lhs1, w1_ref[...], preferred_element_type=f32)       # (tb*16, 512)
    h1 = jnp.maximum(jnp.maximum(acc1[:, 0:128], acc1[:, 128:256]),
                     jnp.maximum(acc1[:, 256:384], acc1[:, 384:512]))   # 2x2 max-pool
    h1 = jnp.maximum(h1 + b1_ref[...], 0.0)                             # bias + ReLU (f32)
    h1_s[...] = h1.reshape(tb, 16, 128)                                  # lane = iw*10 + ci

    # ---- conv2: single im2col matmul (128-aligned lane offsets in the concat) -
    # TODO(synk): Dropout2d / F.dropout are train-time ops; this is the eval
    #             forward, so both are identity (no RNG state in the kernel).
    lhs2 = jnp.concatenate([h1_s[:, kh:kh + 8, :] for kh in range(5)],
                           axis=2).reshape(tb * 8, 5 * 128).astype(bf16)  # (tb*8, 640)
    acc2 = jnp.dot(lhs2, w2_ref[...], preferred_element_type=f32)        # (tb*8, 256)
    pw2_s[...] = jnp.maximum(acc2[:, :128], acc2[:, 128:]).reshape(tb, 8, 128)  # W-pool

    # ---- H-pool + bias + ReLU fused into fc1 (4 accumulated K=128 dots) -------
    b2 = b2_ref[...]
    z = None
    for p in range(4):
        r = jnp.maximum(pw2_s[:, 2 * p, :], pw2_s[:, 2 * p + 1, :]) + b2
        r = jnp.maximum(r, 0.0).astype(bf16)                             # (tb, 128)
        d = jnp.dot(r, wf1_ref[p], preferred_element_type=f32)           # (tb, 50)
        z = d if z is None else z + d
    z = jnp.maximum(z + bf1_ref[...], 0.0)                               # fc1 + ReLU

    # ---- fc2 + log_softmax -----------------------------------------------------
    logits = jnp.dot(z.astype(bf16), wf2_ref[...], preferred_element_type=f32)
    logits = logits + bf2_ref[...]
    m = jnp.max(logits, axis=1, keepdims=True)
    lse = m + jnp.log(jnp.sum(jnp.exp(logits - m), axis=1, keepdims=True))
    o_ref[...] = logits - lse


# ---------------------------------------------------------------------------
# Wrapper
# ---------------------------------------------------------------------------
@functools.partial(jax.jit, static_argnames=("block_n",))
def net_forward(x_nchw, params, block_n=256):
    # x_nchw: (N, 1, 28, 28) like the PyTorch module; returns (N, 10) log-probs.
    n = x_nchw.shape[0]
    x = x_nchw.reshape(n, 28, 28).astype(jnp.float32)

    # Batch tile: multiple of 8; default 256 (~30 MB working set, fits every
    # generation's VMEM with the explicit limit below).  Keep >= 2 grid steps
    # when there is enough work so the "parallel" axis feeds both v7x cores.
    tb = _round_up(min(block_n, n), 8)
    if n > tb and n < 2 * tb:
        tb = _round_up((n + 1) // 2, 8)
    n_pad = _round_up(n, tb)

    # Split rows by parity so the H component of the 2x2 pool can live in the
    # lane dimension: x{e,o}[b, q, :] = x[b, 2q + par, :].  q padded 14 -> 18
    # (rows 14..17 zero) so every in-kernel window slice has height 16.
    x = x.reshape(n, 14, 2, 28)
    x = jnp.pad(x, ((0, n_pad - n), (0, 4), (0, 0), (0, 0)))
    xe = x[:, :, 0, :]
    xo = x[:, :, 1, :]

    mxu_dt = jnp.bfloat16  # MXU operands; accumulation & VPU work stay f32
    w1, b1 = _conv1_weights(params["conv1_w"], params["conv1_b"], mxu_dt)
    w2, b2 = _conv2_weights(params["conv2_w"], params["conv2_b"], mxu_dt)
    wf1, bf1, wf2, bf2 = _fc_weights(params, mxu_dt)

    out = pl.pallas_call(
        net_fused_kernel,
        out_shape=jax.ShapeDtypeStruct((n_pad, 10), jnp.float32),
        grid=(n_pad // tb,),
        in_specs=[
            pl.BlockSpec((tb, 18, 28), lambda i: (i, 0, 0)),     # even input rows
            pl.BlockSpec((tb, 18, 28), lambda i: (i, 0, 0)),     # odd input rows
            pl.BlockSpec((168, 512), lambda i: (0, 0)),          # conv1 Toeplitz (bf16)
            pl.BlockSpec((1, 128), lambda i: (0, 0)),            # conv1 bias row
            pl.BlockSpec((640, 256), lambda i: (0, 0)),          # conv2 Toeplitz (bf16)
            pl.BlockSpec((1, 128), lambda i: (0, 0)),            # conv2 bias row
            pl.BlockSpec((4, 128, 50), lambda i: (0, 0, 0)),     # fc1 per-row blocks
            pl.BlockSpec((1, 50), lambda i: (0, 0)),             # fc1 bias
            pl.BlockSpec((50, 10), lambda i: (0, 0)),            # fc2 weight
            pl.BlockSpec((1, 10), lambda i: (0, 0)),             # fc2 bias
        ],
        out_specs=pl.BlockSpec((tb, 10), lambda i: (i, 0)),
        scratch_shapes=[
            pltpu.VMEM((tb, 16, 128), jnp.float32),   # pooled conv1 activation
            pltpu.VMEM((tb, 8, 128), jnp.float32),    # W-pooled conv2 output
        ],
        compiler_params=pltpu.CompilerParams(
            dimension_semantics=("parallel",),
            # Raise the scoped VMEM limit (v5e default is only 16 MiB); stays
            # below v7x's 64 MiB physical VMEM.
            vmem_limit_bytes=60 * 1024 * 1024,
        ),
    )(xe, xo, w1, b1, w2, b2, wf1, bf1, wf2, bf2)
    return out[:n]


def init_params(key):
    ks = jax.random.split(key, 8)
    s = 0.1
    rnd = jax.random.normal
    return dict(
        conv1_w=s * rnd(ks[0], (10, 1, 5, 5), jnp.float32),
        conv1_b=s * rnd(ks[1], (10,), jnp.float32),
        conv2_w=s * rnd(ks[2], (20, 10, 5, 5), jnp.float32),
        conv2_b=s * rnd(ks[3], (20,), jnp.float32),
        fc1_w=s * rnd(ks[4], (50, 320), jnp.float32),
        fc1_b=s * rnd(ks[5], (50,), jnp.float32),
        fc2_w=s * rnd(ks[6], (10, 50), jnp.float32),
        fc2_b=s * rnd(ks[7], (10,), jnp.float32),
    )


# ---------------------------------------------------------------------------
# Pure-JAX reference (PyTorch semantics).  mxu_dtype=bfloat16 reproduces the
# kernel's MXU numerics (bf16 operands, f32 accumulation); float32 gives the
# full-precision baseline.
# ---------------------------------------------------------------------------
def reference_forward(x_nchw, p, mxu_dtype=jnp.bfloat16):
    f32 = jnp.float32
    prec = lax.Precision.HIGHEST if mxu_dtype == jnp.float32 else lax.Precision.DEFAULT

    def conv(x, w):
        return lax.conv_general_dilated(
            x.astype(mxu_dtype), w.astype(mxu_dtype), (1, 1), "VALID",
            dimension_numbers=("NCHW", "OIHW", "NCHW"),
            preferred_element_type=f32, precision=prec)

    y = conv(x_nchw.astype(f32), p["conv1_w"]) + p["conv1_b"][None, :, None, None]
    y = lax.reduce_window(y, -jnp.inf, lax.max, (1, 1, 2, 2), (1, 1, 2, 2), "VALID")
    y = jnp.maximum(y, 0.0)
    y = conv(y, p["conv2_w"]) + p["conv2_b"][None, :, None, None]
    y = lax.reduce_window(y, -jnp.inf, lax.max, (1, 1, 2, 2), (1, 1, 2, 2), "VALID")
    y = jnp.maximum(y, 0.0)
    y = y.reshape(y.shape[0], 320)                       # NCHW flatten = (c, h, w)
    y = jnp.dot(y.astype(mxu_dtype), p["fc1_w"].T.astype(mxu_dtype),
                preferred_element_type=f32, precision=prec) + p["fc1_b"]
    y = jnp.maximum(y, 0.0)
    y = jnp.dot(y.astype(mxu_dtype), p["fc2_w"].T.astype(mxu_dtype),
                preferred_element_type=f32, precision=prec) + p["fc2_b"]
    return jax.nn.log_softmax(y, axis=1)


if __name__ == "__main__":
    key = jax.random.PRNGKey(0)
    kx, kp = jax.random.split(key)
    n = 16
    x_nchw = jax.random.normal(kx, (n, 1, 28, 28), jnp.float32)
    params = init_params(kp)

    out = jax.block_until_ready(net_forward(x_nchw, params))             # 1 grid step
    assert out.shape == (n, 10)
    out_small = jax.block_until_ready(net_forward(x_nchw, params, block_n=8))  # 2 steps

    ref_bf16 = reference_forward(x_nchw, params, mxu_dtype=jnp.bfloat16)
    ref_f32 = reference_forward(x_nchw, params, mxu_dtype=jnp.float32)

    err_match = float(jnp.max(jnp.abs(out - ref_bf16)))
    err_match2 = float(jnp.max(jnp.abs(out_small - ref_bf16)))
    err_f32 = float(jnp.max(jnp.abs(out - ref_f32)))
    assert err_match < 1e-2, f"mismatch vs bf16-matched reference: {err_match}"
    assert err_match2 < 1e-2, f"mismatch (block_n=8) vs bf16-matched reference: {err_match2}"
    assert err_f32 < 0.25, f"bf16-MXU precision drift vs f32 reference too large: {err_f32}"
    print("KERNEL_OK")
</pallas_src>

<mosaic_0001>
module attributes {stable_mosaic.version = 11 : i64} {
  func.func @net_fused_kernel(%arg0: i32, %arg1: memref<16x18x28xf32, #tpu.memory_space<vmem>>, %arg2: memref<16x18x28xf32, #tpu.memory_space<vmem>>, %arg3: memref<168x512xbf16, #tpu.memory_space<vmem>>, %arg4: memref<1x128xf32, #tpu.memory_space<vmem>>, %arg5: memref<640x256xbf16, #tpu.memory_space<vmem>>, %arg6: memref<1x128xf32, #tpu.memory_space<vmem>>, %arg7: memref<4x128x50xbf16, #tpu.memory_space<vmem>>, %arg8: memref<1x50xf32, #tpu.memory_space<vmem>>, %arg9: memref<50x10xbf16, #tpu.memory_space<vmem>>, %arg10: memref<1x10xf32, #tpu.memory_space<vmem>>, %arg11: memref<16x10xf32, #tpu.memory_space<vmem>>, %arg12: memref<16x16x128xf32, #tpu.memory_space<vmem>>, %arg13: memref<16x8x128xf32, #tpu.memory_space<vmem>>) attributes {dimension_semantics = [#tpu.dimension_semantics<parallel>], iteration_bounds = array<i64: 1>, scalar_prefetch = 0 : i64, scratch_operands = 2 : i64, tpu.core_type = #tpu.core_type<tc>, window_params = [{transform_indices = @transform_0, window_bounds = array<i64: 16, 18, 28>}, {transform_indices = @transform_1, window_bounds = array<i64: 16, 18, 28>}, {pipeline_mode = #tpu.pipeline_mode<synchronous>, transform_indices = @transform_2, window_bounds = array<i64: 168, 512>}, {pipeline_mode = #tpu.pipeline_mode<synchronous>, transform_indices = @transform_3, window_bounds = array<i64: 1, 128>}, {pipeline_mode = #tpu.pipeline_mode<synchronous>, transform_indices = @transform_4, window_bounds = array<i64: 640, 256>}, {pipeline_mode = #tpu.pipeline_mode<synchronous>, transform_indices = @transform_5, window_bounds = array<i64: 1, 128>}, {pipeline_mode = #tpu.pipeline_mode<synchronous>, transform_indices = @transform_6, window_bounds = array<i64: 4, 128, 50>}, {pipeline_mode = #tpu.pipeline_mode<synchronous>, transform_indices = @transform_7, window_bounds = array<i64: 1, 50>}, {pipeline_mode = #tpu.pipeline_mode<synchronous>, transform_indices = @transform_8, window_bounds = array<i64: 50, 10>}, {pipeline_mode = #tpu.pipeline_mode<synchronous>, transform_indices = @transform_9, window_bounds = array<i64: 1, 10>}, {transform_indices = @transform_10, window_bounds = array<i64: 16, 10>}]} {
    %c0 = arith.constant 0 : index
    %c0_0 = arith.constant 0 : index
    %c0_1 = arith.constant 0 : index
    %0 = vector.load %arg1[%c0, %c0_0, %c0_1] : memref<16x18x28xf32, #tpu.memory_space<vmem>>, vector<16x16x28xf32>
    %1 = arith.truncf %0 : vector<16x16x28xf32> to vector<16x16x28xbf16>
    %c0_2 = arith.constant 0 : index
    %c1 = arith.constant 1 : index
    %c0_3 = arith.constant 0 : index
    %2 = vector.load %arg1[%c0_2, %c1, %c0_3] : memref<16x18x28xf32, #tpu.memory_space<vmem>>, vector<16x16x28xf32>
    %3 = arith.truncf %2 : vector<16x16x28xf32> to vector<16x16x28xbf16>
    %c0_4 = arith.constant 0 : index
    %c2 = arith.constant 2 : index
    %c0_5 = arith.constant 0 : index
    %4 = vector.load %arg1[%c0_4, %c2, %c0_5] : memref<16x18x28xf32, #tpu.memory_space<vmem>>, vector<16x16x28xf32>
    %5 = arith.truncf %4 : vector<16x16x28xf32> to vector<16x16x28xbf16>
    %c0_6 = arith.constant 0 : index
    %c0_7 = arith.constant 0 : index
    %c0_8 = arith.constant 0 : index
    %6 = vector.load %arg2[%c0_6, %c0_7, %c0_8] : memref<16x18x28xf32, #tpu.memory_space<vmem>>, vector<16x16x28xf32>
    %7 = arith.truncf %6 : vector<16x16x28xf32> to vector<16x16x28xbf16>
    %c0_9 = arith.constant 0 : index
    %c1_10 = arith.constant 1 : index
    %c0_11 = arith.constant 0 : index
    %8 = vector.load %arg2[%c0_9, %c1_10, %c0_11] : memref<16x18x28xf32, #tpu.memory_space<vmem>>, vector<16x16x28xf32>
    %9 = arith.truncf %8 : vector<16x16x28xf32> to vector<16x16x28xbf16>
    %c0_12 = arith.constant 0 : index
    %c2_13 = arith.constant 2 : index
    %c0_14 = arith.constant 0 : index
    %10 = vector.load %arg2[%c0_12, %c2_13, %c0_14] : memref<16x18x28xf32, #tpu.memory_space<vmem>>, vector<16x16x28xf32>
    %11 = arith.truncf %10 : vector<16x16x28xf32> to vector<16x16x28xbf16>
    %12 = tpu.concatenate %1, %3, %5, %7, %9, %11 in 2 : vector<16x16x28xbf16>, vector<16x16x28xbf16>, vector<16x16x28xbf16>, vector<16x16x28xbf16>, vector<16x16x28xbf16>, vector<16x16x28xbf16> -> vector<16x16x168xbf16>
    %13 = vector.shape_cast %12 : vector<16x16x168xbf16> to vector<256x168xbf16>
    %c0_15 = arith.constant 0 : index
    %c0_16 = arith.constant 0 : index
    %14 = vector.load %arg3[%c0_15, %c0_16] : memref<168x512xbf16, #tpu.memory_space<vmem>>, vector<168x512xbf16>
    %cst = arith.constant dense<0.000000e+00> : vector<256x512xf32>
    %15 = tpu.matmul %13, %14, %cst {dimension_numbers = #tpu.dot_dimension_numbers<[1], [0], [0], [1], [0, 0, 1, 1], [], []>} : vector<256x168xbf16>, vector<168x512xbf16>, vector<256x512xf32> -> vector<256x512xf32>
    %16 = vector.extract_strided_slice %15 {offsets = [0, 0], sizes = [256, 128], strides = [1, 1]} : vector<256x512xf32> to vector<256x128xf32>
    %17 = vector.extract_strided_slice %15 {offsets = [0, 128], sizes = [256, 128], strides = [1, 1]} : vector<256x512xf32> to vector<256x128xf32>
    %18 = arith.maximumf %16, %17 : vector<256x128xf32>
    %19 = vector.extract_strided_slice %15 {offsets = [0, 256], sizes = [256, 128], strides = [1, 1]} : vector<256x512xf32> to vector<256x128xf32>
    %20 = vector.extract_strided_slice %15 {offsets = [0, 384], sizes = [256, 128], strides = [1, 1]} : vector<256x512xf32> to vector<256x128xf32>
    %21 = arith.maximumf %19, %20 : vector<256x128xf32>
    %22 = arith.maximumf %18, %21 : vector<256x128xf32>
    %c0_17 = arith.constant 0 : index
    %c0_18 = arith.constant 0 : index
    %23 = vector.load %arg4[%c0_17, %c0_18] : memref<1x128xf32, #tpu.memory_space<vmem>>, vector<1x128xf32>
    %24 = vector.broadcast %23 : vector<1x128xf32> to vector<256x128xf32>
    %25 = arith.addf %22, %24 : vector<256x128xf32>
    %cst_19 = arith.constant 0.000000e+00 : f32
    %26 = vector.broadcast %cst_19 : f32 to vector<256x128xf32>
    %27 = arith.maximumf %25, %26 : vector<256x128xf32>
    %28 = vector.shape_cast %27 : vector<256x128xf32> to vector<16x16x128xf32>
    %c0_20 = arith.constant 0 : index
    %c0_21 = arith.constant 0 : index
    %c0_22 = arith.constant 0 : index
    %29 = vector.load %arg12[%c0_20, %c0_21, %c0_22] : memref<16x16x128xf32, #tpu.memory_space<vmem>>, vector<16x16x128xf32>
    tpu.vector_store %arg12[%c0_20, %c0_21, %c0_22], %28 {strides = array<i32>} : memref<16x16x128xf32, #tpu.memory_space<vmem>>, vector<16x16x128xf32>,
    %c0_23 = arith.constant 0 : index
    %c0_24 = arith.constant 0 : index
    %c0_25 = arith.constant 0 : index
    %30 = vector.load %arg12[%c0_23, %c0_24, %c0_25] : memref<16x16x128xf32, #tpu.memory_space<vmem>>, vector<16x8x128xf32>
    %c0_26 = arith.constant 0 : index
    %c1_27 = arith.constant 1 : index
    %c0_28 = arith.constant 0 : index
    %31 = vector.load %arg12[%c0_26, %c1_27, %c0_28] : memref<16x16x128xf32, #tpu.memory_space<vmem>>, vector<16x8x128xf32>
    %c0_29 = arith.constant 0 : index
    %c2_30 = arith.constant 2 : index
    %c0_31 = arith.constant 0 : index
    %32 = vector.load %arg12[%c0_29, %c2_30, %c0_31] : memref<16x16x128xf32, #tpu.memory_space<vmem>>, vector<16x8x128xf32>
    %c0_32 = arith.constant 0 : index
    %c3 = arith.constant 3 : index
    %c0_33 = arith.constant 0 : index
    %33 = vector.load %arg12[%c0_32, %c3, %c0_33] : memref<16x16x128xf32, #tpu.memory_space<vmem>>, vector<16x8x128xf32>
    %c0_34 = arith.constant 0 : index
    %c4 = arith.constant 4 : index
    %c0_35 = arith.constant 0 : index
    %34 = vector.load %arg12[%c0_34, %c4, %c0_35] : memref<16x16x128xf32, #tpu.memory_space<vmem>>, vector<16x8x128xf32>
    %35 = tpu.concatenate %30, %31, %32, %33, %34 in 2 : vector<16x8x128xf32>, vector<16x8x128xf32>, vector<16x8x128xf32>, vector<16x8x128xf32>, vector<16x8x128xf32> -> vector<16x8x640xf32>
    %36 = vector.shape_cast %35 : vector<16x8x640xf32> to vector<128x640xf32>
    %37 = arith.truncf %36 : vector<128x640xf32> to vector<128x640xbf16>
    %c0_36 = arith.constant 0 : index
    %c0_37 = arith.constant 0 : index
    %38 = vector.load %arg5[%c0_36, %c0_37] : memref<640x256xbf16, #tpu.memory_space<vmem>>, vector<640x256xbf16>
    %cst_38 = arith.constant dense<0.000000e+00> : vector<128x256xf32>
    %39 = tpu.matmul %37, %38, %cst_38 {dimension_numbers = #tpu.dot_dimension_numbers<[1], [0], [0], [1], [0, 0, 1, 1], [], []>} : vector<128x640xbf16>, vector<640x256xbf16>, vector<128x256xf32> -> vector<128x256xf32>
    %40 = vector.extract_strided_slice %39 {offsets = [0, 0], sizes = [128, 128], strides = [1, 1]} : vector<128x256xf32> to vector<128x128xf32>
    %41 = vector.extract_strided_slice %39 {offsets = [0, 128], sizes = [128, 128], strides = [1, 1]} : vector<128x256xf32> to vector<128x128xf32>
    %42 = arith.maximumf %40, %41 : vector<128x128xf32>
    %43 = vector.shape_cast %42 : vector<128x128xf32> to vector<16x8x128xf32>
    %c0_39 = arith.constant 0 : index
    %c0_40 = arith.constant 0 : index
    %c0_41 = arith.constant 0 : index
    %44 = vector.load %arg13[%c0_39, %c0_40, %c0_41] : memref<16x8x128xf32, #tpu.memory_space<vmem>>, vector<16x8x128xf32>
    tpu.vector_store %arg13[%c0_39, %c0_40, %c0_41], %43 {strides = array<i32>} : memref<16x8x128xf32, #tpu.memory_space<vmem>>, vector<16x8x128xf32>,
    %c0_42 = arith.constant 0 : index
    %c0_43 = arith.constant 0 : index
    %45 = vector.load %arg6[%c0_42, %c0_43] : memref<1x128xf32, #tpu.memory_space<vmem>>, vector<1x128xf32>
    %c0_44 = arith.constant 0 : index
    %c0_45 = arith.constant 0 : index
    %c0_46 = arith.constant 0 : index
    %46 = vector.load %arg13[%c0_44, %c0_45, %c0_46] : memref<16x8x128xf32, #tpu.memory_space<vmem>>, vector<16x1x128xf32>
    %47 = vector.shape_cast %46 : vector<16x1x128xf32> to vector<16x128xf32>
    %c0_47 = arith.constant 0 : index
    %c1_48 = arith.constant 1 : index
    %c0_49 = arith.constant 0 : index
    %48 = vector.load %arg13[%c0_47, %c1_48, %c0_49] : memref<16x8x128xf32, #tpu.memory_space<vmem>>, vector<16x1x128xf32>
    %49 = vector.shape_cast %48 : vector<16x1x128xf32> to vector<16x128xf32>
    %50 = arith.maximumf %47, %49 : vector<16x128xf32>
    %51 = vector.broadcast %45 : vector<1x128xf32> to vector<16x128xf32>
    %52 = arith.addf %50, %51 : vector<16x128xf32>
    %cst_50 = arith.constant 0.000000e+00 : f32
    %53 = vector.broadcast %cst_50 : f32 to vector<16x128xf32>
    %54 = arith.maximumf %52, %53 : vector<16x128xf32>
    %55 = arith.truncf %54 : vector<16x128xf32> to vector<16x128xbf16>
    %c0_51 = arith.constant 0 : index
    %c0_52 = arith.constant 0 : index
    %c0_53 = arith.constant 0 : index
    %56 = vector.load %arg7[%c0_51, %c0_52, %c0_53] : memref<4x128x50xbf16, #tpu.memory_space<vmem>>, vector<1x128x50xbf16>
    %57 = vector.shape_cast %56 : vector<1x128x50xbf16> to vector<128x50xbf16>
    %cst_54 = arith.constant dense<0.000000e+00> : vector<16x50xf32>
    %58 = tpu.matmul %55, %57, %cst_54 {dimension_numbers = #tpu.dot_dimension_numbers<[1], [0], [0], [1], [0, 0, 1, 1], [], []>} : vector<16x128xbf16>, vector<128x50xbf16>, vector<16x50xf32> -> vector<16x50xf32>
    %c0_55 = arith.constant 0 : index
    %c2_56 = arith.constant 2 : index
    %c0_57 = arith.constant 0 : index
    %59 = vector.load %arg13[%c0_55, %c2_56, %c0_57] : memref<16x8x128xf32, #tpu.memory_space<vmem>>, vector<16x1x128xf32>
    %60 = vector.shape_cast %59 : vector<16x1x128xf32> to vector<16x128xf32>
    %c0_58 = arith.constant 0 : index
    %c3_59 = arith.constant 3 : index
    %c0_60 = arith.constant 0 : index
    %61 = vector.load %arg13[%c0_58, %c3_59, %c0_60] : memref<16x8x128xf32, #tpu.memory_space<vmem>>, vector<16x1x128xf32>
    %62 = vector.shape_cast %61 : vector<16x1x128xf32> to vector<16x128xf32>
    %63 = arith.maximumf %60, %62 : vector<16x128xf32>
    %64 = vector.broadcast %45 : vector<1x128xf32> to vector<16x128xf32>
    %65 = arith.addf %63, %64 : vector<16x128xf32>
    %cst_61 = arith.constant 0.000000e+00 : f32
    %66 = vector.broadcast %cst_61 : f32 to vector<16x128xf32>
    %67 = arith.maximumf %65, %66 : vector<16x128xf32>
    %68 = arith.truncf %67 : vector<16x128xf32> to vector<16x128xbf16>
    %c1_62 = arith.constant 1 : index
    %c0_63 = arith.constant 0 : index
    %c0_64 = arith.constant 0 : index
    %69 = vector.load %arg7[%c1_62, %c0_63, %c0_64] : memref<4x128x50xbf16, #tpu.memory_space<vmem>>, vector<1x128x50xbf16>
    %70 = vector.shape_cast %69 : vector<1x128x50xbf16> to vector<128x50xbf16>
    %cst_65 = arith.constant dense<0.000000e+00> : vector<16x50xf32>
    %71 = tpu.matmul %68, %70, %cst_65 {dimension_numbers = #tpu.dot_dimension_numbers<[1], [0], [0], [1], [0, 0, 1, 1], [], []>} : vector<16x128xbf16>, vector<128x50xbf16>, vector<16x50xf32> -> vector<16x50xf32>
    %72 = arith.addf %58, %71 : vector<16x50xf32>
    %c0_66 = arith.constant 0 : index
    %c4_67 = arith.constant 4 : index
    %c0_68 = arith.constant 0 : index
    %73 = vector.load %arg13[%c0_66, %c4_67, %c0_68] : memref<16x8x128xf32, #tpu.memory_space<vmem>>, vector<16x1x128xf32>
    %74 = vector.shape_cast %73 : vector<16x1x128xf32> to vector<16x128xf32>
    %c0_69 = arith.constant 0 : index
    %c5 = arith.constant 5 : index
    %c0_70 = arith.constant 0 : index
    %75 = vector.load %arg13[%c0_69, %c5, %c0_70] : memref<16x8x128xf32, #tpu.memory_space<vmem>>, vector<16x1x128xf32>
    %76 = vector.shape_cast %75 : vector<16x1x128xf32> to vector<16x128xf32>
    %77 = arith.maximumf %74, %76 : vector<16x128xf32>
    %78 = vector.broadcast %45 : vector<1x128xf32> to vector<16x128xf32>
    %79 = arith.addf %77, %78 : vector<16x128xf32>
    %cst_71 = arith.constant 0.000000e+00 : f32
    %80 = vector.broadcast %cst_71 : f32 to vector<16x128xf32>
    %81 = arith.maximumf %79, %80 : vector<16x128xf32>
    %82 = arith.truncf %81 : vector<16x128xf32> to vector<16x128xbf16>
    %c2_72 = arith.constant 2 : index
    %c0_73 = arith.constant 0 : index
    %c0_74 = arith.constant 0 : index
    %83 = vector.load %arg7[%c2_72, %c0_73, %c0_74] : memref<4x128x50xbf16, #tpu.memory_space<vmem>>, vector<1x128x50xbf16>
    %84 = vector.shape_cast %83 : vector<1x128x50xbf16> to vector<128x50xbf16>
    %cst_75 = arith.constant dense<0.000000e+00> : vector<16x50xf32>
    %85 = tpu.matmul %82, %84, %cst_75 {dimension_numbers = #tpu.dot_dimension_numbers<[1], [0], [0], [1], [0, 0, 1, 1], [], []>} : vector<16x128xbf16>, vector<128x50xbf16>, vector<16x50xf32> -> vector<16x50xf32>
    %86 = arith.addf %72, %85 : vector<16x50xf32>
    %c0_76 = arith.constant 0 : index
    %c6 = arith.constant 6 : index
    %c0_77 = arith.constant 0 : index
    %87 = vector.load %arg13[%c0_76, %c6, %c0_77] : memref<16x8x128xf32, #tpu.memory_space<vmem>>, vector<16x1x128xf32>
    %88 = vector.shape_cast %87 : vector<16x1x128xf32> to vector<16x128xf32>
    %c0_78 = arith.constant 0 : index
    %c7 = arith.constant 7 : index
    %c0_79 = arith.constant 0 : index
    %89 = vector.load %arg13[%c0_78, %c7, %c0_79] : memref<16x8x128xf32, #tpu.memory_space<vmem>>, vector<16x1x128xf32>
    %90 = vector.shape_cast %89 : vector<16x1x128xf32> to vector<16x128xf32>
    %91 = arith.maximumf %88, %90 : vector<16x128xf32>
    %92 = vector.broadcast %45 : vector<1x128xf32> to vector<16x128xf32>
    %93 = arith.addf %91, %92 : vector<16x128xf32>
    %cst_80 = arith.constant 0.000000e+00 : f32
    %94 = vector.broadcast %cst_80 : f32 to vector<16x128xf32>
    %95 = arith.maximumf %93, %94 : vector<16x128xf32>
    %96 = arith.truncf %95 : vector<16x128xf32> to vector<16x128xbf16>
    %c3_81 = arith.constant 3 : index
    %c0_82 = arith.constant 0 : index
    %c0_83 = arith.constant 0 : index
    %97 = vector.load %arg7[%c3_81, %c0_82, %c0_83] : memref<4x128x50xbf16, #tpu.memory_space<vmem>>, vector<1x128x50xbf16>
    %98 = vector.shape_cast %97 : vector<1x128x50xbf16> to vector<128x50xbf16>
    %cst_84 = arith.constant dense<0.000000e+00> : vector<16x50xf32>
    %99 = tpu.matmul %96, %98, %cst_84 {dimension_numbers = #tpu.dot_dimension_numbers<[1], [0], [0], [1], [0, 0, 1, 1], [], []>} : vector<16x128xbf16>, vector<128x50xbf16>, vector<16x50xf32> -> vector<16x50xf32>
    %100 = arith.addf %86, %99 : vector<16x50xf32>
    %c0_85 = arith.constant 0 : index
    %c0_86 = arith.constant 0 : index
    %101 = vector.load %arg8[%c0_85, %c0_86] : memref<1x50xf32, #tpu.memory_space<vmem>>, vector<1x50xf32>
    %102 = vector.broadcast %101 : vector<1x50xf32> to vector<16x50xf32>
    %103 = arith.addf %100, %102 : vector<16x50xf32>
    %cst_87 = arith.constant 0.000000e+00 : f32
    %104 = vector.broadcast %cst_87 : f32 to vector<16x50xf32>
    %105 = arith.maximumf %103, %104 : vector<16x50xf32>
    %106 = arith.truncf %105 : vector<16x50xf32> to vector<16x50xbf16>
    %c0_88 = arith.constant 0 : index
    %c0_89 = arith.constant 0 : index
    %107 = vector.load %arg9[%c0_88, %c0_89] : memref<50x10xbf16, #tpu.memory_space<vmem>>, vector<50x10xbf16>
    %cst_90 = arith.constant dense<0.000000e+00> : vector<16x10xf32>
    %108 = tpu.matmul %106, %107, %cst_90 {dimension_numbers = #tpu.dot_dimension_numbers<[1], [0], [0], [1], [0, 0, 1, 1], [], []>} : vector<16x50xbf16>, vector<50x10xbf16>, vector<16x10xf32> -> vector<16x10xf32>
    %c0_91 = arith.constant 0 : index
    %c0_92 = arith.constant 0 : index
    %109 = vector.load %arg10[%c0_91, %c0_92] : memref<1x10xf32, #tpu.memory_space<vmem>>, vector<1x10xf32>
    %110 = vector.broadcast %109 : vector<1x10xf32> to vector<16x10xf32>
    %111 = arith.addf %108, %110 : vector<16x10xf32>
    %cst_93 = arith.constant dense<0xFF800000> : vector<16xf32>
    %112 = vector.multi_reduction <maximumf>, %111, %cst_93 [1] : vector<16x10xf32> to vector<16xf32>
    %113 = vector.shape_cast %112 : vector<16xf32> to vector<16x1xf32>
    %114 = vector.broadcast %113 : vector<16x1xf32> to vector<16x10xf32>
    %115 = arith.subf %111, %114 : vector<16x10xf32>
    %116 = math.exp %115 : vector<16x10xf32>
    %cst_94 = arith.constant dense<0.000000e+00> : vector<16xf32>
    %117 = vector.multi_reduction <add>, %116, %cst_94 [1] : vector<16x10xf32> to vector<16xf32>
    %118 = vector.shape_cast %117 : vector<16xf32> to vector<16x1xf32>
    %119 = math.log %118 : vector<16x1xf32>
    %120 = arith.addf %113, %119 : vector<16x1xf32>
    %121 = vector.broadcast %120 : vector<16x1xf32> to vector<16x10xf32>
    %122 = arith.subf %111, %121 : vector<16x10xf32>
    %c0_95 = arith.constant 0 : index
    %c0_96 = arith.constant 0 : index
    %123 = vector.load %arg11[%c0_95, %c0_96] : memref<16x10xf32, #tpu.memory_space<vmem>>, vector<16x10xf32>
    tpu.vector_store %arg11[%c0_95, %c0_96], %122 {strides = array<i32>} : memref<16x10xf32, #tpu.memory_space<vmem>>, vector<16x10xf32>,
    return
  }
  func.func @transform_0(%arg0: i32) -> (i32, i32, i32) {
    %c0_i32 = arith.constant 0 : i32
    %c0_i32_0 = arith.constant 0 : i32
    %c0_i32_1 = arith.constant 0 : i32
    return %arg0, %c0_i32, %c0_i32_0 : i32, i32, i32
  }
  func.func @transform_1(%arg0: i32) -> (i32, i32, i32) {
    %c0_i32 = arith.constant 0 : i32
    %c0_i32_0 = arith.constant 0 : i32
    %c0_i32_1 = arith.constant 0 : i32
    return %arg0, %c0_i32, %c0_i32_0 : i32, i32, i32
  }
  func.func @transform_2(%arg0: i32) -> (i32, i32) {
    %c0_i32 = arith.constant 0 : i32
    %c0_i32_0 = arith.constant 0 : i32
    %c0_i32_1 = arith.constant 0 : i32
    return %c0_i32, %c0_i32_0 : i32, i32
  }
  func.func @transform_3(%arg0: i32) -> (i32, i32) {
    %c0_i32 = arith.constant 0 : i32
    %c0_i32_0 = arith.constant 0 : i32
    %c0_i32_1 = arith.constant 0 : i32
    return %c0_i32, %c0_i32_0 : i32, i32
  }
  func.func @transform_4(%arg0: i32) -> (i32, i32) {
    %c0_i32 = arith.constant 0 : i32
    %c0_i32_0 = arith.constant 0 : i32
    %c0_i32_1 = arith.constant 0 : i32
    return %c0_i32, %c0_i32_0 : i32, i32
  }
  func.func @transform_5(%arg0: i32) -> (i32, i32) {
    %c0_i32 = arith.constant 0 : i32
    %c0_i32_0 = arith.constant 0 : i32
    %c0_i32_1 = arith.constant 0 : i32
    return %c0_i32, %c0_i32_0 : i32, i32
  }
  func.func @transform_6(%arg0: i32) -> (i32, i32, i32) {
    %c0_i32 = arith.constant 0 : i32
    %c0_i32_0 = arith.constant 0 : i32
    %c0_i32_1 = arith.constant 0 : i32
    %c0_i32_2 = arith.constant 0 : i32
    return %c0_i32, %c0_i32_0, %c0_i32_1 : i32, i32, i32
  }
  func.func @transform_7(%arg0: i32) -> (i32, i32) {
    %c0_i32 = arith.constant 0 : i32
    %c0_i32_0 = arith.constant 0 : i32
    %c0_i32_1 = arith.constant 0 : i32
    return %c0_i32, %c0_i32_0 : i32, i32
  }
  func.func @transform_8(%arg0: i32) -> (i32, i32) {
    %c0_i32 = arith.constant 0 : i32
    %c0_i32_0 = arith.constant 0 : i32
    %c0_i32_1 = arith.constant 0 : i32
    return %c0_i32, %c0_i32_0 : i32, i32
  }
  func.func @transform_9(%arg0: i32) -> (i32, i32) {
    %c0_i32 = arith.constant 0 : i32
    %c0_i32_0 = arith.constant 0 : i32
    %c0_i32_1 = arith.constant 0 : i32
    return %c0_i32, %c0_i32_0 : i32, i32
  }
  func.func @transform_10(%arg0: i32) -> (i32, i32) {
    %c0_i32 = arith.constant 0 : i32
    %c0_i32_0 = arith.constant 0 : i32
    return %arg0, %c0_i32 : i32, i32
  }
}

</mosaic_0001>

<llo_original>
// kernel: tile.13
$region0: #{tile.13}
  #allocation2 [shape = 's32[1]{0}', space=sflag, size = 0x4, scoped, tag = 'scoped memory for tile.13']
  %s0 = inlined_call_operand.hbm [shape: f32[10], index: 0, kind: input, shape index: {}]
  %s1 = inlined_call_operand.vmem [shape: f32[12,10], index: 1, kind: output, shape index: {}]
  $region1: #{tile.13} parent=0
    #allocation0 [shape = 'u8[512]{0}', space=vmem, size = 0x400, scoped, tag = 'operand span for operand 0']
    #allocation1 [shape = 's32[1]{0}', space=sflag, size = 0x4, scoped, tag = 'scoped memory for tile.13']
    %2 = vsyncpa [#allocation1], 0
    // Predicated region
    $region2: #{tile.13} parent=1 // pred_check
      _
    $region3: #{tile.13} parent=1 // pred_check_branch
      %4 = sbr.rel (0) target = $region5
    $region4: #{tile.13} parent=1 // pred_region
      %s6 = ssub.s32 16, 16
      %7 = vsyncadd [#allocation1], %s6
      %s9 = sshll.u32 [#allocation0], 4
      %s10 = int_to_ptr.vmem [resolvable:$true] %s9
      %12 = dma.hbm_to_vmem [thread:$0]  %s0, 16, %s10, [#allocation1]
    $region5: #{tile.13} parent=1 // pred_fallthru
      _
    // Predicated region
    $region6: #{tile.13} parent=1 // pred_check
      _
    $region7: #{tile.13} parent=1 // pred_check_branch
      %14 = sbr.rel (0) target = $region9
    $region8: #{tile.13} parent=1 // pred_region
      %15 = dma.done [#allocation1], 16
    $region9: #{tile.13} parent=1 // pred_fallthru
      _
    %v16 = vld [vmem:[#allocation0] ss:$0 sm:$0xff]
    %17 = vst [vmem:[%s1] sm:$0xff] %v16
    %s18 = scalar_lea.vmem %s1, 8
    %19 = vst [vmem:[%s18] sm:$0xff] %v16
    %20 = vsyncpa [#allocation1], 1

// kernel: tile.14
$region0: #{tile.14}
  %s0 = inlined_call_operand.vmem [shape: f32[12,10], index: 0, kind: input, shape index: {}]
  %s1 = inlined_call_operand.vmem [shape: f32[120], index: 1, kind: output, shape index: {}]
  $region1: #{tile.14} parent=0
    #allocation0 [shape = 'u8[4096]{0}', space=vmem, size = 0x1000, scoped, tag = 'scoped mem for output reshape']
    %v2 = vld [vmem:[%s0] sm:$0x1]
    %vm3 = vcmask 80896
    %4 = vst.msk [vmem:[#allocation0] sm:$0x1] %vm3, %v2
    %s5 = scalar_lea.vmem %s0, 11
    %v6 = vld [vmem:[%s5] sm:$0x1]
    %7 = vrot.lane.b32.xlu0 %v6, 110
    %v8 = vpop.permute.xlu0 %7
    %vm9 = vcmask 982896
    %10 = vst.msk [vmem:[#allocation0] sm:$0x1] %vm9, %v8
    %s11 = scalar_lea.vmem %s0, 10
    %v12 = vld [vmem:[%s11] sm:$0x1]
    %13 = vrot.lane.b32.xlu0 %v12, 100
    %v14 = vpop.permute.xlu0 %13
    %vm15 = vcmask 900896
    %16 = vst.msk [vmem:[#allocation0] sm:$0x1] %vm15, %v14
    %s17 = scalar_lea.vmem %s0, 9
    %v18 = vld [vmem:[%s17] sm:$0x1]
    %19 = vrot.lane.b32.xlu0 %v18, 90
    %v20 = vpop.permute.xlu0 %19
    %vm21 = vcmask 818896
    %22 = vst.msk [vmem:[#allocation0] sm:$0x1] %vm21, %v20
    %s23 = scalar_lea.vmem %s0, 8
    %v24 = vld [vmem:[%s23] sm:$0x1]
    %25 = vrot.lane.b32.xlu0 %v24, 80
    %v26 = vpop.permute.xlu0 %25
    %vm27 = vcmask 736896
    %28 = vst.msk [vmem:[#allocation0] sm:$0x1] %vm27, %v26
    %s29 = scalar_lea.vmem %s0, 7
    %v30 = vld [vmem:[%s29] sm:$0x1]
    %31 = vrot.lane.b32.xlu0 %v30, 70
    %v32 = vpop.permute.xlu0 %31
    %vm33 = vcmask 654896
    %34 = vst.msk [vmem:[#allocation0] sm:$0x1] %vm33, %v32
    %s35 = scalar_lea.vmem %s0, 6
    %v36 = vld [vmem:[%s35] sm:$0x1]
    %37 = vrot.lane.b32.xlu0 %v36, 60
    %v38 = vpop.permute.xlu0 %37
    %vm39 = vcmask 572896
    %40 = vst.msk [vmem:[#allocation0] sm:$0x1] %vm39, %v38
    %s41 = scalar_lea.vmem %s0, 5
    %v42 = vld [vmem:[%s41] sm:$0x1]
    %43 = vrot.lane.b32.xlu0 %v42, 50
    %v44 = vpop.permute.xlu0 %43
    %vm45 = vcmask 490896
    %46 = vst.msk [vmem:[#allocation0] sm:$0x1] %vm45, %v44
    %s47 = scalar_lea.vmem %s0, 4
    %v48 = vld [vmem:[%s47] sm:$0x1]
    %49 = vrot.lane.b32.xlu0 %v48, 40
    %v50 = vpop.permute.xlu0 %49
    %vm51 = vcmask 408896
    %52 = vst.msk [vmem:[#allocation0] sm:$0x1] %vm51, %v50
    %s53 = scalar_lea.vmem %s0, 3
    %v54 = vld [vmem:[%s53] sm:$0x1]
    %55 = vrot.lane.b32.xlu0 %v54, 30
    %v56 = vpop.permute.xlu0 %55
    %vm57 = vcmask 326896
    %58 = vst.msk [vmem:[#allocation0] sm:$0x1] %vm57, %v56
    %s59 = scalar_lea.vmem %s0, 2
    %v60 = vld [vmem:[%s59] sm:$0x1]
    %61 = vrot.lane.b32.xlu0 %v60, 20
    %v62 = vpop.permute.xlu0 %61
    %vm63 = vcmask 244896
    %64 = vst.msk [vmem:[#allocation0] sm:$0x1] %vm63, %v62
    %s65 = scalar_lea.vmem %s0, 1
    %v66 = vld [vmem:[%s65] sm:$0x1]
    %67 = vrot.lane.b32.xlu0 %v66, 10
    %v68 = vpop.permute.xlu0 %67
    %vm69 = vcmask 162896
    %70 = vst.msk [vmem:[#allocation0] sm:$0x1] %vm69, %v68
    %s72 = sshllo.u32 0, 1
    %v74 = vld [vmem:[#allocation0] sm:%s72]
    %s75 = sshllo.u32 0, 1
    %76 = vst [vmem:[%s1] sm:%s75] %v74

// kernel: tile.18
$region0: #{tile.18}
  #allocation2 [shape = 's32[1]{0}', space=sflag, size = 0x4, scoped, tag = 'scoped memory for tile.18']
  %s0 = inlined_call_operand.hbm [shape: f32[20], index: 0, kind: input, shape index: {}]
  %s1 = inlined_call_operand.vmem [shape: f32[4,20], index: 1, kind: output, shape index: {}]
  $region1: #{tile.18} parent=0
    #allocation0 [shape = 'u8[512]{0}', space=vmem, size = 0x400, scoped, tag = 'operand span for operand 0']
    #allocation1 [shape = 's32[1]{0}', space=sflag, size = 0x4, scoped, tag = 'scoped memory for tile.18']
    %2 = vsyncpa [#allocation1], 0
    // Predicated region
    $region2: #{tile.18} parent=1 // pred_check
      _
    $region3: #{tile.18} parent=1 // pred_check_branch
      %4 = sbr.rel (0) target = $region5
    $region4: #{tile.18} parent=1 // pred_region
      %s6 = ssub.s32 16, 16
      %7 = vsyncadd [#allocation1], %s6
      %s9 = sshll.u32 [#allocation0], 4
      %s10 = int_to_ptr.vmem [resolvable:$true] %s9
      %12 = dma.hbm_to_vmem [thread:$0]  %s0, 16, %s10, [#allocation1]
    $region5: #{tile.18} parent=1 // pred_fallthru
      _
    // Predicated region
    $region6: #{tile.18} parent=1 // pred_check
      _
    $region7: #{tile.18} parent=1 // pred_check_branch
      %14 = sbr.rel (0) target = $region9
    $region8: #{tile.18} parent=1 // pred_region
      %15 = dma.done [#allocation1], 16
    $region9: #{tile.18} parent=1 // pred_fallthru
      _
    %v16 = vld [vmem:[#allocation0] ss:$0 sm:$0xff]
    %17 = vst [vmem:[%s1] sm:$0xf] %v16
    %18 = vsyncpa [#allocation1], 1

// kernel: tile.19
$region0: #{tile.19}
  %s0 = inlined_call_operand.vmem [shape: f32[4,20], index: 0, kind: input, shape index: {}]
  %s1 = inlined_call_operand.vmem [shape: f32[80], index: 1, kind: output, shape index: {}]
  $region1: #{tile.19} parent=0
    #allocation0 [shape = 'u8[4096]{0}', space=vmem, size = 0x1000, scoped, tag = 'scoped mem for output reshape']
    #allocation1 [shape = 'u8[4096]{0}', space=vmem, size = 0x1000, scoped, tag = 'scoped mem for input reshape']
    %s3 = sshllo.u32 0, 4
    %v4 = vld [vmem:[%s0] sm:%s3]
    %5 = vst [vmem:[#allocation1] sm:%s3] %v4
    %v6 = vld [vmem:[#allocation1] sm:$0x1]
    %vm7 = vcmask 162816
    %8 = vst.msk [vmem:[#allocation0] sm:$0x1] %vm7, %v6
    %s9 = scalar_lea.vmem [#allocation1], 3
    %v10 = vld [vmem:[%s9] sm:$0x1]
    %11 = vrot.lane.b32.xlu0 %v10, 60
    %v12 = vpop.permute.xlu0 %11
    %vm13 = vcmask 654816
    %14 = vst.msk [vmem:[#allocation0] sm:$0x1] %vm13, %v12
    %s15 = scalar_lea.vmem [#allocation1], 2
    %v16 = vld [vmem:[%s15] sm:$0x1]
    %17 = vrot.lane.b32.xlu0 %v16, 40
    %v18 = vpop.permute.xlu0 %17
    %vm19 = vcmask 490816
    %20 = vst.msk [vmem:[#allocation0] sm:$0x1] %vm19, %v18
    %s21 = scalar_lea.vmem [#allocation1], 1
    %v22 = vld [vmem:[%s21] sm:$0x1]
    %23 = vrot.lane.b32.xlu0 %v22, 20
    %v24 = vpop.permute.xlu0 %23
    %vm25 = vcmask 326816
    %26 = vst.msk [vmem:[#allocation0] sm:$0x1] %vm25, %v24
    %s28 = sshllo.u32 0, 1
    %v30 = vld [vmem:[#allocation0] sm:%s28]
    %s31 = sshllo.u32 0, 1
    %32 = vst [vmem:[%s1] sm:%s31] %v30

// kernel: net_forward.1
$region0: #{net_forward.1}
  #allocation0 [shape = 'u32[]', space=smem, size = 0x4, offset = 0x4, fixed_abs, tag = 'smem constant byte address 0x4 - core index']
  #allocation1 [shape = 'u32[144,128]{1,0:T(1,128)}', space=vmem, size = 0x12000, scoped, tag = 'internal scratch']
  #allocation2 [shape = 'f32[16,16,128]{2,1,0:T(8,128)}', space=vmem, size = 0x20000, scoped, tag = 'scratch operand']
  #allocation3 [shape = 'f32[16,8,128]{2,1,0:T(8,128)}', space=vmem, size = 0x10000, scoped, tag = 'scratch operand']
  %s0 = inlined_call_operand.vmem [shape: f32[16,18,28], index: 0, kind: input, shape index: {}]
  %s1 = inlined_call_operand.vmem [shape: f32[16,18,28], index: 1, kind: input, shape index: {}]
  %s2 = inlined_call_operand.vmem [shape: bf16[168,512], index: 2, kind: input, shape index: {}]
  %s3 = inlined_call_operand.vmem [shape: f32[1,128], index: 3, kind: input, shape index: {}]
  %s4 = inlined_call_operand.vmem [shape: bf16[640,256], index: 4, kind: input, shape index: {}]
  %s5 = inlined_call_operand.vmem [shape: f32[1,128], index: 5, kind: input, shape index: {}]
  %s6 = inlined_call_operand.vmem [shape: bf16[4,128,50], index: 6, kind: input, shape index: {}]
  %s7 = inlined_call_operand.vmem [shape: f32[1,50], index: 7, kind: input, shape index: {}]
  %s8 = inlined_call_operand.vmem [shape: bf16[50,10], index: 8, kind: input, shape index: {}]
  %s9 = inlined_call_operand.vmem [shape: f32[1,10], index: 9, kind: input, shape index: {}]
  %s10 = inlined_call_operand.hbm [shape: f32[16,10], index: 10, kind: output, shape index: {}]
  %s11 = sld [smem:[#allocation0]]
  $region50: #{net_forward.1} parent=0
    _
  %s13 = ssub.s32 1, %s11
  %s14 = scalar_select 0, %s13, %s11
  $region1: #{net_forward.1} parent=0
    #allocation4 [shape = 'u8[8192]{0}', space=vmem, size = 0x2000, scoped, tag = 'output window, operand 0, single buffered']
    #allocation5 [shape = 's32[1]{0}', space=sflag, size = 0x4, scoped, tag = 'scoped memory for net_forward.1']
    %15 = vsyncpa [#allocation5], 0
    // Predicated region
    $region2: #{net_forward.1} parent=1 // pred_check
      _
    $region3: #{net_forward.1} parent=1 // pred_check_branch
      %17 = sbr.rel (0) target = $region5
    $region4: #{net_forward.1} parent=1 // pred_region
      _
    $region5: #{net_forward.1} parent=1 // pred_fallthru
      _
    // Predicated region
    $region6: #{net_forward.1} parent=1 // pred_check
      _
    $region7: #{net_forward.1} parent=1 // pred_check_branch
      %19 = sbr.rel (0) target = $region9
    $region8: #{net_forward.1} parent=1 // pred_region
      _
    $region9: #{net_forward.1} parent=1 // pred_fallthru
      _
    // Predicated region
    $region10: #{net_forward.1} parent=1 // pred_check
      _
    $region11: #{net_forward.1} parent=1 // pred_check_branch
      %21 = sbr.rel (0) target = $region13
    $region12: #{net_forward.1} parent=1 // pred_region
      _
    $region13: #{net_forward.1} parent=1 // pred_fallthru
      _
    // Predicated region
    $region14: #{net_forward.1} parent=1 // pred_check
      _
    $region15: #{net_forward.1} parent=1 // pred_check_branch
      %23 = sbr.rel (0) target = $region17
    $region16: #{net_forward.1} parent=1 // pred_region
      _
    $region17: #{net_forward.1} parent=1 // pred_fallthru
      _
    // Predicated region
    $region18: #{net_forward.1} parent=1 // pred_check
      _
    $region19: #{net_forward.1} parent=1 // pred_check_branch
      %25 = sbr.rel (0) target = $region21
    $region20: #{net_forward.1} parent=1 // pred_region
      _
    $region21: #{net_forward.1} parent=1 // pred_fallthru
      _
    // Predicated region
    $region22: #{net_forward.1} parent=1 // pred_check
      _
    $region23: #{net_forward.1} parent=1 // pred_check_branch
      %27 = sbr.rel (0) target = $region25
    $region24: #{net_forward.1} parent=1 // pred_region
      _
    $region25: #{net_forward.1} parent=1 // pred_fallthru
      _
    // Predicated region
    $region26: #{net_forward.1} parent=1 // pred_check
      _
    $region27: #{net_forward.1} parent=1 // pred_check_branch
      %29 = sbr.rel (0) target = $region29
    $region28: #{net_forward.1} parent=1 // pred_region
      _
    $region29: #{net_forward.1} parent=1 // pred_fallthru
      _
    // Predicated region
    $region30: #{net_forward.1} parent=1 // pred_check
      _
    $region31: #{net_forward.1} parent=1 // pred_check_branch
      %31 = sbr.rel (0) target = $region33
    $region32: #{net_forward.1} parent=1 // pred_region
      _
    $region33: #{net_forward.1} parent=1 // pred_fallthru
      _
    // Predicated region
    $region34: #{net_forward.1} parent=1 // pred_check
      _
    $region35: #{net_forward.1} parent=1 // pred_check_branch
      %33 = sbr.rel (0) target = $region37
    $region36: #{net_forward.1} parent=1 // pred_region
      _
    $region37: #{net_forward.1} parent=1 // pred_fallthru
      _
    // Predicated region
    $region38: #{net_forward.1} parent=1 // pred_check
      _
    $region39: #{net_forward.1} parent=1 // pred_check_branch
      %35 = sbr.rel (0) target = $region41
    $region40: #{net_forward.1} parent=1 // pred_region
      _
    $region41: #{net_forward.1} parent=1 // pred_fallthru
      _
    %v37 = vld [vmem:[%s0] sm:$0xff]
    %v38 = vld [vmem:[%s0 + $0x8] sm:$0xff]
    %v39 = vld [vmem:[%s0 + $0x18] sm:$0xff]
    %v40 = vld [vmem:[%s0 + $0x20] sm:$0xff]
    %v41 = vld [vmem:[%s0 + $0x30] sm:$0xff]
    %v42 = vld [vmem:[%s0 + $0x38] sm:$0xff]
    %v43 = vld [vmem:[%s0 + $0x48] sm:$0xff]
    %v44 = vld [vmem:[%s0 + $0x50] sm:$0xff]
    %v45 = vld [vmem:[%s0 + $0x60] sm:$0xff]
    %v46 = vld [vmem:[%s0 + $0x68] sm:$0xff]
    %v47 = vld [vmem:[%s0 + $0x78] sm:$0xff]
    %v48 = vld [vmem:[%s0 + $0x80] sm:$0xff]
    %v49 = vld [vmem:[%s0 + $0x90] sm:$0xff]
    %v50 = vld [vmem:[%s0 + $0x98] sm:$0xff]
    %v51 = vld [vmem:[%s0 + $0xa8] sm:$0xff]
    %v52 = vld [vmem:[%s0 + $0xb0] sm:$0xff]
    %v53 = vld [vmem:[%s0 + $0xc0] sm:$0xff]
    %v54 = vld [vmem:[%s0 + $0xc8] sm:$0xff]
    %v55 = vld [vmem:[%s0 + $0xd8] sm:$0xff]
    %v56 = vld [vmem:[%s0 + $0xe0] sm:$0xff]
    %v57 = vld [vmem:[%s0 + $0xf0] sm:$0xff]
    %v58 = vld [vmem:[%s0 + $0xf8] sm:$0xff]
    %v59 = vld [vmem:[%s0 + $0x108] sm:$0xff]
    %v60 = vld [vmem:[%s0 + $0x110] sm:$0xff]
    %v61 = vld [vmem:[%s0 + $0x120] sm:$0xff]
    %v62 = vld [vmem:[%s0 + $0x128] sm:$0xff]
    %v63 = vld [vmem:[%s0 + $0x138] sm:$0xff]
    %v64 = vld [vmem:[%s0 + $0x140] sm:$0xff]
    %v65 = vld [vmem:[%s0 + $0x150] sm:$0xff]
    %v66 = vld [vmem:[%s0 + $0x158] sm:$0xff]
    %v67 = vld [vmem:[%s0 + $0x168] sm:$0xff]
    %v68 = vld [vmem:[%s0 + $0x170] sm:$0xff]
    %v69 = vpack.c.bf16 %v38, %v37
    %v70 = vpack.c.bf16 %v40, %v39
    %v71 = vpack.c.bf16 %v42, %v41
    %v72 = vpack.c.bf16 %v44, %v43
    %v73 = vpack.c.bf16 %v46, %v45
    %v74 = vpack.c.bf16 %v48, %v47
    %v75 = vpack.c.bf16 %v50, %v49
    %v76 = vpack.c.bf16 %v52, %v51
    %v77 = vpack.c.bf16 %v54, %v53
    %v78 = vpack.c.bf16 %v56, %v55
    %v79 = vpack.c.bf16 %v58, %v57
    %v80 = vpack.c.bf16 %v60, %v59
    %v81 = vpack.c.bf16 %v62, %v61
    %v82 = vpack.c.bf16 %v64, %v63
    %v83 = vpack.c.bf16 %v66, %v65
    %v84 = vpack.c.bf16 %v68, %v67
    %v85 = vld [vmem:[%s0 + $0x1] sm:$0xff]
    %v86 = vld [vmem:[%s0 + $0x9] sm:$0xff]
    %v87 = vld [vmem:[%s0 + $0x19] sm:$0xff]
    %v88 = vld [vmem:[%s0 + $0x21] sm:$0xff]
    %v89 = vld [vmem:[%s0 + $0x31] sm:$0xff]
    %v90 = vld [vmem:[%s0 + $0x39] sm:$0xff]
    %v91 = vld [vmem:[%s0 + $0x49] sm:$0xff]
    %v92 = vld [vmem:[%s0 + $0x51] sm:$0xff]
    %v93 = vld [vmem:[%s0 + $0x61] sm:$0xff]
    %v94 = vld [vmem:[%s0 + $0x69] sm:$0xff]
    %v95 = vld [vmem:[%s0 + $0x79] sm:$0xff]
    %v96 = vld [vmem:[%s0 + $0x81] sm:$0xff]
    %v97 = vld [vmem:[%s0 + $0x91] sm:$0xff]
    %v98 = vld [vmem:[%s0 + $0x99] sm:$0xff]
    %v99 = vld [vmem:[%s0 + $0xa9] sm:$0xff]
    %v100 = vld [vmem:[%s0 + $0xb1] sm:$0xff]
    %v101 = vld [vmem:[%s0 + $0xc1] sm:$0xff]
    %v102 = vld [vmem:[%s0 + $0xc9] sm:$0xff]
    %v103 = vld [vmem:[%s0 + $0xd9] sm:$0xff]
    %v104 = vld [vmem:[%s0 + $0xe1] sm:$0xff]
    %v105 = vld [vmem:[%s0 + $0xf1] sm:$0xff]
    %v106 = vld [vmem:[%s0 + $0xf9] sm:$0xff]
    %v107 = vld [vmem:[%s0 + $0x109] sm:$0xff]
    %v108 = vld [vmem:[%s0 + $0x111] sm:$0xff]
    %v109 = vld [vmem:[%s0 + $0x121] sm:$0xff]
    %v110 = vld [vmem:[%s0 + $0x129] sm:$0xff]
    %v111 = vld [vmem:[%s0 + $0x139] sm:$0xff]
    %v112 = vld [vmem:[%s0 + $0x141] sm:$0xff]
    %v113 = vld [vmem:[%s0 + $0x151] sm:$0xff]
    %v114 = vld [vmem:[%s0 + $0x159] sm:$0xff]
    %v115 = vld [vmem:[%s0 + $0x169] sm:$0xff]
    %v116 = vld [vmem:[%s0 + $0x171] sm:$0xff]
    %v117 = vpack.c.bf16 %v86, %v85
    %v118 = vpack.c.bf16 %v88, %v87
    %v119 = vpack.c.bf16 %v90, %v89
    %v120 = vpack.c.bf16 %v92, %v91
    %v121 = vpack.c.bf16 %v94, %v93
    %v122 = vpack.c.bf16 %v96, %v95
    %v123 = vpack.c.bf16 %v98, %v97
    %v124 = vpack.c.bf16 %v100, %v99
    %v125 = vpack.c.bf16 %v102, %v101
    %v126 = vpack.c.bf16 %v104, %v103
    %v127 = vpack.c.bf16 %v106, %v105
    %v128 = vpack.c.bf16 %v108, %v107
    %v129 = vpack.c.bf16 %v110, %v109
    %v130 = vpack.c.bf16 %v112, %v111
    %v131 = vpack.c.bf16 %v114, %v113
    %v132 = vpack.c.bf16 %v116, %v115
    %v133 = vld [vmem:[%s0 + $0x2] sm:$0xff]
    %v134 = vld [vmem:[%s0 + $0xa] sm:$0xff]
    %v135 = vld [vmem:[%s0 + $0x1a] sm:$0xff]
    %v136 = vld [vmem:[%s0 + $0x22] sm:$0xff]
    %v137 = vld [vmem:[%s0 + $0x32] sm:$0xff]
    %v138 = vld [vmem:[%s0 + $0x3a] sm:$0xff]
    %v139 = vld [vmem:[%s0 + $0x4a] sm:$0xff]
    %v140 = vld [vmem:[%s0 + $0x52] sm:$0xff]
    %v141 = vld [vmem:[%s0 + $0x62] sm:$0xff]
    %v142 = vld [vmem:[%s0 + $0x6a] sm:$0xff]
    %v143 = vld [vmem:[%s0 + $0x7a] sm:$0xff]
    %v144 = vld [vmem:[%s0 + $0x82] sm:$0xff]
    %v145 = vld [vmem:[%s0 + $0x92] sm:$0xff]
    %v146 = vld [vmem:[%s0 + $0x9a] sm:$0xff]
    %v147 = vld [vmem:[%s0 + $0xaa] sm:$0xff]
    %v148 = vld [vmem:[%s0 + $0xb2] sm:$0xff]
    %v149 = vld [vmem:[%s0 + $0xc2] sm:$0xff]
    %v150 = vld [vmem:[%s0 + $0xca] sm:$0xff]
    %v151 = vld [vmem:[%s0 + $0xda] sm:$0xff]
    %v152 = vld [vmem:[%s0 + $0xe2] sm:$0xff]
    %v153 = vld [vmem:[%s0 + $0xf2] sm:$0xff]
    %v154 = vld [vmem:[%s0 + $0xfa] sm:$0xff]
    %v155 = vld [vmem:[%s0 + $0x10a] sm:$0xff]
    %v156 = vld [vmem:[%s0 + $0x112] sm:$0xff]
    %v157 = vld [vmem:[%s0 + $0x122] sm:$0xff]
    %v158 = vld [vmem:[%s0 + $0x12a] sm:$0xff]
    %v159 = vld [vmem:[%s0 + $0x13a] sm:$0xff]
    %v160 = vld [vmem:[%s0 + $0x142] sm:$0xff]
    %v161 = vld [vmem:[%s0 + $0x152] sm:$0xff]
    %v162 = vld [vmem:[%s0 + $0x15a] sm:$0xff]
    %v163 = vld [vmem:[%s0 + $0x16a] sm:$0xff]
    %v164 = vld [vmem:[%s0 + $0x172] sm:$0xff]
    %v165 = vpack.c.bf16 %v134, %v133
    %v166 = vpack.c.bf16 %v136, %v135
    %v167 = vpack.c.bf16 %v138, %v137
    %v168 = vpack.c.bf16 %v140, %v139
    %v169 = vpack.c.bf16 %v142, %v141
    %v170 = vpack.c.bf16 %v144, %v143
    %v171 = vpack.c.bf16 %v146, %v145
    %v172 = vpack.c.bf16 %v148, %v147
    %v173 = vpack.c.bf16 %v150, %v149
    %v174 = vpack.c.bf16 %v152, %v151
    %v175 = vpack.c.bf16 %v154, %v153
    %v176 = vpack.c.bf16 %v156, %v155
    %v177 = vpack.c.bf16 %v158, %v157
    %v178 = vpack.c.bf16 %v160, %v159
    %v179 = vpack.c.bf16 %v162, %v161
    %v180 = vpack.c.bf16 %v164, %v163
    %v181 = vld [vmem:[%s1] sm:$0xff]
    %v182 = vld [vmem:[%s1 + $0x8] sm:$0xff]
    %v183 = vld [vmem:[%s1 + $0x18] sm:$0xff]
    %v184 = vld [vmem:[%s1 + $0x20] sm:$0xff]
    %v185 = vld [vmem:[%s1 + $0x30] sm:$0xff]
    %v186 = vld [vmem:[%s1 + $0x38] sm:$0xff]
    %v187 = vld [vmem:[%s1 + $0x48] sm:$0xff]
    %v188 = vld [vmem:[%s1 + $0x50] sm:$0xff]
    %v189 = vld [vmem:[%s1 + $0x60] sm:$0xff]
    %v190 = vld [vmem:[%s1 + $0x68] sm:$0xff]
    %v191 = vld [vmem:[%s1 + $0x78] sm:$0xff]
    %v192 = vld [vmem:[%s1 + $0x80] sm:$0xff]
    %v193 = vld [vmem:[%s1 + $0x90] sm:$0xff]
    %v194 = vld [vmem:[%s1 + $0x98] sm:$0xff]
    %v195 = vld [vmem:[%s1 + $0xa8] sm:$0xff]
    %v196 = vld [vmem:[%s1 + $0xb0] sm:$0xff]
    %v197 = vld [vmem:[%s1 + $0xc0] sm:$0xff]
    %v198 = vld [vmem:[%s1 + $0xc8] sm:$0xff]
    %v199 = vld [vmem:[%s1 + $0xd8] sm:$0xff]
    %v200 = vld [vmem:[%s1 + $0xe0] sm:$0xff]
    %v201 = vld [vmem:[%s1 + $0xf0] sm:$0xff]
    %v202 = vld [vmem:[%s1 + $0xf8] sm:$0xff]
    %v203 = vld [vmem:[%s1 + $0x108] sm:$0xff]
    %v204 = vld [vmem:[%s1 + $0x110] sm:$0xff]
    %v205 = vld [vmem:[%s1 + $0x120] sm:$0xff]
    %v206 = vld [vmem:[%s1 + $0x128] sm:$0xff]
    %v207 = vld [vmem:[%s1 + $0x138] sm:$0xff]
    %v208 = vld [vmem:[%s1 + $0x140] sm:$0xff]
    %v209 = vld [vmem:[%s1 + $0x150] sm:$0xff]
    %v210 = vld [vmem:[%s1 + $0x158] sm:$0xff]
    %v211 = vld [vmem:[%s1 + $0x168] sm:$0xff]
    %v212 = vld [vmem:[%s1 + $0x170] sm:$0xff]
    %v213 = vpack.c.bf16 %v182, %v181
    %v214 = vpack.c.bf16 %v184, %v183
    %v215 = vpack.c.bf16 %v186, %v185
    %v216 = vpack.c.bf16 %v188, %v187
    %v217 = vpack.c.bf16 %v190, %v189
    %v218 = vpack.c.bf16 %v192, %v191
    %v219 = vpack.c.bf16 %v194, %v193
    %v220 = vpack.c.bf16 %v196, %v195
    %v221 = vpack.c.bf16 %v198, %v197
    %v222 = vpack.c.bf16 %v200, %v199
    %v223 = vpack.c.bf16 %v202, %v201
    %v224 = vpack.c.bf16 %v204, %v203
    %v225 = vpack.c.bf16 %v206, %v205
    %v226 = vpack.c.bf16 %v208, %v207
    %v227 = vpack.c.bf16 %v210, %v209
    %v228 = vpack.c.bf16 %v212, %v211
    %v229 = vld [vmem:[%s1 + $0x1] sm:$0xff]
    %v230 = vld [vmem:[%s1 + $0x9] sm:$0xff]
    %v231 = vld [vmem:[%s1 + $0x19] sm:$0xff]
    %v232 = vld [vmem:[%s1 + $0x21] sm:$0xff]
    %v233 = vld [vmem:[%s1 + $0x31] sm:$0xff]
    %v234 = vld [vmem:[%s1 + $0x39] sm:$0xff]
    %v235 = vld [vmem:[%s1 + $0x49] sm:$0xff]
    %v236 = vld [vmem:[%s1 + $0x51] sm:$0xff]
    %v237 = vld [vmem:[%s1 + $0x61] sm:$0xff]
    %v238 = vld [vmem:[%s1 + $0x69] sm:$0xff]
    %v239 = vld [vmem:[%s1 + $0x79] sm:$0xff]
    %v240 = vld [vmem:[%s1 + $0x81] sm:$0xff]
    %v241 = vld [vmem:[%s1 + $0x91] sm:$0xff]
    %v242 = vld [vmem:[%s1 + $0x99] sm:$0xff]
    %v243 = vld [vmem:[%s1 + $0xa9] sm:$0xff]
    %v244 = vld [vmem:[%s1 + $0xb1] sm:$0xff]
    %v245 = vld [vmem:[%s1 + $0xc1] sm:$0xff]
    %v246 = vld [vmem:[%s1 + $0xc9] sm:$0xff]
    %v247 = vld [vmem:[%s1 + $0xd9] sm:$0xff]
    %v248 = vld [vmem:[%s1 + $0xe1] sm:$0xff]
    %v249 = vld [vmem:[%s1 + $0xf1] sm:$0xff]
    %v250 = vld [vmem:[%s1 + $0xf9] sm:$0xff]
    %v251 = vld [vmem:[%s1 + $0x109] sm:$0xff]
    %v252 = vld [vmem:[%s1 + $0x111] sm:$0xff]
    %v253 = vld [vmem:[%s1 + $0x121] sm:$0xff]
    %v254 = vld [vmem:[%s1 + $0x129] sm:$0xff]
    %v255 = vld [vmem:[%s1 + $0x139] sm:$0xff]
    %v256 = vld [vmem:[%s1 + $0x141] sm:$0xff]
    %v257 = vld [vmem:[%s1 + $0x151] sm:$0xff]
    %v258 = vld [vmem:[%s1 + $0x159] sm:$0xff]
    %v259 = vld [vmem:[%s1 + $0x169] sm:$0xff]
    %v260 = vld [vmem:[%s1 + $0x171] sm:$0xff]
    %v261 = vpack.c.bf16 %v230, %v229
    %v262 = vpack.c.bf16 %v232, %v231
    %v263 = vpack.c.bf16 %v234, %v233
    %v264 = vpack.c.bf16 %v236, %v235
    %v265 = vpack.c.bf16 %v238, %v237
    %v266 = vpack.c.bf16 %v240, %v239
    %v267 = vpack.c.bf16 %v242, %v241
    %v268 = vpack.c.bf16 %v244, %v243
    %v269 = vpack.c.bf16 %v246, %v245
    %v270 = vpack.c.bf16 %v248, %v247
    %v271 = vpack.c.bf16 %v250, %v249
    %v272 = vpack.c.bf16 %v252, %v251
    %v273 = vpack.c.bf16 %v254, %v253
    %v274 = vpack.c.bf16 %v256, %v255
    %v275 = vpack.c.bf16 %v258, %v257
    %v276 = vpack.c.bf16 %v260, %v259
    %v277 = vld [vmem:[%s1 + $0x2] sm:$0xff]
    %v278 = vld [vmem:[%s1 + $0xa] sm:$0xff]
    %v279 = vld [vmem:[%s1 + $0x1a] sm:$0xff]
    %v280 = vld [vmem:[%s1 + $0x22] sm:$0xff]
    %v281 = vld [vmem:[%s1 + $0x32] sm:$0xff]
    %v282 = vld [vmem:[%s1 + $0x3a] sm:$0xff]
    %v283 = vld [vmem:[%s1 + $0x4a] sm:$0xff]
    %v284 = vld [vmem:[%s1 + $0x52] sm:$0xff]
    %v285 = vld [vmem:[%s1 + $0x62] sm:$0xff]
    %v286 = vld [vmem:[%s1 + $0x6a] sm:$0xff]
    %v287 = vld [vmem:[%s1 + $0x7a] sm:$0xff]
    %v288 = vld [vmem:[%s1 + $0x82] sm:$0xff]
    %v289 = vld [vmem:[%s1 + $0x92] sm:$0xff]
    %v290 = vld [vmem:[%s1 + $0x9a] sm:$0xff]
    %v291 = vld [vmem:[%s1 + $0xaa] sm:$0xff]
    %v292 = vld [vmem:[%s1 + $0xb2] sm:$0xff]
    %v293 = vld [vmem:[%s1 + $0xc2] sm:$0xff]
    %v294 = vld [vmem:[%s1 + $0xca] sm:$0xff]
    %v295 = vld [vmem:[%s1 + $0xda] sm:$0xff]
    %v296 = vld [vmem:[%s1 + $0xe2] sm:$0xff]
    %v297 = vld [vmem:[%s1 + $0xf2] sm:$0xff]
    %v298 = vld [vmem:[%s1 + $0xfa] sm:$0xff]
    %v299 = vld [vmem:[%s1 + $0x10a] sm:$0xff]
    %v300 = vld [vmem:[%s1 + $0x112] sm:$0xff]
    %v301 = vld [vmem:[%s1 + $0x122] sm:$0xff]
    %v302 = vld [vmem:[%s1 + $0x12a] sm:$0xff]
    %v303 = vld [vmem:[%s1 + $0x13a] sm:$0xff]
    %v304 = vld [vmem:[%s1 + $0x142] sm:$0xff]
    %v305 = vld [vmem:[%s1 + $0x152] sm:$0xff]
    %v306 = vld [vmem:[%s1 + $0x15a] sm:$0xff]
    %v307 = vld [vmem:[%s1 + $0x16a] sm:$0xff]
    %v308 = vld [vmem:[%s1 + $0x172] sm:$0xff]
    %v309 = vpack.c.bf16 %v278, %v277
    %v310 = vpack.c.bf16 %v280, %v279
    %v311 = vpack.c.bf16 %v282, %v281
    %v312 = vpack.c.bf16 %v284, %v283
    %v313 = vpack.c.bf16 %v286, %v285
    %v314 = vpack.c.bf16 %v288, %v287
    %v315 = vpack.c.bf16 %v290, %v289
    %v316 = vpack.c.bf16 %v292, %v291
    %v317 = vpack.c.bf16 %v294, %v293
    %v318 = vpack.c.bf16 %v296, %v295
    %v319 = vpack.c.bf16 %v298, %v297
    %v320 = vpack.c.bf16 %v300, %v299
    %v321 = vpack.c.bf16 %v302, %v301
    %v322 = vpack.c.bf16 %v304, %v303
    %v323 = vpack.c.bf16 %v306, %v305
    %v324 = vpack.c.bf16 %v308, %v307
    %341 = vrot.lane.b32.xlu0 %v117, 28
    %v342 = vpop.permute.xlu0 %341
    %343 = vrot.lane.b32.xlu0 %v118, 28
    %v344 = vpop.permute.xlu0 %343
    %345 = vrot.lane.b32.xlu0 %v119, 28
    %v346 = vpop.permute.xlu0 %345
    %347 = vrot.lane.b32.xlu0 %v120, 28
    %v348 = vpop.permute.xlu0 %347
    %349 = vrot.lane.b32.xlu0 %v121, 28
    %v350 = vpop.permute.xlu0 %349
    %351 = vrot.lane.b32.xlu0 %v122, 28
    %v352 = vpop.permute.xlu0 %351
    %353 = vrot.lane.b32.xlu0 %v123, 28
    %v354 = vpop.permute.xlu0 %353
    %355 = vrot.lane.b32.xlu0 %v124, 28
    %v356 = vpop.permute.xlu0 %355
    %357 = vrot.lane.b32.xlu0 %v125, 28
    %v358 = vpop.permute.xlu0 %357
    %359 = vrot.lane.b32.xlu0 %v126, 28
    %v360 = vpop.permute.xlu0 %359
    %361 = vrot.lane.b32.xlu0 %v127, 28
    %v362 = vpop.permute.xlu0 %361
    %363 = vrot.lane.b32.xlu0 %v128, 28
    %v364 = vpop.permute.xlu0 %363
    %365 = vrot.lane.b32.xlu0 %v129, 28
    %v366 = vpop.permute.xlu0 %365
    %367 = vrot.lane.b32.xlu0 %v130, 28
    %v368 = vpop.permute.xlu0 %367
    %369 = vrot.lane.b32.xlu0 %v131, 28
    %v370 = vpop.permute.xlu0 %369
    %371 = vrot.lane.b32.xlu0 %v132, 28
    %v372 = vpop.permute.xlu0 %371
    %389 = vrot.lane.b32.xlu0 %v165, 56
    %v390 = vpop.permute.xlu0 %389
    %391 = vrot.lane.b32.xlu0 %v166, 56
    %v392 = vpop.permute.xlu0 %391
    %393 = vrot.lane.b32.xlu0 %v167, 56
    %v394 = vpop.permute.xlu0 %393
    %395 = vrot.lane.b32.xlu0 %v168, 56
    %v396 = vpop.permute.xlu0 %395
    %397 = vrot.lane.b32.xlu0 %v169, 56
    %v398 = vpop.permute.xlu0 %397
    %399 = vrot.lane.b32.xlu0 %v170, 56
    %v400 = vpop.permute.xlu0 %399
    %401 = vrot.lane.b32.xlu0 %v171, 56
    %v402 = vpop.permute.xlu0 %401
    %403 = vrot.lane.b32.xlu0 %v172, 56
    %v404 = vpop.permute.xlu0 %403
    %405 = vrot.lane.b32.xlu0 %v173, 56
    %v406 = vpop.permute.xlu0 %405
    %407 = vrot.lane.b32.xlu0 %v174, 56
    %v408 = vpop.permute.xlu0 %407
    %409 = vrot.lane.b32.xlu0 %v175, 56
    %v410 = vpop.permute.xlu0 %409
    %411 = vrot.lane.b32.xlu0 %v176, 56
    %v412 = vpop.permute.xlu0 %411
    %413 = vrot.lane.b32.xlu0 %v177, 56
    %v414 = vpop.permute.xlu0 %413
    %415 = vrot.lane.b32.xlu0 %v178, 56
    %v416 = vpop.permute.xlu0 %415
    %417 = vrot.lane.b32.xlu0 %v179, 56
    %v418 = vpop.permute.xlu0 %417
    %419 = vrot.lane.b32.xlu0 %v180, 56
    %v420 = vpop.permute.xlu0 %419
    %437 = vrot.lane.b32.xlu0 %v213, 84
    %v438 = vpop.permute.xlu0 %437
    %439 = vrot.lane.b32.xlu0 %v214, 84
    %v440 = vpop.permute.xlu0 %439
    %441 = vrot.lane.b32.xlu0 %v215, 84
    %v442 = vpop.permute.xlu0 %441
    %443 = vrot.lane.b32.xlu0 %v216, 84
    %v444 = vpop.permute.xlu0 %443
    %445 = vrot.lane.b32.xlu0 %v217, 84
    %v446 = vpop.permute.xlu0 %445
    %447 = vrot.lane.b32.xlu0 %v218, 84
    %v448 = vpop.permute.xlu0 %447
    %449 = vrot.lane.b32.xlu0 %v219, 84
    %v450 = vpop.permute.xlu0 %449
    %451 = vrot.lane.b32.xlu0 %v220, 84
    %v452 = vpop.permute.xlu0 %451
    %453 = vrot.lane.b32.xlu0 %v221, 84
    %v454 = vpop.permute.xlu0 %453
    %455 = vrot.lane.b32.xlu0 %v222, 84
    %v456 = vpop.permute.xlu0 %455
    %457 = vrot.lane.b32.xlu0 %v223, 84
    %v458 = vpop.permute.xlu0 %457
    %459 = vrot.lane.b32.xlu0 %v224, 84
    %v460 = vpop.permute.xlu0 %459
    %461 = vrot.lane.b32.xlu0 %v225, 84
    %v462 = vpop.permute.xlu0 %461
    %463 = vrot.lane.b32.xlu0 %v226, 84
    %v464 = vpop.permute.xlu0 %463
    %465 = vrot.lane.b32.xlu0 %v227, 84
    %v466 = vpop.permute.xlu0 %465
    %467 = vrot.lane.b32.xlu0 %v228, 84
    %v468 = vpop.permute.xlu0 %467
    %485 = vrot.lane.b32.xlu0 %v261, 112
    %v486 = vpop.permute.xlu0 %485
    %487 = vrot.lane.b32.xlu0 %v262, 112
    %v488 = vpop.permute.xlu0 %487
    %489 = vrot.lane.b32.xlu0 %v263, 112
    %v490 = vpop.permute.xlu0 %489
    %491 = vrot.lane.b32.xlu0 %v264, 112
    %v492 = vpop.permute.xlu0 %491
    %493 = vrot.lane.b32.xlu0 %v265, 112
    %v494 = vpop.permute.xlu0 %493
    %495 = vrot.lane.b32.xlu0 %v266, 112
    %v496 = vpop.permute.xlu0 %495
    %497 = vrot.lane.b32.xlu0 %v267, 112
    %v498 = vpop.permute.xlu0 %497
    %499 = vrot.lane.b32.xlu0 %v268, 112
    %v500 = vpop.permute.xlu0 %499
    %501 = vrot.lane.b32.xlu0 %v269, 112
    %v502 = vpop.permute.xlu0 %501
    %503 = vrot.lane.b32.xlu0 %v270, 112
    %v504 = vpop.permute.xlu0 %503
    %505 = vrot.lane.b32.xlu0 %v271, 112
    %v506 = vpop.permute.xlu0 %505
    %507 = vrot.lane.b32.xlu0 %v272, 112
    %v508 = vpop.permute.xlu0 %507
    %509 = vrot.lane.b32.xlu0 %v273, 112
    %v510 = vpop.permute.xlu0 %509
    %511 = vrot.lane.b32.xlu0 %v274, 112
    %v512 = vpop.permute.xlu0 %511
    %513 = vrot.lane.b32.xlu0 %v275, 112
    %v514 = vpop.permute.xlu0 %513
    %515 = vrot.lane.b32.xlu0 %v276, 112
    %v516 = vpop.permute.xlu0 %515
    %533 = vrot.lane.b32.xlu0 %v309, 12
    %v534 = vpop.permute.xlu0 %533
    %535 = vrot.lane.b32.xlu0 %v310, 12
    %v536 = vpop.permute.xlu0 %535
    %537 = vrot.lane.b32.xlu0 %v311, 12
    %v538 = vpop.permute.xlu0 %537
    %539 = vrot.lane.b32.xlu0 %v312, 12
    %v540 = vpop.permute.xlu0 %539
    %541 = vrot.lane.b32.xlu0 %v313, 12
    %v542 = vpop.permute.xlu0 %541
    %543 = vrot.lane.b32.xlu0 %v314, 12
    %v544 = vpop.permute.xlu0 %543
    %545 = vrot.lane.b32.xlu0 %v315, 12
    %v546 = vpop.permute.xlu0 %545
    %547 = vrot.lane.b32.xlu0 %v316, 12
    %v548 = vpop.permute.xlu0 %547
    %549 = vrot.lane.b32.xlu0 %v317, 12
    %v550 = vpop.permute.xlu0 %549
    %551 = vrot.lane.b32.xlu0 %v318, 12
    %v552 = vpop.permute.xlu0 %551
    %553 = vrot.lane.b32.xlu0 %v319, 12
    %v554 = vpop.permute.xlu0 %553
    %555 = vrot.lane.b32.xlu0 %v320, 12
    %v556 = vpop.permute.xlu0 %555
    %557 = vrot.lane.b32.xlu0 %v321, 12
    %v558 = vpop.permute.xlu0 %557
    %559 = vrot.lane.b32.xlu0 %v322, 12
    %v560 = vpop.permute.xlu0 %559
    %561 = vrot.lane.b32.xlu0 %v323, 12
    %v562 = vpop.permute.xlu0 %561
    %563 = vrot.lane.b32.xlu0 %v324, 12
    %v564 = vpop.permute.xlu0 %563
    %vm565 = vcmask 228352
    %v568 = vsel %vm565, %v69, %v342
    %v571 = vsel %vm565, %v70, %v344
    %v574 = vsel %vm565, %v71, %v346
    %v577 = vsel %vm565, %v72, %v348
    %v580 = vsel %vm565, %v73, %v350
    %v583 = vsel %vm565, %v74, %v352
    %v586 = vsel %vm565, %v75, %v354
    %v589 = vsel %vm565, %v76, %v356
    %v592 = vsel %vm565, %v77, %v358
    %v595 = vsel %vm565, %v78, %v360
    %v598 = vsel %vm565, %v79, %v362
    %v601 = vsel %vm565, %v80, %v364
    %v604 = vsel %vm565, %v81, %v366
    %v607 = vsel %vm565, %v82, %v368
    %v610 = vsel %vm565, %v83, %v370
    %v613 = vsel %vm565, %v84, %v372
    %vm614 = vcmask 457728
    %v616 = vsel %vm614, %v568, %v390
    %v618 = vsel %vm614, %v571, %v392
    %v620 = vsel %vm614, %v574, %v394
    %v622 = vsel %vm614, %v577, %v396
    %v624 = vsel %vm614, %v580, %v398
    %v626 = vsel %vm614, %v583, %v400
    %v628 = vsel %vm614, %v586, %v402
    %v630 = vsel %vm614, %v589, %v404
    %v632 = vsel %vm614, %v592, %v406
    %v634 = vsel %vm614, %v595, %v408
    %v636 = vsel %vm614, %v598, %v410
    %v638 = vsel %vm614, %v601, %v412
    %v640 = vsel %vm614, %v604, %v414
    %v642 = vsel %vm614, %v607, %v416
    %v644 = vsel %vm614, %v610, %v418
    %v646 = vsel %vm614, %v613, %v420
    %vm647 = vcmask 687104
    %v649 = vsel %vm647, %v616, %v438
    %v651 = vsel %vm647, %v618, %v440
    %v653 = vsel %vm647, %v620, %v442
    %v655 = vsel %vm647, %v622, %v444
    %v657 = vsel %vm647, %v624, %v446
    %v659 = vsel %vm647, %v626, %v448
    %v661 = vsel %vm647, %v628, %v450
    %v663 = vsel %vm647, %v630, %v452
    %v665 = vsel %vm647, %v632, %v454
    %v667 = vsel %vm647, %v634, %v456
    %v669 = vsel %vm647, %v636, %v458
    %v671 = vsel %vm647, %v638, %v460
    %v673 = vsel %vm647, %v640, %v462
    %v675 = vsel %vm647, %v642, %v464
    %v677 = vsel %vm647, %v644, %v466
    %v679 = vsel %vm647, %v646, %v468
    %vm680 = vcmask 916480
    %v682 = vsel %vm680, %v649, %v486
    %v685 = vsel %vm680, %v651, %v488
    %v688 = vsel %vm680, %v653, %v490
    %v691 = vsel %vm680, %v655, %v492
    %v694 = vsel %vm680, %v657, %v494
    %v697 = vsel %vm680, %v659, %v496
    %v700 = vsel %vm680, %v661, %v498
    %v703 = vsel %vm680, %v663, %v500
    %v706 = vsel %vm680, %v665, %v502
    %v709 = vsel %vm680, %v667, %v504
    %v712 = vsel %vm680, %v669, %v506
    %v715 = vsel %vm680, %v671, %v508
    %v718 = vsel %vm680, %v673, %v510
    %v721 = vsel %vm680, %v675, %v512
    %v724 = vsel %vm680, %v677, %v514
    %v727 = vsel %vm680, %v679, %v516
    %vm729 = vcmask 97280
    %v731 = vsel %vm729, %v486, %v534
    %v733 = vsel %vm729, %v488, %v536
    %v735 = vsel %vm729, %v490, %v538
    %v737 = vsel %vm729, %v492, %v540
    %v739 = vsel %vm729, %v494, %v542
    %v741 = vsel %vm729, %v496, %v544
    %v743 = vsel %vm729, %v498, %v546
    %v745 = vsel %vm729, %v500, %v548
    %v747 = vsel %vm729, %v502, %v550
    %v749 = vsel %vm729, %v504, %v552
    %v751 = vsel %vm729, %v506, %v554
    %v753 = vsel %vm729, %v508, %v556
    %v755 = vsel %vm729, %v510, %v558
    %v757 = vsel %vm729, %v512, %v560
    %v759 = vsel %vm729, %v514, %v562
    %v761 = vsel %vm729, %v516, %v564
    %v762 = vld [vmem:[%s2] sm:$0xff]
    %v763 = vld [vmem:[%s2 + $0x8] sm:$0xff]
    %v764 = vld [vmem:[%s2 + $0x10] sm:$0xff]
    %v765 = vld [vmem:[%s2 + $0x18] sm:$0xff]
    %v766 = vld [vmem:[%s2 + $0x20] sm:$0xff]
    %v767 = vld [vmem:[%s2 + $0x28] sm:$0xff]
    %v768 = vld [vmem:[%s2 + $0x30] sm:$0xff]
    %v769 = vld [vmem:[%s2 + $0x38] sm:$0xff]
    %v770 = vld [vmem:[%s2 + $0x40] sm:$0xff]
    %v771 = vld [vmem:[%s2 + $0x48] sm:$0xff]
    %v772 = vld [vmem:[%s2 + $0x50] sm:$0xff]
    %v773 = vld [vmem:[%s2 + $0x58] sm:$0xff]
    %v774 = vld [vmem:[%s2 + $0x60] sm:$0xff]
    %v775 = vld [vmem:[%s2 + $0x68] sm:$0xff]
    %v776 = vld [vmem:[%s2 + $0x70] sm:$0xff]
    %v777 = vld [vmem:[%s2 + $0x78] sm:$0xff]
    %v778 = vld [vmem:[%s2 + $0x80] sm:$0xff]
    %v779 = vld [vmem:[%s2 + $0x88] sm:$0xff]
    %v780 = vld [vmem:[%s2 + $0x90] sm:$0xff]
    %v781 = vld [vmem:[%s2 + $0x98] sm:$0xff]
    %v782 = vld [vmem:[%s2 + $0xa0] sm:$0xff]
    %v783 = vld [vmem:[%s2 + $0xa8] sm:$0xff]
    %v784 = vld [vmem:[%s2 + $0xb0] sm:$0xff]
    %v785 = vld [vmem:[%s2 + $0xb8] sm:$0xff]
    %v786 = vld [vmem:[%s2 + $0xc0] sm:$0xff]
    %v787 = vld [vmem:[%s2 + $0xc8] sm:$0xff]
    %v788 = vld [vmem:[%s2 + $0xd0] sm:$0xff]
    %v789 = vld [vmem:[%s2 + $0xd8] sm:$0xff]
    %v790 = vld [vmem:[%s2 + $0xe0] sm:$0xff]
    %v791 = vld [vmem:[%s2 + $0xe8] sm:$0xff]
    %v792 = vld [vmem:[%s2 + $0xf0] sm:$0xff]
    %v793 = vld [vmem:[%s2 + $0xf8] sm:$0xff]
    %v794 = vld [vmem:[%s2 + $0x100] sm:$0xff]
    %v795 = vld [vmem:[%s2 + $0x108] sm:$0xff]
    %v796 = vld [vmem:[%s2 + $0x110] sm:$0xff]
    %v797 = vld [vmem:[%s2 + $0x118] sm:$0xff]
    %v798 = vld [vmem:[%s2 + $0x120] sm:$0xff]
    %v799 = vld [vmem:[%s2 + $0x128] sm:$0xff]
    %v800 = vld [vmem:[%s2 + $0x130] sm:$0xff]
    %v801 = vld [vmem:[%s2 + $0x138] sm:$0xff]
    %v802 = vld [vmem:[%s2 + $0x140] sm:$0xff]
    %v803 = vld [vmem:[%s2 + $0x148] sm:$0xff]
    %v846 = vunpack.c.l.b16 %v762
    %v847 = vunpack.c.h.b16 %v762
    %v848 = vunpack.c.l.b16 %v763
    %v849 = vunpack.c.h.b16 %v763
    %v850 = vunpack.c.l.b16 %v764
    %v851 = vunpack.c.h.b16 %v764
    %v852 = vunpack.c.l.b16 %v765
    %v853 = vunpack.c.h.b16 %v765
    %v854 = vunpack.c.l.b16 %v766
    %v855 = vunpack.c.h.b16 %v766
    %v856 = vunpack.c.l.b16 %v767
    %v857 = vunpack.c.h.b16 %v767
    %v858 = vunpack.c.l.b16 %v768
    %v859 = vunpack.c.h.b16 %v768
    %v860 = vunpack.c.l.b16 %v769
    %v861 = vunpack.c.h.b16 %v769
    %v862 = vunpack.c.l.b16 %v770
    %v863 = vunpack.c.h.b16 %v770
    %v864 = vunpack.c.l.b16 %v771
    %v865 = vunpack.c.h.b16 %v771
    %v866 = vunpack.c.l.b16 %v772
    %v867 = vunpack.c.h.b16 %v772
    %v868 = vunpack.c.l.b16 %v773
    %v869 = vunpack.c.h.b16 %v773
    %v870 = vunpack.c.l.b16 %v774
    %v871 = vunpack.c.h.b16 %v774
    %v872 = vunpack.c.l.b16 %v775
    %v873 = vunpack.c.h.b16 %v775
    %v874 = vunpack.c.l.b16 %v776
    %v875 = vunpack.c.h.b16 %v776
    %v876 = vunpack.c.l.b16 %v777
    %v877 = vunpack.c.h.b16 %v777
    %v878 = vunpack.c.l.b16 %v778
    %v879 = vunpack.c.h.b16 %v778
    %v880 = vunpack.c.l.b16 %v779
    %v881 = vunpack.c.h.b16 %v779
    %v882 = vunpack.c.l.b16 %v780
    %v883 = vunpack.c.h.b16 %v780
    %v884 = vunpack.c.l.b16 %v781
    %v885 = vunpack.c.h.b16 %v781
    %v886 = vunpack.c.l.b16 %v782
    %v887 = vunpack.c.h.b16 %v782
    %v888 = vunpack.c.l.b16 %v783
    %v889 = vunpack.c.h.b16 %v783
    %v890 = vunpack.c.l.b16 %v784
    %v891 = vunpack.c.h.b16 %v784
    %v892 = vunpack.c.l.b16 %v785
    %v893 = vunpack.c.h.b16 %v785
    %v894 = vunpack.c.l.b16 %v786
    %v895 = vunpack.c.h.b16 %v786
    %v896 = vunpack.c.l.b16 %v787
    %v897 = vunpack.c.h.b16 %v787
    %v898 = vunpack.c.l.b16 %v788
    %v899 = vunpack.c.h.b16 %v788
    %v900 = vunpack.c.l.b16 %v789
    %v901 = vunpack.c.h.b16 %v789
    %v902 = vunpack.c.l.b16 %v790
    %v903 = vunpack.c.h.b16 %v790
    %v904 = vunpack.c.l.b16 %v791
    %v905 = vunpack.c.h.b16 %v791
    %v906 = vunpack.c.l.b16 %v792
    %v907 = vunpack.c.h.b16 %v792
    %v908 = vunpack.c.l.b16 %v793
    %v909 = vunpack.c.h.b16 %v793
    %v910 = vunpack.c.l.b16 %v794
    %v911 = vunpack.c.h.b16 %v794
    %v912 = vunpack.c.l.b16 %v795
    %v913 = vunpack.c.h.b16 %v795
    %v914 = vunpack.c.l.b16 %v796
    %v915 = vunpack.c.h.b16 %v796
    %v916 = vunpack.c.l.b16 %v797
    %v917 = vunpack.c.h.b16 %v797
    %v918 = vunpack.c.l.b16 %v798
    %v919 = vunpack.c.h.b16 %v798
    %v920 = vunpack.c.l.b16 %v799
    %v921 = vunpack.c.h.b16 %v799
    %v922 = vunpack.c.l.b16 %v800
    %v923 = vunpack.c.h.b16 %v800
    %v924 = vunpack.c.l.b16 %v801
    %v925 = vunpack.c.h.b16 %v801
    %v926 = vunpack.c.l.b16 %v802
    %v927 = vunpack.c.h.b16 %v802
    %v928 = vunpack.c.l.b16 %v803
    %v929 = vunpack.c.h.b16 %v803
    %v930 = vpack.c.b16 %v850, %v846
    %v931 = vpack.c.b16 %v851, %v847
    %v932 = vpack.c.b16 %v852, %v848
    %v933 = vpack.c.b16 %v853, %v849
    %v934 = vpack.c.b16 %v858, %v854
    %v935 = vpack.c.b16 %v859, %v855
    %v936 = vpack.c.b16 %v860, %v856
    %v937 = vpack.c.b16 %v861, %v857
    %v938 = vpack.c.b16 %v866, %v862
    %v939 = vpack.c.b16 %v867, %v863
    %v940 = vpack.c.b16 %v868, %v864
    %v941 = vpack.c.b16 %v869, %v865
    %v942 = vpack.c.b16 %v874, %v870
    %v943 = vpack.c.b16 %v875, %v871
    %v944 = vpack.c.b16 %v876, %v872
    %v945 = vpack.c.b16 %v877, %v873
    %v946 = vpack.c.b16 %v882, %v878
    %v947 = vpack.c.b16 %v883, %v879
    %v948 = vpack.c.b16 %v884, %v880
    %v949 = vpack.c.b16 %v885, %v881
    %v950 = vpack.c.b16 %v890, %v886
    %v951 = vpack.c.b16 %v891, %v887
    %v952 = vpack.c.b16 %v892, %v888
    %v953 = vpack.c.b16 %v893, %v889
    %v954 = vpack.c.b16 %v898, %v894
    %v955 = vpack.c.b16 %v899, %v895
    %v956 = vpack.c.b16 %v900, %v896
    %v957 = vpack.c.b16 %v901, %v897
    %v958 = vpack.c.b16 %v906, %v902
    %v959 = vpack.c.b16 %v907, %v903
    %v960 = vpack.c.b16 %v908, %v904
    %v961 = vpack.c.b16 %v909, %v905
    %v962 = vpack.c.b16 %v914, %v910
    %v963 = vpack.c.b16 %v915, %v911
    %v964 = vpack.c.b16 %v916, %v912
    %v965 = vpack.c.b16 %v917, %v913
    %v966 = vpack.c.b16 %v922, %v918
    %v967 = vpack.c.b16 %v923, %v919
    %v968 = vpack.c.b16 %v924, %v920
    %v969 = vpack.c.b16 %v925, %v921
    %v970 = vpack.c.b16 %v926, %v926
    %v971 = vpack.c.b16 %v927, %v927
    %v972 = vpack.c.b16 %v928, %v928
    %v973 = vpack.c.b16 %v929, %v929
    %vm1014 = vcmask 326656
    %v1015 = vsel %vm1014, %v731, 0
    %v1017 = vsel %vm1014, %v733, 0
    %v1019 = vsel %vm1014, %v735, 0
    %v1021 = vsel %vm1014, %v737, 0
    %v1023 = vsel %vm1014, %v739, 0
    %v1025 = vsel %vm1014, %v741, 0
    %v1027 = vsel %vm1014, %v743, 0
    %v1029 = vsel %vm1014, %v745, 0
    %v1031 = vsel %vm1014, %v747, 0
    %v1033 = vsel %vm1014, %v749, 0
    %v1035 = vsel %vm1014, %v751, 0
    %v1037 = vsel %vm1014, %v753, 0
    %v1039 = vsel %vm1014, %v755, 0
    %v1041 = vsel %vm1014, %v757, 0
    %v1043 = vsel %vm1014, %v759, 0
    %v1045 = vsel %vm1014, %v761, 0
    %vm1047 = vcmask 1043456
    %v1049 = vsel %vm1047, %v970, 0
    %v1052 = vsel %vm1047, %v971, 0
    %v1055 = vsel %vm1047, %v972, 0
    %v1058 = vsel %vm1047, %v973, 0
    %1060 = vmatprep.subr.bf16.mxu0 %v931
    %1061 = vmatpush1.bf16.msra.mxu0 %v930
    %1062 = vmatprep.subr.bf16.mxu0 %v935
    %1063 = vmatpush1.bf16.msra.mxu0 %v934
    %1064 = vmatprep.subr.bf16.mxu0 %v939
    %1065 = vmatpush1.bf16.msra.mxu0 %v938
    %1066 = vmatprep.subr.bf16.mxu0 %v943
    %1067 = vmatpush1.bf16.msra.mxu0 %v942
    %1068 = vmatprep.subr.bf16.mxu0 %v947
    %1069 = vmatpush1.bf16.msra.mxu0 %v946
    %1070 = vmatprep.subr.bf16.mxu0 %v951
    %1071 = vmatpush1.bf16.msra.mxu0 %v950
    %1072 = vmatprep.subr.bf16.mxu0 %v955
    %1073 = vmatpush1.bf16.msra.mxu0 %v954
    %1074 = vmatprep.subr.bf16.mxu0 %v959
    %1075 = vmatpush1.bf16.msra.mxu0 %v958
    %1076 = vmatprep.subr.bf16.mxu0 %v963
    %1077 = vmatpush1.bf16.msra.mxu0 %v962
    %1078 = vmatprep.subr.bf16.mxu0 %v967
    %1079 = vmatpush1.bf16.msra.mxu0 %v966
    %1080 = vmatprep.subr.bf16.mxu0 %v1052
    %1081 = vmatpush1.bf16.msra.mxu0 %v1049
    %1082 = vmatprep.subr.bf16.mxu0 0
    %1083 = vmatpush1.bf16.msra.mxu0 0
    %1084 = vmatprep.subr.bf16.mxu0 0
    %1085 = vmatpush1.bf16.msra.mxu0 0
    %1086 = vmatprep.subr.bf16.mxu0 0
    %1087 = vmatpush1.bf16.msra.mxu0 0
    %1088 = vmatprep.subr.bf16.mxu0 0
    %1089 = vmatpush1.bf16.msra.mxu0 0
    %1090 = vmatprep.subr.bf16.mxu0 0
    %1091 = vmatpush1.bf16.msra.mxu0 0
    %1092 = vmatprep.mubr.bf16.mxu0 %v1015
    %1093 = vmatmul.mubr.bf16.gmra.mrb[0].mxu0 %v682
    %v1094 = vpop.f32.mrb[0].mxu0
    %v1095 = vadd.f32 0.0, %v1094
    %v1096 = vpop.f32.mrb[0].mxu0
    %v1097 = vadd.f32 0.0, %v1096
    %v1098 = vpop.f32.mrb[0].mxu0
    %v1099 = vadd.f32 0.0, %v1098
    %v1100 = vpop.f32.mrb[0].mxu0
    %v1101 = vadd.f32 0.0, %v1100
    %1102 = vmatprep.mubr.bf16.mxu0 %v1017
    %1103 = vmatmul.mubr.bf16.gmra.mrb[0].mxu0 %v685
    %v1104 = vpop.f32.mrb[0].mxu0
    %v1105 = vadd.f32 0.0, %v1104
    %v1106 = vpop.f32.mrb[0].mxu0
    %v1107 = vadd.f32 0.0, %v1106
    %v1108 = vpop.f32.mrb[0].mxu0
    %v1109 = vadd.f32 0.0, %v1108
    %v1110 = vpop.f32.mrb[0].mxu0
    %v1111 = vadd.f32 0.0, %v1110
    %1112 = vmatprep.mubr.bf16.mxu0 %v1019
    %1113 = vmatmul.mubr.bf16.gmra.mrb[0].mxu0 %v688
    %v1114 = vpop.f32.mrb[0].mxu0
    %v1115 = vadd.f32 0.0, %v1114
    %v1116 = vpop.f32.mrb[0].mxu0
    %v1117 = vadd.f32 0.0, %v1116
    %v1118 = vpop.f32.mrb[0].mxu0
    %v1119 = vadd.f32 0.0, %v1118
    %v1120 = vpop.f32.mrb[0].mxu0
    %v1121 = vadd.f32 0.0, %v1120
    %1122 = vmatprep.mubr.bf16.mxu0 %v1021
    %1123 = vmatmul.mubr.bf16.gmra.mrb[0].mxu0 %v691
    %v1124 = vpop.f32.mrb[0].mxu0
    %v1125 = vadd.f32 0.0, %v1124
    %v1126 = vpop.f32.mrb[0].mxu0
    %v1127 = vadd.f32 0.0, %v1126
    %v1128 = vpop.f32.mrb[0].mxu0
    %v1129 = vadd.f32 0.0, %v1128
    %v1130 = vpop.f32.mrb[0].mxu0
    %v1131 = vadd.f32 0.0, %v1130
    %1132 = vmatprep.mubr.bf16.mxu0 %v1023
    %1133 = vmatmul.mubr.bf16.gmra.mrb[0].mxu0 %v694
    %v1134 = vpop.f32.mrb[0].mxu0
    %v1135 = vadd.f32 0.0, %v1134
    %v1136 = vpop.f32.mrb[0].mxu0
    %v1137 = vadd.f32 0.0, %v1136
    %v1138 = vpop.f32.mrb[0].mxu0
    %v1139 = vadd.f32 0.0, %v1138
    %v1140 = vpop.f32.mrb[0].mxu0
    %v1141 = vadd.f32 0.0, %v1140
    %1142 = vmatprep.mubr.bf16.mxu0 %v1025
    %1143 = vmatmul.mubr.bf16.gmra.mrb[0].mxu0 %v697
    %v1144 = vpop.f32.mrb[0].mxu0
    %v1145 = vadd.f32 0.0, %v1144
    %v1146 = vpop.f32.mrb[0].mxu0
    %v1147 = vadd.f32 0.0, %v1146
    %v1148 = vpop.f32.mrb[0].mxu0
    %v1149 = vadd.f32 0.0, %v1148
    %v1150 = vpop.f32.mrb[0].mxu0
    %v1151 = vadd.f32 0.0, %v1150
    %1152 = vmatprep.mubr.bf16.mxu0 %v1027
    %1153 = vmatmul.mubr.bf16.gmra.mrb[0].mxu0 %v700
    %v1154 = vpop.f32.mrb[0].mxu0
    %v1155 = vadd.f32 0.0, %v1154
    %v1156 = vpop.f32.mrb[0].mxu0
    %v1157 = vadd.f32 0.0, %v1156
    %v1158 = vpop.f32.mrb[0].mxu0
    %v1159 = vadd.f32 0.0, %v1158
    %v1160 = vpop.f32.mrb[0].mxu0
    %v1161 = vadd.f32 0.0, %v1160
    %1162 = vmatprep.mubr.bf16.mxu0 %v1029
    %1163 = vmatmul.mubr.bf16.gmra.mrb[0].mxu0 %v703
    %v1164 = vpop.f32.mrb[0].mxu0
    %v1165 = vadd.f32 0.0, %v1164
    %v1166 = vpop.f32.mrb[0].mxu0
    %v1167 = vadd.f32 0.0, %v1166
    %v1168 = vpop.f32.mrb[0].mxu0
    %v1169 = vadd.f32 0.0, %v1168
    %v1170 = vpop.f32.mrb[0].mxu0
    %v1171 = vadd.f32 0.0, %v1170
    %1172 = vmatprep.mubr.bf16.mxu0 %v1031
    %1173 = vmatmul.mubr.bf16.gmra.mrb[0].mxu0 %v706
    %v1174 = vpop.f32.mrb[0].mxu0
    %v1175 = vadd.f32 0.0, %v1174
    %v1176 = vpop.f32.mrb[0].mxu0
    %v1177 = vadd.f32 0.0, %v1176
    %v1178 = vpop.f32.mrb[0].mxu0
    %v1179 = vadd.f32 0.0, %v1178
    %v1180 = vpop.f32.mrb[0].mxu0
    %v1181 = vadd.f32 0.0, %v1180
    %1182 = vmatprep.mubr.bf16.mxu0 %v1033
    %1183 = vmatmul.mubr.bf16.gmra.mrb[0].mxu0 %v709
    %v1184 = vpop.f32.mrb[0].mxu0
    %v1185 = vadd.f32 0.0, %v1184
    %v1186 = vpop.f32.mrb[0].mxu0
    %v1187 = vadd.f32 0.0, %v1186
    %v1188 = vpop.f32.mrb[0].mxu0
    %v1189 = vadd.f32 0.0, %v1188
    %v1190 = vpop.f32.mrb[0].mxu0
    %v1191 = vadd.f32 0.0, %v1190
    %1192 = vmatprep.mubr.bf16.mxu0 %v1035
    %1193 = vmatmul.mubr.bf16.gmra.mrb[0].mxu0 %v712
    %v1194 = vpop.f32.mrb[0].mxu0
    %v1195 = vadd.f32 0.0, %v1194
    %v1196 = vpop.f32.mrb[0].mxu0
    %v1197 = vadd.f32 0.0, %v1196
    %v1198 = vpop.f32.mrb[0].mxu0
    %v1199 = vadd.f32 0.0, %v1198
    %v1200 = vpop.f32.mrb[0].mxu0
    %v1201 = vadd.f32 0.0, %v1200
    %1202 = vmatprep.mubr.bf16.mxu0 %v1037
    %1203 = vmatmul.mubr.bf16.gmra.mrb[0].mxu0 %v715
    %v1204 = vpop.f32.mrb[0].mxu0
    %v1205 = vadd.f32 0.0, %v1204
    %v1206 = vpop.f32.mrb[0].mxu0
    %v1207 = vadd.f32 0.0, %v1206
    %v1208 = vpop.f32.mrb[0].mxu0
    %v1209 = vadd.f32 0.0, %v1208
    %v1210 = vpop.f32.mrb[0].mxu0
    %v1211 = vadd.f32 0.0, %v1210
    %1212 = vmatprep.mubr.bf16.mxu0 %v1039
    %1213 = vmatmul.mubr.bf16.gmra.mrb[0].mxu0 %v718
    %v1214 = vpop.f32.mrb[0].mxu0
    %v1215 = vadd.f32 0.0, %v1214
    %v1216 = vpop.f32.mrb[0].mxu0
    %v1217 = vadd.f32 0.0, %v1216
    %v1218 = vpop.f32.mrb[0].mxu0
    %v1219 = vadd.f32 0.0, %v1218
    %v1220 = vpop.f32.mrb[0].mxu0
    %v1221 = vadd.f32 0.0, %v1220
    %1222 = vmatprep.mubr.bf16.mxu0 %v1041
    %1223 = vmatmul.mubr.bf16.gmra.mrb[0].mxu0 %v721
    %v1224 = vpop.f32.mrb[0].mxu0
    %v1225 = vadd.f32 0.0, %v1224
    %v1226 = vpop.f32.mrb[0].mxu0
    %v1227 = vadd.f32 0.0, %v1226
    %v1228 = vpop.f32.mrb[0].mxu0
    %v1229 = vadd.f32 0.0, %v1228
    %v1230 = vpop.f32.mrb[0].mxu0
    %v1231 = vadd.f32 0.0, %v1230
    %1232 = vmatprep.mubr.bf16.mxu0 %v1043
    %1233 = vmatmul.mubr.bf16.gmra.mrb[0].mxu0 %v724
    %v1234 = vpop.f32.mrb[0].mxu0
    %v1235 = vadd.f32 0.0, %v1234
    %v1236 = vpop.f32.mrb[0].mxu0
    %v1237 = vadd.f32 0.0, %v1236
    %v1238 = vpop.f32.mrb[0].mxu0
    %v1239 = vadd.f32 0.0, %v1238
    %v1240 = vpop.f32.mrb[0].mxu0
    %v1241 = vadd.f32 0.0, %v1240
    %1242 = vmatprep.mubr.bf16.mxu0 %v1045
    %1243 = vmatmul.mubr.bf16.gmra.mrb[0].mxu0 %v727
    %v1244 = vpop.f32.mrb[0].mxu0
    %v1245 = vadd.f32 0.0, %v1244
    %v1246 = vpop.f32.mrb[0].mxu0
    %v1247 = vadd.f32 0.0, %v1246
    %v1248 = vpop.f32.mrb[0].mxu0
    %v1249 = vadd.f32 0.0, %v1248
    %v1250 = vpop.f32.mrb[0].mxu0
    %v1251 = vadd.f32 0.0, %v1250
    %1252 = vdwg.mxu0
    %1253 = vmatprep.subr.bf16.mxu0 %v933
    %1254 = vmatpush1.bf16.msra.mxu0 %v932
    %1255 = vmatprep.subr.bf16.mxu0 %v937
    %1256 = vmatpush1.bf16.msra.mxu0 %v936
    %1257 = vmatprep.subr.bf16.mxu0 %v941
    %1258 = vmatpush1.bf16.msra.mxu0 %v940
    %1259 = vmatprep.subr.bf16.mxu0 %v945
    %1260 = vmatpush1.bf16.msra.mxu0 %v944
    %1261 = vmatprep.subr.bf16.mxu0 %v949
    %1262 = vmatpush1.bf16.msra.mxu0 %v948
    %1263 = vmatprep.subr.bf16.mxu0 %v953
    %1264 = vmatpush1.bf16.msra.mxu0 %v952
    %1265 = vmatprep.subr.bf16.mxu0 %v957
    %1266 = vmatpush1.bf16.msra.mxu0 %v956
    %1267 = vmatprep.subr.bf16.mxu0 %v961
    %1268 = vmatpush1.bf16.msra.mxu0 %v960
    %1269 = vmatprep.subr.bf16.mxu0 %v965
    %1270 = vmatpush1.bf16.msra.mxu0 %v964
    %1271 = vmatprep.subr.bf16.mxu0 %v969
    %1272 = vmatpush1.bf16.msra.mxu0 %v968
    %1273 = vmatprep.subr.bf16.mxu0 %v1058
    %1274 = vmatpush1.bf16.msra.mxu0 %v1055
    %1275 = vmatprep.subr.bf16.mxu0 0
    %1276 = vmatpush1.bf16.msra.mxu0 0
    %1277 = vmatprep.subr.bf16.mxu0 0
    %1278 = vmatpush1.bf16.msra.mxu0 0
    %1279 = vmatprep.subr.bf16.mxu0 0
    %1280 = vmatpush1.bf16.msra.mxu0 0
    %1281 = vmatprep.subr.bf16.mxu0 0
    %1282 = vmatpush1.bf16.msra.mxu0 0
    %1283 = vmatprep.subr.bf16.mxu0 0
    %1284 = vmatpush1.bf16.msra.mxu0 0
    %1285 = vmatprep.mubr.bf16.mxu0 %v1015
    %1286 = vmatmul.mubr.bf16.gmra.mrb[0].mxu0 %v682
    %v1287 = vpop.f32.mrb[0].mxu0
    %v1288 = vadd.f32 0.0, %v1287
    %v1289 = vpop.f32.mrb[0].mxu0
    %v1290 = vadd.f32 0.0, %v1289
    %v1291 = vpop.f32.mrb[0].mxu0
    %v1292 = vadd.f32 0.0, %v1291
    %v1293 = vpop.f32.mrb[0].mxu0
    %v1294 = vadd.f32 0.0, %v1293
    %1295 = vmatprep.mubr.bf16.mxu0 %v1017
    %1296 = vmatmul.mubr.bf16.gmra.mrb[0].mxu0 %v685
    %v1297 = vpop.f32.mrb[0].mxu0
    %v1298 = vadd.f32 0.0, %v1297
    %v1299 = vpop.f32.mrb[0].mxu0
    %v1300 = vadd.f32 0.0, %v1299
    %v1301 = vpop.f32.mrb[0].mxu0
    %v1302 = vadd.f32 0.0, %v1301
    %v1303 = vpop.f32.mrb[0].mxu0
    %v1304 = vadd.f32 0.0, %v1303
    %1305 = vmatprep.mubr.bf16.mxu0 %v1019
    %1306 = vmatmul.mubr.bf16.gmra.mrb[0].mxu0 %v688
    %v1307 = vpop.f32.mrb[0].mxu0
    %v1308 = vadd.f32 0.0, %v1307
    %v1309 = vpop.f32.mrb[0].mxu0
    %v1310 = vadd.f32 0.0, %v1309
    %v1311 = vpop.f32.mrb[0].mxu0
    %v1312 = vadd.f32 0.0, %v1311
    %v1313 = vpop.f32.mrb[0].mxu0
    %v1314 = vadd.f32 0.0, %v1313
    %1315 = vmatprep.mubr.bf16.mxu0 %v1021
    %1316 = vmatmul.mubr.bf16.gmra.mrb[0].mxu0 %v691
    %v1317 = vpop.f32.mrb[0].mxu0
    %v1318 = vadd.f32 0.0, %v1317
    %v1319 = vpop.f32.mrb[0].mxu0
    %v1320 = vadd.f32 0.0, %v1319
    %v1321 = vpop.f32.mrb[0].mxu0
    %v1322 = vadd.f32 0.0, %v1321
    %v1323 = vpop.f32.mrb[0].mxu0
    %v1324 = vadd.f32 0.0, %v1323
    %1325 = vmatprep.mubr.bf16.mxu0 %v1023
    %1326 = vmatmul.mubr.bf16.gmra.mrb[0].mxu0 %v694
    %v1327 = vpop.f32.mrb[0].mxu0
    %v1328 = vadd.f32 0.0, %v1327
    %v1329 = vpop.f32.mrb[0].mxu0
    %v1330 = vadd.f32 0.0, %v1329
    %v1331 = vpop.f32.mrb[0].mxu0
    %v1332 = vadd.f32 0.0, %v1331
    %v1333 = vpop.f32.mrb[0].mxu0
    %v1334 = vadd.f32 0.0, %v1333
    %1335 = vmatprep.mubr.bf16.mxu0 %v1025
    %1336 = vmatmul.mubr.bf16.gmra.mrb[0].mxu0 %v697
    %v1337 = vpop.f32.mrb[0].mxu0
    %v1338 = vadd.f32 0.0, %v1337
    %v1339 = vpop.f32.mrb[0].mxu0
    %v1340 = vadd.f32 0.0, %v1339
    %v1341 = vpop.f32.mrb[0].mxu0
    %v1342 = vadd.f32 0.0, %v1341
    %v1343 = vpop.f32.mrb[0].mxu0
    %v1344 = vadd.f32 0.0, %v1343
    %1345 = vmatprep.mubr.bf16.mxu0 %v1027
    %1346 = vmatmul.mubr.bf16.gmra.mrb[0].mxu0 %v700
    %v1347 = vpop.f32.mrb[0].mxu0
    %v1348 = vadd.f32 0.0, %v1347
    %v1349 = vpop.f32.mrb[0].mxu0
    %v1350 = vadd.f32 0.0, %v1349
    %v1351 = vpop.f32.mrb[0].mxu0
    %v1352 = vadd.f32 0.0, %v1351
    %v1353 = vpop.f32.mrb[0].mxu0
    %v1354 = vadd.f32 0.0, %v1353
    %1355 = vmatprep.mubr.bf16.mxu0 %v1029
    %1356 = vmatmul.mubr.bf16.gmra.mrb[0].mxu0 %v703
    %v1357 = vpop.f32.mrb[0].mxu0
    %v1358 = vadd.f32 0.0, %v1357
    %v1359 = vpop.f32.mrb[0].mxu0
    %v1360 = vadd.f32 0.0, %v1359
    %v1361 = vpop.f32.mrb[0].mxu0
    %v1362 = vadd.f32 0.0, %v1361
    %v1363 = vpop.f32.mrb[0].mxu0
    %v1364 = vadd.f32 0.0, %v1363
    %1365 = vmatprep.mubr.bf16.mxu0 %v1031
    %1366 = vmatmul.mubr.bf16.gmra.mrb[0].mxu0 %v706
    %v1367 = vpop.f32.mrb[0].mxu0
    %v1368 = vadd.f32 0.0, %v1367
    %v1369 = vpop.f32.mrb[0].mxu0
    %v1370 = vadd.f32 0.0, %v1369
    %v1371 = vpop.f32.mrb[0].mxu0
    %v1372 = vadd.f32 0.0, %v1371
    %v1373 = vpop.f32.mrb[0].mxu0
    %v1374 = vadd.f32 0.0, %v1373
    %1375 = vmatprep.mubr.bf16.mxu0 %v1033
    %1376 = vmatmul.mubr.bf16.gmra.mrb[0].mxu0 %v709
    %v1377 = vpop.f32.mrb[0].mxu0
    %v1378 = vadd.f32 0.0, %v1377
    %v1379 = vpop.f32.mrb[0].mxu0
    %v1380 = vadd.f32 0.0, %v1379
    %v1381 = vpop.f32.mrb[0].mxu0
    %v1382 = vadd.f32 0.0, %v1381
    %v1383 = vpop.f32.mrb[0].mxu0
    %v1384 = vadd.f32 0.0, %v1383
    %1385 = vmatprep.mubr.bf16.mxu0 %v1035
    %1386 = vmatmul.mubr.bf16.gmra.mrb[0].mxu0 %v712
    %v1387 = vpop.f32.mrb[0].mxu0
    %v1388 = vadd.f32 0.0, %v1387
    %v1389 = vpop.f32.mrb[0].mxu0
    %v1390 = vadd.f32 0.0, %v1389
    %v1391 = vpop.f32.mrb[0].mxu0
    %v1392 = vadd.f32 0.0, %v1391
    %v1393 = vpop.f32.mrb[0].mxu0
    %v1394 = vadd.f32 0.0, %v1393
    %1395 = vmatprep.mubr.bf16.mxu0 %v1037
    %1396 = vmatmul.mubr.bf16.gmra.mrb[0].mxu0 %v715
    %v1397 = vpop.f32.mrb[0].mxu0
    %v1398 = vadd.f32 0.0, %v1397
    %v1399 = vpop.f32.mrb[0].mxu0
    %v1400 = vadd.f32 0.0, %v1399
    %v1401 = vpop.f32.mrb[0].mxu0
    %v1402 = vadd.f32 0.0, %v1401
    %v1403 = vpop.f32.mrb[0].mxu0
    %v1404 = vadd.f32 0.0, %v1403
    %1405 = vmatprep.mubr.bf16.mxu0 %v1039
    %1406 = vmatmul.mubr.bf16.gmra.mrb[0].mxu0 %v718
    %v1407 = vpop.f32.mrb[0].mxu0
    %v1408 = vadd.f32 0.0, %v1407
    %v1409 = vpop.f32.mrb[0].mxu0
    %v1410 = vadd.f32 0.0, %v1409
    %v1411 = vpop.f32.mrb[0].mxu0
    %v1412 = vadd.f32 0.0, %v1411
    %v1413 = vpop.f32.mrb[0].mxu0
    %v1414 = vadd.f32 0.0, %v1413
    %1415 = vmatprep.mubr.bf16.mxu0 %v1041
    %1416 = vmatmul.mubr.bf16.gmra.mrb[0].mxu0 %v721
    %v1417 = vpop.f32.mrb[0].mxu0
    %v1418 = vadd.f32 0.0, %v1417
    %v1419 = vpop.f32.mrb[0].mxu0
    %v1420 = vadd.f32 0.0, %v1419
    %v1421 = vpop.f32.mrb[0].mxu0
    %v1422 = vadd.f32 0.0, %v1421
    %v1423 = vpop.f32.mrb[0].mxu0
    %v1424 = vadd.f32 0.0, %v1423
    %1425 = vmatprep.mubr.bf16.mxu0 %v1043
    %1426 = vmatmul.mubr.bf16.gmra.mrb[0].mxu0 %v724
    %v1427 = vpop.f32.mrb[0].mxu0
    %v1428 = vadd.f32 0.0, %v1427
    %v1429 = vpop.f32.mrb[0].mxu0
    %v1430 = vadd.f32 0.0, %v1429
    %v1431 = vpop.f32.mrb[0].mxu0
    %v1432 = vadd.f32 0.0, %v1431
    %v1433 = vpop.f32.mrb[0].mxu0
    %v1434 = vadd.f32 0.0, %v1433
    %1435 = vmatprep.mubr.bf16.mxu0 %v1045
    %1436 = vmatmul.mubr.bf16.gmra.mrb[0].mxu0 %v727
    %v1437 = vpop.f32.mrb[0].mxu0
    %v1438 = vadd.f32 0.0, %v1437
    %v1439 = vpop.f32.mrb[0].mxu0
    %v1440 = vadd.f32 0.0, %v1439
    %v1441 = vpop.f32.mrb[0].mxu0
    %v1442 = vadd.f32 0.0, %v1441
    %v1443 = vpop.f32.mrb[0].mxu0
    %v1444 = vadd.f32 0.0, %v1443
    %1445 = vdwg.mxu0
    %v1446 = vmax.f32 %v1095, %v1097
    %v1447 = vmax.f32 %v1099, %v1101
    %v1448 = vmax.f32 %v1105, %v1107
    %v1449 = vmax.f32 %v1109, %v1111
    %v1450 = vmax.f32 %v1115, %v1117
    %v1451 = vmax.f32 %v1119, %v1121
    %v1452 = vmax.f32 %v1125, %v1127
    %v1453 = vmax.f32 %v1129, %v1131
    %v1454 = vmax.f32 %v1135, %v1137
    %v1455 = vmax.f32 %v1139, %v1141
    %v1456 = vmax.f32 %v1145, %v1147
    %v1457 = vmax.f32 %v1149, %v1151
    %v1458 = vmax.f32 %v1155, %v1157
    %v1459 = vmax.f32 %v1159, %v1161
    %v1460 = vmax.f32 %v1165, %v1167
    %v1461 = vmax.f32 %v1169, %v1171
    %v1462 = vmax.f32 %v1175, %v1177
    %v1463 = vmax.f32 %v1179, %v1181
    %v1464 = vmax.f32 %v1185, %v1187
    %v1465 = vmax.f32 %v1189, %v1191
    %v1466 = vmax.f32 %v1195, %v1197
    %v1467 = vmax.f32 %v1199, %v1201
    %v1468 = vmax.f32 %v1205, %v1207
    %v1469 = vmax.f32 %v1209, %v1211
    %v1470 = vmax.f32 %v1215, %v1217
    %v1471 = vmax.f32 %v1219, %v1221
    %v1472 = vmax.f32 %v1225, %v1227
    %v1473 = vmax.f32 %v1229, %v1231
    %v1474 = vmax.f32 %v1235, %v1237
    %v1475 = vmax.f32 %v1239, %v1241
    %v1476 = vmax.f32 %v1245, %v1247
    %v1477 = vmax.f32 %v1249, %v1251
    %v1478 = vmax.f32 %v1288, %v1290
    %v1479 = vmax.f32 %v1292, %v1294
    %v1480 = vmax.f32 %v1298, %v1300
    %v1481 = vmax.f32 %v1302, %v1304
    %v1482 = vmax.f32 %v1308, %v1310
    %v1483 = vmax.f32 %v1312, %v1314
    %v1484 = vmax.f32 %v1318, %v1320
    %v1485 = vmax.f32 %v1322, %v1324
    %v1486 = vmax.f32 %v1328, %v1330
    %v1487 = vmax.f32 %v1332, %v1334
    %v1488 = vmax.f32 %v1338, %v1340
    %v1489 = vmax.f32 %v1342, %v1344
    %v1490 = vmax.f32 %v1348, %v1350
    %v1491 = vmax.f32 %v1352, %v1354
    %v1492 = vmax.f32 %v1358, %v1360
    %v1493 = vmax.f32 %v1362, %v1364
    %v1494 = vmax.f32 %v1368, %v1370
    %v1495 = vmax.f32 %v1372, %v1374
    %v1496 = vmax.f32 %v1378, %v1380
    %v1497 = vmax.f32 %v1382, %v1384
    %v1498 = vmax.f32 %v1388, %v1390
    %v1499 = vmax.f32 %v1392, %v1394
    %v1500 = vmax.f32 %v1398, %v1400
    %v1501 = vmax.f32 %v1402, %v1404
    %v1502 = vmax.f32 %v1408, %v1410
    %v1503 = vmax.f32 %v1412, %v1414
    %v1504 = vmax.f32 %v1418, %v1420
    %v1505 = vmax.f32 %v1422, %v1424
    %v1506 = vmax.f32 %v1428, %v1430
    %v1507 = vmax.f32 %v1432, %v1434
    %v1508 = vmax.f32 %v1438, %v1440
    %v1509 = vmax.f32 %v1442, %v1444
    %v1510 = vmax.f32 %v1446, %v1478
    %v1511 = vmax.f32 %v1447, %v1479
    %v1512 = vmax.f32 %v1448, %v1480
    %v1513 = vmax.f32 %v1449, %v1481
    %v1514 = vmax.f32 %v1450, %v1482
    %v1515 = vmax.f32 %v1451, %v1483
    %v1516 = vmax.f32 %v1452, %v1484
    %v1517 = vmax.f32 %v1453, %v1485
    %v1518 = vmax.f32 %v1454, %v1486
    %v1519 = vmax.f32 %v1455, %v1487
    %v1520 = vmax.f32 %v1456, %v1488
    %v1521 = vmax.f32 %v1457, %v1489
    %v1522 = vmax.f32 %v1458, %v1490
    %v1523 = vmax.f32 %v1459, %v1491
    %v1524 = vmax.f32 %v1460, %v1492
    %v1525 = vmax.f32 %v1461, %v1493
    %v1526 = vmax.f32 %v1462, %v1494
    %v1527 = vmax.f32 %v1463, %v1495
    %v1528 = vmax.f32 %v1464, %v1496
    %v1529 = vmax.f32 %v1465, %v1497
    %v1530 = vmax.f32 %v1466, %v1498
    %v1531 = vmax.f32 %v1467, %v1499
    %v1532 = vmax.f32 %v1468, %v1500
    %v1533 = vmax.f32 %v1469, %v1501
    %v1534 = vmax.f32 %v1470, %v1502
    %v1535 = vmax.f32 %v1471, %v1503
    %v1536 = vmax.f32 %v1472, %v1504
    %v1537 = vmax.f32 %v1473, %v1505
    %v1538 = vmax.f32 %v1474, %v1506
    %v1539 = vmax.f32 %v1475, %v1507
    %v1540 = vmax.f32 %v1476, %v1508
    %v1541 = vmax.f32 %v1477, %v1509
    %v1542 = vld [vmem:[%s3] sm:$0x1]
    %v1544 = vlaneseq
    %v1545 = vshrl.u32 %v1544, 7
    %v1546 = vsub.s32 0, %v1545
    %v1547 = vrot.slane %v1542, %v1546
    %v1549 = vadd.f32 %v1510, %v1547
    %v1550 = vadd.f32 %v1511, %v1547
    %v1551 = vadd.f32 %v1512, %v1547
    %v1552 = vadd.f32 %v1513, %v1547
    %v1553 = vadd.f32 %v1514, %v1547
    %v1554 = vadd.f32 %v1515, %v1547
    %v1555 = vadd.f32 %v1516, %v1547
    %v1556 = vadd.f32 %v1517, %v1547
    %v1557 = vadd.f32 %v1518, %v1547
    %v1558 = vadd.f32 %v1519, %v1547
    %v1559 = vadd.f32 %v1520, %v1547
    %v1560 = vadd.f32 %v1521, %v1547
    %v1561 = vadd.f32 %v1522, %v1547
    %v1562 = vadd.f32 %v1523, %v1547
    %v1563 = vadd.f32 %v1524, %v1547
    %v1564 = vadd.f32 %v1525, %v1547
    %v1565 = vadd.f32 %v1526, %v1547
    %v1566 = vadd.f32 %v1527, %v1547
    %v1567 = vadd.f32 %v1528, %v1547
    %v1568 = vadd.f32 %v1529, %v1547
    %v1569 = vadd.f32 %v1530, %v1547
    %v1570 = vadd.f32 %v1531, %v1547
    %v1571 = vadd.f32 %v1532, %v1547
    %v1572 = vadd.f32 %v1533, %v1547
    %v1573 = vadd.f32 %v1534, %v1547
    %v1574 = vadd.f32 %v1535, %v1547
    %v1575 = vadd.f32 %v1536, %v1547
    %v1576 = vadd.f32 %v1537, %v1547
    %v1577 = vadd.f32 %v1538, %v1547
    %v1578 = vadd.f32 %v1539, %v1547
    %v1579 = vadd.f32 %v1540, %v1547
    %v1580 = vadd.f32 %v1541, %v1547
    %v1581 = vmax.f32 %v1549, 0.0
    %v1582 = vmax.f32 %v1550, 0.0
    %v1583 = vmax.f32 %v1551, 0.0
    %v1584 = vmax.f32 %v1552, 0.0
    %v1585 = vmax.f32 %v1553, 0.0
    %v1586 = vmax.f32 %v1554, 0.0
    %v1587 = vmax.f32 %v1555, 0.0
    %v1588 = vmax.f32 %v1556, 0.0
    %v1589 = vmax.f32 %v1557, 0.0
    %v1590 = vmax.f32 %v1558, 0.0
    %v1591 = vmax.f32 %v1559, 0.0
    %v1592 = vmax.f32 %v1560, 0.0
    %v1593 = vmax.f32 %v1561, 0.0
    %v1594 = vmax.f32 %v1562, 0.0
    %v1595 = vmax.f32 %v1563, 0.0
    %v1596 = vmax.f32 %v1564, 0.0
    %v1597 = vmax.f32 %v1565, 0.0
    %v1598 = vmax.f32 %v1566, 0.0
    %v1599 = vmax.f32 %v1567, 0.0
    %v1600 = vmax.f32 %v1568, 0.0
    %v1601 = vmax.f32 %v1569, 0.0
    %v1602 = vmax.f32 %v1570, 0.0
    %v1603 = vmax.f32 %v1571, 0.0
    %v1604 = vmax.f32 %v1572, 0.0
    %v1605 = vmax.f32 %v1573, 0.0
    %v1606 = vmax.f32 %v1574, 0.0
    %v1607 = vmax.f32 %v1575, 0.0
    %v1608 = vmax.f32 %v1576, 0.0
    %v1609 = vmax.f32 %v1577, 0.0
    %v1610 = vmax.f32 %v1578, 0.0
    %v1611 = vmax.f32 %v1579, 0.0
    %v1612 = vmax.f32 %v1580, 0.0
    %1613 = vst [vmem:[#allocation2] sm:$0xff] %v1581
    %1614 = vst [vmem:[#allocation2 + $0x8] sm:$0xff] %v1582
    %1615 = vst [vmem:[#allocation2 + $0x10] sm:$0xff] %v1583
    %1616 = vst [vmem:[#allocation2 + $0x18] sm:$0xff] %v1584
    %1617 = vst [vmem:[#allocation2 + $0x20] sm:$0xff] %v1585
    %1618 = vst [vmem:[#allocation2 + $0x28] sm:$0xff] %v1586
    %1619 = vst [vmem:[#allocation2 + $0x30] sm:$0xff] %v1587
    %1620 = vst [vmem:[#allocation2 + $0x38] sm:$0xff] %v1588
    %1621 = vst [vmem:[#allocation2 + $0x40] sm:$0xff] %v1589
    %1622 = vst [vmem:[#allocation2 + $0x48] sm:$0xff] %v1590
    %1623 = vst [vmem:[#allocation2 + $0x50] sm:$0xff] %v1591
    %1624 = vst [vmem:[#allocation2 + $0x58] sm:$0xff] %v1592
    %1625 = vst [vmem:[#allocation2 + $0x60] sm:$0xff] %v1593
    %1626 = vst [vmem:[#allocation2 + $0x68] sm:$0xff] %v1594
    %1627 = vst [vmem:[#allocation2 + $0x70] sm:$0xff] %v1595
    %1628 = vst [vmem:[#allocation2 + $0x78] sm:$0xff] %v1596
    %1629 = vst [vmem:[#allocation2 + $0x80] sm:$0xff] %v1597
    %1630 = vst [vmem:[#allocation2 + $0x88] sm:$0xff] %v1598
    %1631 = vst [vmem:[#allocation2 + $0x90] sm:$0xff] %v1599
    %1632 = vst [vmem:[#allocation2 + $0x98] sm:$0xff] %v1600
    %1633 = vst [vmem:[#allocation2 + $0xa0] sm:$0xff] %v1601
    %1634 = vst [vmem:[#allocation2 + $0xa8] sm:$0xff] %v1602
    %1635 = vst [vmem:[#allocation2 + $0xb0] sm:$0xff] %v1603
    %1636 = vst [vmem:[#allocation2 + $0xb8] sm:$0xff] %v1604
    %1637 = vst [vmem:[#allocation2 + $0xc0] sm:$0xff] %v1605
    %1638 = vst [vmem:[#allocation2 + $0xc8] sm:$0xff] %v1606
    %1639 = vst [vmem:[#allocation2 + $0xd0] sm:$0xff] %v1607
    %1640 = vst [vmem:[#allocation2 + $0xd8] sm:$0xff] %v1608
    %1641 = vst [vmem:[#allocation2 + $0xe0] sm:$0xff] %v1609
    %1642 = vst [vmem:[#allocation2 + $0xe8] sm:$0xff] %v1610
    %1643 = vst [vmem:[#allocation2 + $0xf0] sm:$0xff] %v1611
    %1644 = vst [vmem:[#allocation2 + $0xf8] sm:$0xff] %v1612
    %v1645 = vld [vmem:[#allocation2] sm:$0xff]
    %v1646 = vld [vmem:[#allocation2 + $0x10] sm:$0xff]
    %v1647 = vld [vmem:[#allocation2 + $0x20] sm:$0xff]
    %v1648 = vld [vmem:[#allocation2 + $0x30] sm:$0xff]
    %v1649 = vld [vmem:[#allocation2 + $0x40] sm:$0xff]
    %v1650 = vld [vmem:[#allocation2 + $0x50] sm:$0xff]
    %v1651 = vld [vmem:[#allocation2 + $0x60] sm:$0xff]
    %v1652 = vld [vmem:[#allocation2 + $0x70] sm:$0xff]
    %v1653 = vld [vmem:[#allocation2 + $0x80] sm:$0xff]
    %v1654 = vld [vmem:[#allocation2 + $0x90] sm:$0xff]
    %v1655 = vld [vmem:[#allocation2 + $0xa0] sm:$0xff]
    %v1656 = vld [vmem:[#allocation2 + $0xb0] sm:$0xff]
    %v1657 = vld [vmem:[#allocation2 + $0xc0] sm:$0xff]
    %v1658 = vld [vmem:[#allocation2 + $0xd0] sm:$0xff]
    %v1659 = vld [vmem:[#allocation2 + $0xe0] sm:$0xff]
    %v1660 = vld [vmem:[#allocation2 + $0xf0] sm:$0xff]
    %v1661 = vld [vmem:[#allocation2 + $0x1] sm:$0xff]
    %v1662 = vld [vmem:[#allocation2 + $0x11] sm:$0xff]
    %v1663 = vld [vmem:[#allocation2 + $0x21] sm:$0xff]
    %v1664 = vld [vmem:[#allocation2 + $0x31] sm:$0xff]
    %v1665 = vld [vmem:[#allocation2 + $0x41] sm:$0xff]
    %v1666 = vld [vmem:[#allocation2 + $0x51] sm:$0xff]
    %v1667 = vld [vmem:[#allocation2 + $0x61] sm:$0xff]
    %v1668 = vld [vmem:[#allocation2 + $0x71] sm:$0xff]
    %v1669 = vld [vmem:[#allocation2 + $0x81] sm:$0xff]
    %v1670 = vld [vmem:[#allocation2 + $0x91] sm:$0xff]
    %v1671 = vld [vmem:[#allocation2 + $0xa1] sm:$0xff]
    %v1672 = vld [vmem:[#allocation2 + $0xb1] sm:$0xff]
    %v1673 = vld [vmem:[#allocation2 + $0xc1] sm:$0xff]
    %v1674 = vld [vmem:[#allocation2 + $0xd1] sm:$0xff]
    %v1675 = vld [vmem:[#allocation2 + $0xe1] sm:$0xff]
    %v1676 = vld [vmem:[#allocation2 + $0xf1] sm:$0xff]
    %v1677 = vld [vmem:[#allocation2 + $0x2] sm:$0xff]
    %v1678 = vld [vmem:[#allocation2 + $0x12] sm:$0xff]
    %v1679 = vld [vmem:[#allocation2 + $0x22] sm:$0xff]
    %v1680 = vld [vmem:[#allocation2 + $0x32] sm:$0xff]
    %v1681 = vld [vmem:[#allocation2 + $0x42] sm:$0xff]
    %v1682 = vld [vmem:[#allocation2 + $0x52] sm:$0xff]
    %v1683 = vld [vmem:[#allocation2 + $0x62] sm:$0xff]
    %v1684 = vld [vmem:[#allocation2 + $0x72] sm:$0xff]
    %v1685 = vld [vmem:[#allocation2 + $0x82] sm:$0xff]
    %v1686 = vld [vmem:[#allocation2 + $0x92] sm:$0xff]
    %v1687 = vld [vmem:[#allocation2 + $0xa2] sm:$0xff]
    %v1688 = vld [vmem:[#allocation2 + $0xb2] sm:$0xff]
    %v1689 = vld [vmem:[#allocation2 + $0xc2] sm:$0xff]
    %v1690 = vld [vmem:[#allocation2 + $0xd2] sm:$0xff]
    %v1691 = vld [vmem:[#allocation2 + $0xe2] sm:$0xff]
    %v1692 = vld [vmem:[#allocation2 + $0xf2] sm:$0xff]
    %v1693 = vld [vmem:[#allocation2 + $0x3] sm:$0xff]
    %v1694 = vld [vmem:[#allocation2 + $0x13] sm:$0xff]
    %v1695 = vld [vmem:[#allocation2 + $0x23] sm:$0xff]
    %v1696 = vld [vmem:[#allocation2 + $0x33] sm:$0xff]
    %v1697 = vld [vmem:[#allocation2 + $0x43] sm:$0xff]
    %v1698 = vld [vmem:[#allocation2 + $0x53] sm:$0xff]
    %v1699 = vld [vmem:[#allocation2 + $0x63] sm:$0xff]
    %v1700 = vld [vmem:[#allocation2 + $0x73] sm:$0xff]
    %v1701 = vld [vmem:[#allocation2 + $0x83] sm:$0xff]
    %v1702 = vld [vmem:[#allocation2 + $0x93] sm:$0xff]
    %v1703 = vld [vmem:[#allocation2 + $0xa3] sm:$0xff]
    %v1704 = vld [vmem:[#allocation2 + $0xb3] sm:$0xff]
    %v1705 = vld [vmem:[#allocation2 + $0xc3] sm:$0xff]
    %v1706 = vld [vmem:[#allocation2 + $0xd3] sm:$0xff]
    %v1707 = vld [vmem:[#allocation2 + $0xe3] sm:$0xff]
    %v1708 = vld [vmem:[#allocation2 + $0xf3] sm:$0xff]
    %v1709 = vld [vmem:[#allocation2 + $0x4] sm:$0xff]
    %v1710 = vld [vmem:[#allocation2 + $0x14] sm:$0xff]
    %v1711 = vld [vmem:[#allocation2 + $0x24] sm:$0xff]
    %v1712 = vld [vmem:[#allocation2 + $0x34] sm:$0xff]
    %v1713 = vld [vmem:[#allocation2 + $0x44] sm:$0xff]
    %v1714 = vld [vmem:[#allocation2 + $0x54] sm:$0xff]
    %v1715 = vld [vmem:[#allocation2 + $0x64] sm:$0xff]
    %v1716 = vld [vmem:[#allocation2 + $0x74] sm:$0xff]
    %v1717 = vld [vmem:[#allocation2 + $0x84] sm:$0xff]
    %v1718 = vld [vmem:[#allocation2 + $0x94] sm:$0xff]
    %v1719 = vld [vmem:[#allocation2 + $0xa4] sm:$0xff]
    %v1720 = vld [vmem:[#allocation2 + $0xb4] sm:$0xff]
    %v1721 = vld [vmem:[#allocation2 + $0xc4] sm:$0xff]
    %v1722 = vld [vmem:[#allocation2 + $0xd4] sm:$0xff]
    %v1723 = vld [vmem:[#allocation2 + $0xe4] sm:$0xff]
    %v1724 = vld [vmem:[#allocation2 + $0xf4] sm:$0xff]
    %v1725 = vpack.c.bf16 %v1646, %v1645
    %v1726 = vpack.c.bf16 %v1662, %v1661
    %v1727 = vpack.c.bf16 %v1678, %v1677
    %v1728 = vpack.c.bf16 %v1694, %v1693
    %v1729 = vpack.c.bf16 %v1710, %v1709
    %v1730 = vpack.c.bf16 %v1648, %v1647
    %v1731 = vpack.c.bf16 %v1664, %v1663
    %v1732 = vpack.c.bf16 %v1680, %v1679
    %v1733 = vpack.c.bf16 %v1696, %v1695
    %v1734 = vpack.c.bf16 %v1712, %v1711
    %v1735 = vpack.c.bf16 %v1650, %v1649
    %v1736 = vpack.c.bf16 %v1666, %v1665
    %v1737 = vpack.c.bf16 %v1682, %v1681
    %v1738 = vpack.c.bf16 %v1698, %v1697
    %v1739 = vpack.c.bf16 %v1714, %v1713
    %v1740 = vpack.c.bf16 %v1652, %v1651
    %v1741 = vpack.c.bf16 %v1668, %v1667
    %v1742 = vpack.c.bf16 %v1684, %v1683
    %v1743 = vpack.c.bf16 %v1700, %v1699
    %v1744 = vpack.c.bf16 %v1716, %v1715
    %v1745 = vpack.c.bf16 %v1654, %v1653
    %v1746 = vpack.c.bf16 %v1670, %v1669
    %v1747 = vpack.c.bf16 %v1686, %v1685
    %v1748 = vpack.c.bf16 %v1702, %v1701
    %v1749 = vpack.c.bf16 %v1718, %v1717
    %v1750 = vpack.c.bf16 %v1656, %v1655
    %v1751 = vpack.c.bf16 %v1672, %v1671
    %v1752 = vpack.c.bf16 %v1688, %v1687
    %v1753 = vpack.c.bf16 %v1704, %v1703
    %v1754 = vpack.c.bf16 %v1720, %v1719
    %v1755 = vpack.c.bf16 %v1658, %v1657
    %v1756 = vpack.c.bf16 %v1674, %v1673
    %v1757 = vpack.c.bf16 %v1690, %v1689
    %v1758 = vpack.c.bf16 %v1706, %v1705
    %v1759 = vpack.c.bf16 %v1722, %v1721
    %v1760 = vpack.c.bf16 %v1660, %v1659
    %v1761 = vpack.c.bf16 %v1676, %v1675
    %v1762 = vpack.c.bf16 %v1692, %v1691
    %v1763 = vpack.c.bf16 %v1708, %v1707
    %v1764 = vpack.c.bf16 %v1724, %v1723
    %v1765 = vld [vmem:[%s4] sm:$0xff]
    %v1766 = vld [vmem:[%s4 + $0x8] sm:$0xff]
    %v1767 = vld [vmem:[%s4 + $0x10] sm:$0xff]
    %v1768 = vld [vmem:[%s4 + $0x18] sm:$0xff]
    %v1769 = vld [vmem:[%s4 + $0x20] sm:$0xff]
    %v1770 = vld [vmem:[%s4 + $0x28] sm:$0xff]
    %v1771 = vld [vmem:[%s4 + $0x30] sm:$0xff]
    %v1772 = vld [vmem:[%s4 + $0x38] sm:$0xff]
    %v1773 = vld [vmem:[%s4 + $0x40] sm:$0xff]
    %v1774 = vld [vmem:[%s4 + $0x48] sm:$0xff]
    %v1775 = vld [vmem:[%s4 + $0x50] sm:$0xff]
    %v1776 = vld [vmem:[%s4 + $0x58] sm:$0xff]
    %v1777 = vld [vmem:[%s4 + $0x60] sm:$0xff]
    %v1778 = vld [vmem:[%s4 + $0x68] sm:$0xff]
    %v1779 = vld [vmem:[%s4 + $0x70] sm:$0xff]
    %v1780 = vld [vmem:[%s4 + $0x78] sm:$0xff]
    %v1781 = vld [vmem:[%s4 + $0x80] sm:$0xff]
    %v1782 = vld [vmem:[%s4 + $0x88] sm:$0xff]
    %v1783 = vld [vmem:[%s4 + $0x90] sm:$0xff]
    %v1784 = vld [vmem:[%s4 + $0x98] sm:$0xff]
    %v1785 = vld [vmem:[%s4 + $0xa0] sm:$0xff]
    %v1786 = vld [vmem:[%s4 + $0xa8] sm:$0xff]
    %v1787 = vld [vmem:[%s4 + $0xb0] sm:$0xff]
    %v1788 = vld [vmem:[%s4 + $0xb8] sm:$0xff]
    %v1789 = vld [vmem:[%s4 + $0xc0] sm:$0xff]
    %v1790 = vld [vmem:[%s4 + $0xc8] sm:$0xff]
    %v1791 = vld [vmem:[%s4 + $0xd0] sm:$0xff]
    %v1792 = vld [vmem:[%s4 + $0xd8] sm:$0xff]
    %v1793 = vld [vmem:[%s4 + $0xe0] sm:$0xff]
    %v1794 = vld [vmem:[%s4 + $0xe8] sm:$0xff]
    %v1795 = vld [vmem:[%s4 + $0xf0] sm:$0xff]
    %v1796 = vld [vmem:[%s4 + $0xf8] sm:$0xff]
    %v1797 = vld [vmem:[%s4 + $0x100] sm:$0xff]
    %v1798 = vld [vmem:[%s4 + $0x108] sm:$0xff]
    %v1799 = vld [vmem:[%s4 + $0x110] sm:$0xff]
    %v1800 = vld [vmem:[%s4 + $0x118] sm:$0xff]
    %v1801 = vld [vmem:[%s4 + $0x120] sm:$0xff]
    %v1802 = vld [vmem:[%s4 + $0x128] sm:$0xff]
    %v1803 = vld [vmem:[%s4 + $0x130] sm:$0xff]
    %v1804 = vld [vmem:[%s4 + $0x138] sm:$0xff]
    %v1805 = vld [vmem:[%s4 + $0x140] sm:$0xff]
    %v1806 = vld [vmem:[%s4 + $0x148] sm:$0xff]
    %v1807 = vld [vmem:[%s4 + $0x150] sm:$0xff]
    %v1808 = vld [vmem:[%s4 + $0x158] sm:$0xff]
    %v1809 = vld [vmem:[%s4 + $0x160] sm:$0xff]
    %v1810 = vld [vmem:[%s4 + $0x168] sm:$0xff]
    %v1811 = vld [vmem:[%s4 + $0x170] sm:$0xff]
    %v1812 = vld [vmem:[%s4 + $0x178] sm:$0xff]
    %v1813 = vld [vmem:[%s4 + $0x180] sm:$0xff]
    %v1814 = vld [vmem:[%s4 + $0x188] sm:$0xff]
    %v1815 = vld [vmem:[%s4 + $0x190] sm:$0xff]
    %v1816 = vld [vmem:[%s4 + $0x198] sm:$0xff]
    %v1817 = vld [vmem:[%s4 + $0x1a0] sm:$0xff]
    %v1818 = vld [vmem:[%s4 + $0x1a8] sm:$0xff]
    %v1819 = vld [vmem:[%s4 + $0x1b0] sm:$0xff]
    %v1820 = vld [vmem:[%s4 + $0x1b8] sm:$0xff]
    %v1821 = vld [vmem:[%s4 + $0x1c0] sm:$0xff]
    %v1822 = vld [vmem:[%s4 + $0x1c8] sm:$0xff]
    %v1823 = vld [vmem:[%s4 + $0x1d0] sm:$0xff]
    %v1824 = vld [vmem:[%s4 + $0x1d8] sm:$0xff]
    %v1825 = vld [vmem:[%s4 + $0x1e0] sm:$0xff]
    %v1826 = vld [vmem:[%s4 + $0x1e8] sm:$0xff]
    %v1827 = vld [vmem:[%s4 + $0x1f0] sm:$0xff]
    %v1828 = vld [vmem:[%s4 + $0x1f8] sm:$0xff]
    %v1829 = vld [vmem:[%s4 + $0x200] sm:$0xff]
    %v1830 = vld [vmem:[%s4 + $0x208] sm:$0xff]
    %v1831 = vld [vmem:[%s4 + $0x210] sm:$0xff]
    %v1832 = vld [vmem:[%s4 + $0x218] sm:$0xff]
    %v1833 = vld [vmem:[%s4 + $0x220] sm:$0xff]
    %v1834 = vld [vmem:[%s4 + $0x228] sm:$0xff]
    %v1835 = vld [vmem:[%s4 + $0x230] sm:$0xff]
    %v1836 = vld [vmem:[%s4 + $0x238] sm:$0xff]
    %v1837 = vld [vmem:[%s4 + $0x240] sm:$0xff]
    %v1838 = vld [vmem:[%s4 + $0x248] sm:$0xff]
    %v1839 = vld [vmem:[%s4 + $0x250] sm:$0xff]
    %v1840 = vld [vmem:[%s4 + $0x258] sm:$0xff]
    %v1841 = vld [vmem:[%s4 + $0x260] sm:$0xff]
    %v1842 = vld [vmem:[%s4 + $0x268] sm:$0xff]
    %v1843 = vld [vmem:[%s4 + $0x270] sm:$0xff]
    %v1844 = vld [vmem:[%s4 + $0x278] sm:$0xff]
    %v1925 = vunpack.c.l.b16 %v1765
    %v1926 = vunpack.c.h.b16 %v1765
    %v1927 = vunpack.c.l.b16 %v1766
    %v1928 = vunpack.c.h.b16 %v1766
    %v1929 = vunpack.c.l.b16 %v1767
    %v1930 = vunpack.c.h.b16 %v1767
    %v1931 = vunpack.c.l.b16 %v1768
    %v1932 = vunpack.c.h.b16 %v1768
    %v1933 = vunpack.c.l.b16 %v1769
    %v1934 = vunpack.c.h.b16 %v1769
    %v1935 = vunpack.c.l.b16 %v1770
    %v1936 = vunpack.c.h.b16 %v1770
    %v1937 = vunpack.c.l.b16 %v1771
    %v1938 = vunpack.c.h.b16 %v1771
    %v1939 = vunpack.c.l.b16 %v1772
    %v1940 = vunpack.c.h.b16 %v1772
    %v1941 = vunpack.c.l.b16 %v1773
    %v1942 = vunpack.c.h.b16 %v1773
    %v1943 = vunpack.c.l.b16 %v1774
    %v1944 = vunpack.c.h.b16 %v1774
    %v1945 = vunpack.c.l.b16 %v1775
    %v1946 = vunpack.c.h.b16 %v1775
    %v1947 = vunpack.c.l.b16 %v1776
    %v1948 = vunpack.c.h.b16 %v1776
    %v1949 = vunpack.c.l.b16 %v1777
    %v1950 = vunpack.c.h.b16 %v1777
    %v1951 = vunpack.c.l.b16 %v1778
    %v1952 = vunpack.c.h.b16 %v1778
    %v1953 = vunpack.c.l.b16 %v1779
    %v1954 = vunpack.c.h.b16 %v1779
    %v1955 = vunpack.c.l.b16 %v1780
    %v1956 = vunpack.c.h.b16 %v1780
    %v1957 = vunpack.c.l.b16 %v1781
    %v1958 = vunpack.c.h.b16 %v1781
    %v1959 = vunpack.c.l.b16 %v1782
    %v1960 = vunpack.c.h.b16 %v1782
    %v1961 = vunpack.c.l.b16 %v1783
    %v1962 = vunpack.c.h.b16 %v1783
    %v1963 = vunpack.c.l.b16 %v1784
    %v1964 = vunpack.c.h.b16 %v1784
    %v1965 = vunpack.c.l.b16 %v1785
    %v1966 = vunpack.c.h.b16 %v1785
    %v1967 = vunpack.c.l.b16 %v1786
    %v1968 = vunpack.c.h.b16 %v1786
    %v1969 = vunpack.c.l.b16 %v1787
    %v1970 = vunpack.c.h.b16 %v1787
    %v1971 = vunpack.c.l.b16 %v1788
    %v1972 = vunpack.c.h.b16 %v1788
    %v1973 = vunpack.c.l.b16 %v1789
    %v1974 = vunpack.c.h.b16 %v1789
    %v1975 = vunpack.c.l.b16 %v1790
    %v1976 = vunpack.c.h.b16 %v1790
    %v1977 = vunpack.c.l.b16 %v1791
    %v1978 = vunpack.c.h.b16 %v1791
    %v1979 = vunpack.c.l.b16 %v1792
    %v1980 = vunpack.c.h.b16 %v1792
    %v1981 = vunpack.c.l.b16 %v1793
    %v1982 = vunpack.c.h.b16 %v1793
    %v1983 = vunpack.c.l.b16 %v1794
    %v1984 = vunpack.c.h.b16 %v1794
    %v1985 = vunpack.c.l.b16 %v1795
    %v1986 = vunpack.c.h.b16 %v1795
    %v1987 = vunpack.c.l.b16 %v1796
    %v1988 = vunpack.c.h.b16 %v1796
    %v1989 = vunpack.c.l.b16 %v1797
    %v1990 = vunpack.c.h.b16 %v1797
    %v1991 = vunpack.c.l.b16 %v1798
    %v1992 = vunpack.c.h.b16 %v1798
    %v1993 = vunpack.c.l.b16 %v1799
    %v1994 = vunpack.c.h.b16 %v1799
    %v1995 = vunpack.c.l.b16 %v1800
    %v1996 = vunpack.c.h.b16 %v1800
    %v1997 = vunpack.c.l.b16 %v1801
    %v1998 = vunpack.c.h.b16 %v1801
    %v1999 = vunpack.c.l.b16 %v1802
    %v2000 = vunpack.c.h.b16 %v1802
    %v2001 = vunpack.c.l.b16 %v1803
    %v2002 = vunpack.c.h.b16 %v1803
    %v2003 = vunpack.c.l.b16 %v1804
    %v2004 = vunpack.c.h.b16 %v1804
    %v2005 = vunpack.c.l.b16 %v1805
    %v2006 = vunpack.c.h.b16 %v1805
    %v2007 = vunpack.c.l.b16 %v1806
    %v2008 = vunpack.c.h.b16 %v1806
    %v2009 = vunpack.c.l.b16 %v1807
    %v2010 = vunpack.c.h.b16 %v1807
    %v2011 = vunpack.c.l.b16 %v1808
    %v2012 = vunpack.c.h.b16 %v1808
    %v2013 = vunpack.c.l.b16 %v1809
    %v2014 = vunpack.c.h.b16 %v1809
    %v2015 = vunpack.c.l.b16 %v1810
    %v2016 = vunpack.c.h.b16 %v1810
    %v2017 = vunpack.c.l.b16 %v1811
    %v2018 = vunpack.c.h.b16 %v1811
    %v2019 = vunpack.c.l.b16 %v1812
    %v2020 = vunpack.c.h.b16 %v1812
    %v2021 = vunpack.c.l.b16 %v1813
    %v2022 = vunpack.c.h.b16 %v1813
    %v2023 = vunpack.c.l.b16 %v1814
    %v2024 = vunpack.c.h.b16 %v1814
    %v2025 = vunpack.c.l.b16 %v1815
    %v2026 = vunpack.c.h.b16 %v1815
    %v2027 = vunpack.c.l.b16 %v1816
    %v2028 = vunpack.c.h.b16 %v1816
    %v2029 = vunpack.c.l.b16 %v1817
    %v2030 = vunpack.c.h.b16 %v1817
    %v2031 = vunpack.c.l.b16 %v1818
    %v2032 = vunpack.c.h.b16 %v1818
    %v2033 = vunpack.c.l.b16 %v1819
    %v2034 = vunpack.c.h.b16 %v1819
    %v2035 = vunpack.c.l.b16 %v1820
    %v2036 = vunpack.c.h.b16 %v1820
    %v2037 = vunpack.c.l.b16 %v1821
    %v2038 = vunpack.c.h.b16 %v1821
    %v2039 = vunpack.c.l.b16 %v1822
    %v2040 = vunpack.c.h.b16 %v1822
    %v2041 = vunpack.c.l.b16 %v1823
    %v2042 = vunpack.c.h.b16 %v1823
    %v2043 = vunpack.c.l.b16 %v1824
    %v2044 = vunpack.c.h.b16 %v1824
    %v2045 = vunpack.c.l.b16 %v1825
    %v2046 = vunpack.c.h.b16 %v1825
    %v2047 = vunpack.c.l.b16 %v1826
    %v2048 = vunpack.c.h.b16 %v1826
    %v2049 = vunpack.c.l.b16 %v1827
    %v2050 = vunpack.c.h.b16 %v1827
    %v2051 = vunpack.c.l.b16 %v1828
    %v2052 = vunpack.c.h.b16 %v1828
    %v2053 = vunpack.c.l.b16 %v1829
    %v2054 = vunpack.c.h.b16 %v1829
    %v2055 = vunpack.c.l.b16 %v1830
    %v2056 = vunpack.c.h.b16 %v1830
    %v2057 = vunpack.c.l.b16 %v1831
    %v2058 = vunpack.c.h.b16 %v1831
    %v2059 = vunpack.c.l.b16 %v1832
    %v2060 = vunpack.c.h.b16 %v1832
    %v2061 = vunpack.c.l.b16 %v1833
    %v2062 = vunpack.c.h.b16 %v1833
    %v2063 = vunpack.c.l.b16 %v1834
    %v2064 = vunpack.c.h.b16 %v1834
    %v2065 = vunpack.c.l.b16 %v1835
    %v2066 = vunpack.c.h.b16 %v1835
    %v2067 = vunpack.c.l.b16 %v1836
    %v2068 = vunpack.c.h.b16 %v1836
    %v2069 = vunpack.c.l.b16 %v1837
    %v2070 = vunpack.c.h.b16 %v1837
    %v2071 = vunpack.c.l.b16 %v1838
    %v2072 = vunpack.c.h.b16 %v1838
    %v2073 = vunpack.c.l.b16 %v1839
    %v2074 = vunpack.c.h.b16 %v1839
    %v2075 = vunpack.c.l.b16 %v1840
    %v2076 = vunpack.c.h.b16 %v1840
    %v2077 = vunpack.c.l.b16 %v1841
    %v2078 = vunpack.c.h.b16 %v1841
    %v2079 = vunpack.c.l.b16 %v1842
    %v2080 = vunpack.c.h.b16 %v1842
    %v2081 = vunpack.c.l.b16 %v1843
    %v2082 = vunpack.c.h.b16 %v1843
    %v2083 = vunpack.c.l.b16 %v1844
    %v2084 = vunpack.c.h.b16 %v1844
    %v2085 = vpack.c.b16 %v1927, %v1925
    %v2086 = vpack.c.b16 %v1928, %v1926
    %v2087 = vpack.c.b16 %v1931, %v1929
    %v2088 = vpack.c.b16 %v1932, %v1930
    %v2089 = vpack.c.b16 %v1935, %v1933
    %v2090 = vpack.c.b16 %v1936, %v1934
    %v2091 = vpack.c.b16 %v1939, %v1937
    %v2092 = vpack.c.b16 %v1940, %v1938
    %v2093 = vpack.c.b16 %v1943, %v1941
    %v2094 = vpack.c.b16 %v1944, %v1942
    %v2095 = vpack.c.b16 %v1947, %v1945
    %v2096 = vpack.c.b16 %v1948, %v1946
    %v2097 = vpack.c.b16 %v1951, %v1949
    %v2098 = vpack.c.b16 %v1952, %v1950
    %v2099 = vpack.c.b16 %v1955, %v1953
    %v2100 = vpack.c.b16 %v1956, %v1954
    %v2101 = vpack.c.b16 %v1959, %v1957
    %v2102 = vpack.c.b16 %v1960, %v1958
    %v2103 = vpack.c.b16 %v1963, %v1961
    %v2104 = vpack.c.b16 %v1964, %v1962
    %v2105 = vpack.c.b16 %v1967, %v1965
    %v2106 = vpack.c.b16 %v1968, %v1966
    %v2107 = vpack.c.b16 %v1971, %v1969
    %v2108 = vpack.c.b16 %v1972, %v1970
    %v2109 = vpack.c.b16 %v1975, %v1973
    %v2110 = vpack.c.b16 %v1976, %v1974
    %v2111 = vpack.c.b16 %v1979, %v1977
    %v2112 = vpack.c.b16 %v1980, %v1978
    %v2113 = vpack.c.b16 %v1983, %v1981
    %v2114 = vpack.c.b16 %v1984, %v1982
    %v2115 = vpack.c.b16 %v1987, %v1985
    %v2116 = vpack.c.b16 %v1988, %v1986
    %v2117 = vpack.c.b16 %v1991, %v1989
    %v2118 = vpack.c.b16 %v1992, %v1990
    %v2119 = vpack.c.b16 %v1995, %v1993
    %v2120 = vpack.c.b16 %v1996, %v1994
    %v2121 = vpack.c.b16 %v1999, %v1997
    %v2122 = vpack.c.b16 %v2000, %v1998
    %v2123 = vpack.c.b16 %v2003, %v2001
    %v2124 = vpack.c.b16 %v2004, %v2002
    %v2125 = vpack.c.b16 %v2007, %v2005
    %v2126 = vpack.c.b16 %v2008, %v2006
    %v2127 = vpack.c.b16 %v2011, %v2009
    %v2128 = vpack.c.b16 %v2012, %v2010
    %v2129 = vpack.c.b16 %v2015, %v2013
    %v2130 = vpack.c.b16 %v2016, %v2014
    %v2131 = vpack.c.b16 %v2019, %v2017
    %v2132 = vpack.c.b16 %v2020, %v2018
    %v2133 = vpack.c.b16 %v2023, %v2021
    %v2134 = vpack.c.b16 %v2024, %v2022
    %v2135 = vpack.c.b16 %v2027, %v2025
    %v2136 = vpack.c.b16 %v2028, %v2026
    %v2137 = vpack.c.b16 %v2031, %v2029
    %v2138 = vpack.c.b16 %v2032, %v2030
    %v2139 = vpack.c.b16 %v2035, %v2033
    %v2140 = vpack.c.b16 %v2036, %v2034
    %v2141 = vpack.c.b16 %v2039, %v2037
    %v2142 = vpack.c.b16 %v2040, %v2038
    %v2143 = vpack.c.b16 %v2043, %v2041
    %v2144 = vpack.c.b16 %v2044, %v2042
    %v2145 = vpack.c.b16 %v2047, %v2045
    %v2146 = vpack.c.b16 %v2048, %v2046
    %v2147 = vpack.c.b16 %v2051, %v2049
    %v2148 = vpack.c.b16 %v2052, %v2050
    %v2149 = vpack.c.b16 %v2055, %v2053
    %v2150 = vpack.c.b16 %v2056, %v2054
    %v2151 = vpack.c.b16 %v2059, %v2057
    %v2152 = vpack.c.b16 %v2060, %v2058
    %v2153 = vpack.c.b16 %v2063, %v2061
    %v2154 = vpack.c.b16 %v2064, %v2062
    %v2155 = vpack.c.b16 %v2067, %v2065
    %v2156 = vpack.c.b16 %v2068, %v2066
    %v2157 = vpack.c.b16 %v2071, %v2069
    %v2158 = vpack.c.b16 %v2072, %v2070
    %v2159 = vpack.c.b16 %v2075, %v2073
    %v2160 = vpack.c.b16 %v2076, %v2074
    %v2161 = vpack.c.b16 %v2079, %v2077
    %v2162 = vpack.c.b16 %v2080, %v2078
    %v2163 = vpack.c.b16 %v2083, %v2081
    %v2164 = vpack.c.b16 %v2084, %v2082
    %2245 = vmatprep.subr.bf16.mxu0 %v2086
    %2246 = vmatpush1.bf16.msra.mxu0 %v2085
    %2247 = vmatprep.subr.bf16.mxu0 %v2088
    %2248 = vmatpush1.bf16.msra.mxu0 %v2087
    %2249 = vmatprep.subr.bf16.mxu0 %v2090
    %2250 = vmatpush1.bf16.msra.mxu0 %v2089
    %2251 = vmatprep.subr.bf16.mxu0 %v2092
    %2252 = vmatpush1.bf16.msra.mxu0 %v2091
    %2253 = vmatprep.subr.bf16.mxu0 %v2094
    %2254 = vmatpush1.bf16.msra.mxu0 %v2093
    %2255 = vmatprep.subr.bf16.mxu0 %v2096
    %2256 = vmatpush1.bf16.msra.mxu0 %v2095
    %2257 = vmatprep.subr.bf16.mxu0 %v2098
    %2258 = vmatpush1.bf16.msra.mxu0 %v2097
    %2259 = vmatprep.subr.bf16.mxu0 %v2100
    %2260 = vmatpush1.bf16.msra.mxu0 %v2099
    %2261 = vmatprep.subr.bf16.mxu0 %v2102
    %2262 = vmatpush1.bf16.msra.mxu0 %v2101
    %2263 = vmatprep.subr.bf16.mxu0 %v2104
    %2264 = vmatpush1.bf16.msra.mxu0 %v2103
    %2265 = vmatprep.subr.bf16.mxu0 %v2106
    %2266 = vmatpush1.bf16.msra.mxu0 %v2105
    %2267 = vmatprep.subr.bf16.mxu0 %v2108
    %2268 = vmatpush1.bf16.msra.mxu0 %v2107
    %2269 = vmatprep.subr.bf16.mxu0 %v2110
    %2270 = vmatpush1.bf16.msra.mxu0 %v2109
    %2271 = vmatprep.subr.bf16.mxu0 %v2112
    %2272 = vmatpush1.bf16.msra.mxu0 %v2111
    %2273 = vmatprep.subr.bf16.mxu0 %v2114
    %2274 = vmatpush1.bf16.msra.mxu0 %v2113
    %2275 = vmatprep.subr.bf16.mxu0 %v2116
    %2276 = vmatpush1.bf16.msra.mxu0 %v2115
    %2277 = vmatprep.mubr.bf16.mxu0 %v1726
    %2278 = vmatmul.mubr.bf16.gmra.mrb[0].mxu0 %v1725
    %v2279 = vpop.f32.mrb[0].mxu0
    %v2280 = vadd.f32 0.0, %v2279
    %v2281 = vpop.f32.mrb[0].mxu0
    %v2282 = vadd.f32 0.0, %v2281
    %v2283 = vpop.f32.mrb[0].mxu0
    %v2284 = vadd.f32 0.0, %v2283
    %v2285 = vpop.f32.mrb[0].mxu0
    %v2286 = vadd.f32 0.0, %v2285
    %2287 = vmatprep.mubr.bf16.mxu0 %v1731
    %2288 = vmatmul.mubr.bf16.gmra.mrb[0].mxu0 %v1730
    %v2289 = vpop.f32.mrb[0].mxu0
    %v2290 = vadd.f32 0.0, %v2289
    %v2291 = vpop.f32.mrb[0].mxu0
    %v2292 = vadd.f32 0.0, %v2291
    %v2293 = vpop.f32.mrb[0].mxu0
    %v2294 = vadd.f32 0.0, %v2293
    %v2295 = vpop.f32.mrb[0].mxu0
    %v2296 = vadd.f32 0.0, %v2295
    %2297 = vmatprep.mubr.bf16.mxu0 %v1736
    %2298 = vmatmul.mubr.bf16.gmra.mrb[0].mxu0 %v1735
    %v2299 = vpop.f32.mrb[0].mxu0
    %v2300 = vadd.f32 0.0, %v2299
    %v2301 = vpop.f32.mrb[0].mxu0
    %v2302 = vadd.f32 0.0, %v2301
    %v2303 = vpop.f32.mrb[0].mxu0
    %v2304 = vadd.f32 0.0, %v2303
    %v2305 = vpop.f32.mrb[0].mxu0
    %v2306 = vadd.f32 0.0, %v2305
    %2307 = vmatprep.mubr.bf16.mxu0 %v1741
    %2308 = vmatmul.mubr.bf16.gmra.mrb[0].mxu0 %v1740
    %v2309 = vpop.f32.mrb[0].mxu0
    %v2310 = vadd.f32 0.0, %v2309
    %v2311 = vpop.f32.mrb[0].mxu0
    %v2312 = vadd.f32 0.0, %v2311
    %v2313 = vpop.f32.mrb[0].mxu0
    %v2314 = vadd.f32 0.0, %v2313
    %v2315 = vpop.f32.mrb[0].mxu0
    %v2316 = vadd.f32 0.0, %v2315
    %2317 = vmatprep.mubr.bf16.mxu0 %v1746
    %2318 = vmatmul.mubr.bf16.gmra.mrb[0].mxu0 %v1745
    %v2319 = vpop.f32.mrb[0].mxu0
    %v2320 = vadd.f32 0.0, %v2319
    %v2321 = vpop.f32.mrb[0].mxu0
    %v2322 = vadd.f32 0.0, %v2321
    %v2323 = vpop.f32.mrb[0].mxu0
    %v2324 = vadd.f32 0.0, %v2323
    %v2325 = vpop.f32.mrb[0].mxu0
    %v2326 = vadd.f32 0.0, %v2325
    %2327 = vmatprep.mubr.bf16.mxu0 %v1751
    %2328 = vmatmul.mubr.bf16.gmra.mrb[0].mxu0 %v1750
    %v2329 = vpop.f32.mrb[0].mxu0
    %v2330 = vadd.f32 0.0, %v2329
    %v2331 = vpop.f32.mrb[0].mxu0
    %v2332 = vadd.f32 0.0, %v2331
    %v2333 = vpop.f32.mrb[0].mxu0
    %v2334 = vadd.f32 0.0, %v2333
    %v2335 = vpop.f32.mrb[0].mxu0
    %v2336 = vadd.f32 0.0, %v2335
    %2337 = vmatprep.mubr.bf16.mxu0 %v1756
    %2338 = vmatmul.mubr.bf16.gmra.mrb[0].mxu0 %v1755
    %v2339 = vpop.f32.mrb[0].mxu0
    %v2340 = vadd.f32 0.0, %v2339
    %v2341 = vpop.f32.mrb[0].mxu0
    %v2342 = vadd.f32 0.0, %v2341
    %v2343 = vpop.f32.mrb[0].mxu0
    %v2344 = vadd.f32 0.0, %v2343
    %v2345 = vpop.f32.mrb[0].mxu0
    %v2346 = vadd.f32 0.0, %v2345
    %2347 = vmatprep.mubr.bf16.mxu0 %v1761
    %2348 = vmatmul.mubr.bf16.gmra.mrb[0].mxu0 %v1760
    %v2349 = vpop.f32.mrb[0].mxu0
    %v2350 = vadd.f32 0.0, %v2349
    %v2351 = vpop.f32.mrb[0].mxu0
    %v2352 = vadd.f32 0.0, %v2351
    %v2353 = vpop.f32.mrb[0].mxu0
    %v2354 = vadd.f32 0.0, %v2353
    %v2355 = vpop.f32.mrb[0].mxu0
    %v2356 = vadd.f32 0.0, %v2355
    %2357 = vdwg.mxu0
    %2358 = vmatprep.subr.bf16.mxu0 %v2118
    %2359 = vmatpush1.bf16.msra.mxu0 %v2117
    %2360 = vmatprep.subr.bf16.mxu0 %v2120
    %2361 = vmatpush1.bf16.msra.mxu0 %v2119
    %2362 = vmatprep.subr.bf16.mxu0 %v2122
    %2363 = vmatpush1.bf16.msra.mxu0 %v2121
    %2364 = vmatprep.subr.bf16.mxu0 %v2124
    %2365 = vmatpush1.bf16.msra.mxu0 %v2123
    %2366 = vmatprep.subr.bf16.mxu0 %v2126
    %2367 = vmatpush1.bf16.msra.mxu0 %v2125
    %2368 = vmatprep.subr.bf16.mxu0 %v2128
    %2369 = vmatpush1.bf16.msra.mxu0 %v2127
    %2370 = vmatprep.subr.bf16.mxu0 %v2130
    %2371 = vmatpush1.bf16.msra.mxu0 %v2129
    %2372 = vmatprep.subr.bf16.mxu0 %v2132
    %2373 = vmatpush1.bf16.msra.mxu0 %v2131
    %2374 = vmatprep.subr.bf16.mxu0 %v2134
    %2375 = vmatpush1.bf16.msra.mxu0 %v2133
    %2376 = vmatprep.subr.bf16.mxu0 %v2136
    %2377 = vmatpush1.bf16.msra.mxu0 %v2135
    %2378 = vmatprep.subr.bf16.mxu0 %v2138
    %2379 = vmatpush1.bf16.msra.mxu0 %v2137
    %2380 = vmatprep.subr.bf16.mxu0 %v2140
    %2381 = vmatpush1.bf16.msra.mxu0 %v2139
    %2382 = vmatprep.subr.bf16.mxu0 %v2142
    %2383 = vmatpush1.bf16.msra.mxu0 %v2141
    %2384 = vmatprep.subr.bf16.mxu0 %v2144
    %2385 = vmatpush1.bf16.msra.mxu0 %v2143
    %2386 = vmatprep.subr.bf16.mxu0 %v2146
    %2387 = vmatpush1.bf16.msra.mxu0 %v2145
    %2388 = vmatprep.subr.bf16.mxu0 %v2148
    %2389 = vmatpush1.bf16.msra.mxu0 %v2147
    %2390 = vmatprep.mubr.bf16.mxu0 %v1728
    %2391 = vmatmul.mubr.bf16.gmra.mrb[0].mxu0 %v1727
    %v2392 = vpop.f32.mrb[0].mxu0
    %v2393 = vadd.f32 %v2280, %v2392
    %v2394 = vpop.f32.mrb[0].mxu0
    %v2395 = vadd.f32 %v2282, %v2394
    %v2396 = vpop.f32.mrb[0].mxu0
    %v2397 = vadd.f32 %v2284, %v2396
    %v2398 = vpop.f32.mrb[0].mxu0
    %v2399 = vadd.f32 %v2286, %v2398
    %2400 = vmatprep.mubr.bf16.mxu0 %v1733
    %2401 = vmatmul.mubr.bf16.gmra.mrb[0].mxu0 %v1732
    %v2402 = vpop.f32.mrb[0].mxu0
    %v2403 = vadd.f32 %v2290, %v2402
    %v2404 = vpop.f32.mrb[0].mxu0
    %v2405 = vadd.f32 %v2292, %v2404
    %v2406 = vpop.f32.mrb[0].mxu0
    %v2407 = vadd.f32 %v2294, %v2406
    %v2408 = vpop.f32.mrb[0].mxu0
    %v2409 = vadd.f32 %v2296, %v2408
    %2410 = vmatprep.mubr.bf16.mxu0 %v1738
    %2411 = vmatmul.mubr.bf16.gmra.mrb[0].mxu0 %v1737
    %v2412 = vpop.f32.mrb[0].mxu0
    %v2413 = vadd.f32 %v2300, %v2412
    %v2414 = vpop.f32.mrb[0].mxu0
    %v2415 = vadd.f32 %v2302, %v2414
    %v2416 = vpop.f32.mrb[0].mxu0
    %v2417 = vadd.f32 %v2304, %v2416
    %v2418 = vpop.f32.mrb[0].mxu0
    %v2419 = vadd.f32 %v2306, %v2418
    %2420 = vmatprep.mubr.bf16.mxu0 %v1743
    %2421 = vmatmul.mubr.bf16.gmra.mrb[0].mxu0 %v1742
    %v2422 = vpop.f32.mrb[0].mxu0
    %v2423 = vadd.f32 %v2310, %v2422
    %v2424 = vpop.f32.mrb[0].mxu0
    %v2425 = vadd.f32 %v2312, %v2424
    %v2426 = vpop.f32.mrb[0].mxu0
    %v2427 = vadd.f32 %v2314, %v2426
    %v2428 = vpop.f32.mrb[0].mxu0
    %v2429 = vadd.f32 %v2316, %v2428
    %2430 = vmatprep.mubr.bf16.mxu0 %v1748
    %2431 = vmatmul.mubr.bf16.gmra.mrb[0].mxu0 %v1747
    %v2432 = vpop.f32.mrb[0].mxu0
    %v2433 = vadd.f32 %v2320, %v2432
    %v2434 = vpop.f32.mrb[0].mxu0
    %v2435 = vadd.f32 %v2322, %v2434
    %v2436 = vpop.f32.mrb[0].mxu0
    %v2437 = vadd.f32 %v2324, %v2436
    %v2438 = vpop.f32.mrb[0].mxu0
    %v2439 = vadd.f32 %v2326, %v2438
    %2440 = vmatprep.mubr.bf16.mxu0 %v1753
    %2441 = vmatmul.mubr.bf16.gmra.mrb[0].mxu0 %v1752
    %v2442 = vpop.f32.mrb[0].mxu0
    %v2443 = vadd.f32 %v2330, %v2442
    %v2444 = vpop.f32.mrb[0].mxu0
    %v2445 = vadd.f32 %v2332, %v2444
    %v2446 = vpop.f32.mrb[0].mxu0
    %v2447 = vadd.f32 %v2334, %v2446
    %v2448 = vpop.f32.mrb[0].mxu0
    %v2449 = vadd.f32 %v2336, %v2448
    %2450 = vmatprep.mubr.bf16.mxu0 %v1758
    %2451 = vmatmul.mubr.bf16.gmra.mrb[0].mxu0 %v1757
    %v2452 = vpop.f32.mrb[0].mxu0
    %v2453 = vadd.f32 %v2340, %v2452
    %v2454 = vpop.f32.mrb[0].mxu0
    %v2455 = vadd.f32 %v2342, %v2454
    %v2456 = vpop.f32.mrb[0].mxu0
    %v2457 = vadd.f32 %v2344, %v2456
    %v2458 = vpop.f32.mrb[0].mxu0
    %v2459 = vadd.f32 %v2346, %v2458
    %2460 = vmatprep.mubr.bf16.mxu0 %v1763
    %2461 = vmatmul.mubr.bf16.gmra.mrb[0].mxu0 %v1762
    %v2462 = vpop.f32.mrb[0].mxu0
    %v2463 = vadd.f32 %v2350, %v2462
    %v2464 = vpop.f32.mrb[0].mxu0
    %v2465 = vadd.f32 %v2352, %v2464
    %v2466 = vpop.f32.mrb[0].mxu0
    %v2467 = vadd.f32 %v2354, %v2466
    %v2468 = vpop.f32.mrb[0].mxu0
    %v2469 = vadd.f32 %v2356, %v2468
    %2470 = vdwg.mxu0
    %2471 = vmatprep.subr.bf16.mxu0 %v2150
    %2472 = vmatpush1.bf16.msra.mxu0 %v2149
    %2473 = vmatprep.subr.bf16.mxu0 %v2152
    %2474 = vmatpush1.bf16.msra.mxu0 %v2151
    %2475 = vmatprep.subr.bf16.mxu0 %v2154
    %2476 = vmatpush1.bf16.msra.mxu0 %v2153
    %2477 = vmatprep.subr.bf16.mxu0 %v2156
    %2478 = vmatpush1.bf16.msra.mxu0 %v2155
    %2479 = vmatprep.subr.bf16.mxu0 %v2158
    %2480 = vmatpush1.bf16.msra.mxu0 %v2157
    %2481 = vmatprep.subr.bf16.mxu0 %v2160
    %2482 = vmatpush1.bf16.msra.mxu0 %v2159
    %2483 = vmatprep.subr.bf16.mxu0 %v2162
    %2484 = vmatpush1.bf16.msra.mxu0 %v2161
    %2485 = vmatprep.subr.bf16.mxu0 %v2164
    %2486 = vmatpush1.bf16.msra.mxu0 %v2163
    %2487 = vmatprep.subr.bf16.mxu0 0
    %2488 = vmatpush1.bf16.msra.mxu0 0
    %2489 = vmatprep.subr.bf16.mxu0 0
    %2490 = vmatpush1.bf16.msra.mxu0 0
    %2491 = vmatprep.subr.bf16.mxu0 0
    %2492 = vmatpush1.bf16.msra.mxu0 0
    %2493 = vmatprep.subr.bf16.mxu0 0
    %2494 = vmatpush1.bf16.msra.mxu0 0
    %2495 = vmatprep.subr.bf16.mxu0 0
    %2496 = vmatpush1.bf16.msra.mxu0 0
    %2497 = vmatprep.subr.bf16.mxu0 0
    %2498 = vmatpush1.bf16.msra.mxu0 0
    %2499 = vmatprep.subr.bf16.mxu0 0
    %2500 = vmatpush1.bf16.msra.mxu0 0
    %2501 = vmatprep.subr.bf16.mxu0 0
    %2502 = vmatpush1.bf16.msra.mxu0 0
    %2503 = vmatprep.mubr.bf16.mxu0 0
    %2504 = vmatmul.mubr.bf16.gmra.mrb[0].mxu0 %v1729
    %v2505 = vpop.f32.mrb[0].mxu0
    %v2506 = vadd.f32 %v2393, %v2505
    %v2507 = vpop.f32.mrb[0].mxu0
    %v2508 = vadd.f32 %v2395, %v2507
    %v2509 = vpop.f32.mrb[0].mxu0
    %v2510 = vadd.f32 %v2397, %v2509
    %v2511 = vpop.f32.mrb[0].mxu0
    %v2512 = vadd.f32 %v2399, %v2511
    %2513 = vmatprep.mubr.bf16.mxu0 0
    %2514 = vmatmul.mubr.bf16.gmra.mrb[0].mxu0 %v1734
    %v2515 = vpop.f32.mrb[0].mxu0
    %v2516 = vadd.f32 %v2403, %v2515
    %v2517 = vpop.f32.mrb[0].mxu0
    %v2518 = vadd.f32 %v2405, %v2517
    %v2519 = vpop.f32.mrb[0].mxu0
    %v2520 = vadd.f32 %v2407, %v2519
    %v2521 = vpop.f32.mrb[0].mxu0
    %v2522 = vadd.f32 %v2409, %v2521
    %2523 = vmatprep.mubr.bf16.mxu0 0
    %2524 = vmatmul.mubr.bf16.gmra.mrb[0].mxu0 %v1739
    %v2525 = vpop.f32.mrb[0].mxu0
    %v2526 = vadd.f32 %v2413, %v2525
    %v2527 = vpop.f32.mrb[0].mxu0
    %v2528 = vadd.f32 %v2415, %v2527
    %v2529 = vpop.f32.mrb[0].mxu0
    %v2530 = vadd.f32 %v2417, %v2529
    %v2531 = vpop.f32.mrb[0].mxu0
    %v2532 = vadd.f32 %v2419, %v2531
    %2533 = vmatprep.mubr.bf16.mxu0 0
    %2534 = vmatmul.mubr.bf16.gmra.mrb[0].mxu0 %v1744
    %v2535 = vpop.f32.mrb[0].mxu0
    %v2536 = vadd.f32 %v2423, %v2535
    %v2537 = vpop.f32.mrb[0].mxu0
    %v2538 = vadd.f32 %v2425, %v2537
    %v2539 = vpop.f32.mrb[0].mxu0
    %v2540 = vadd.f32 %v2427, %v2539
    %v2541 = vpop.f32.mrb[0].mxu0
    %v2542 = vadd.f32 %v2429, %v2541
    %2543 = vmatprep.mubr.bf16.mxu0 0
    %2544 = vmatmul.mubr.bf16.gmra.mrb[0].mxu0 %v1749
    %v2545 = vpop.f32.mrb[0].mxu0
    %v2546 = vadd.f32 %v2433, %v2545
    %v2547 = vpop.f32.mrb[0].mxu0
    %v2548 = vadd.f32 %v2435, %v2547
    %v2549 = vpop.f32.mrb[0].mxu0
    %v2550 = vadd.f32 %v2437, %v2549
    %v2551 = vpop.f32.mrb[0].mxu0
    %v2552 = vadd.f32 %v2439, %v2551
    %2553 = vmatprep.mubr.bf16.mxu0 0
    %2554 = vmatmul.mubr.bf16.gmra.mrb[0].mxu0 %v1754
    %v2555 = vpop.f32.mrb[0].mxu0
    %v2556 = vadd.f32 %v2443, %v2555
    %v2557 = vpop.f32.mrb[0].mxu0
    %v2558 = vadd.f32 %v2445, %v2557
    %v2559 = vpop.f32.mrb[0].mxu0
    %v2560 = vadd.f32 %v2447, %v2559
    %v2561 = vpop.f32.mrb[0].mxu0
    %v2562 = vadd.f32 %v2449, %v2561
    %2563 = vmatprep.mubr.bf16.mxu0 0
    %2564 = vmatmul.mubr.bf16.gmra.mrb[0].mxu0 %v1759
    %v2565 = vpop.f32.mrb[0].mxu0
    %v2566 = vadd.f32 %v2453, %v2565
    %v2567 = vpop.f32.mrb[0].mxu0
    %v2568 = vadd.f32 %v2455, %v2567
    %v2569 = vpop.f32.mrb[0].mxu0
    %v2570 = vadd.f32 %v2457, %v2569
    %v2571 = vpop.f32.mrb[0].mxu0
    %v2572 = vadd.f32 %v2459, %v2571
    %2573 = vmatprep.mubr.bf16.mxu0 0
    %2574 = vmatmul.mubr.bf16.gmra.mrb[0].mxu0 %v1764
    %v2575 = vpop.f32.mrb[0].mxu0
    %v2576 = vadd.f32 %v2463, %v2575
    %v2577 = vpop.f32.mrb[0].mxu0
    %v2578 = vadd.f32 %v2465, %v2577
    %v2579 = vpop.f32.mrb[0].mxu0
    %v2580 = vadd.f32 %v2467, %v2579
    %v2581 = vpop.f32.mrb[0].mxu0
    %v2582 = vadd.f32 %v2469, %v2581
    %2583 = vdwg.mxu0
    %v2584 = vmax.f32 %v2506, %v2508
    %v2585 = vmax.f32 %v2510, %v2512
    %v2586 = vmax.f32 %v2516, %v2518
    %v2587 = vmax.f32 %v2520, %v2522
    %v2588 = vmax.f32 %v2526, %v2528
    %v2589 = vmax.f32 %v2530, %v2532
    %v2590 = vmax.f32 %v2536, %v2538
    %v2591 = vmax.f32 %v2540, %v2542
    %v2592 = vmax.f32 %v2546, %v2548
    %v2593 = vmax.f32 %v2550, %v2552
    %v2594 = vmax.f32 %v2556, %v2558
    %v2595 = vmax.f32 %v2560, %v2562
    %v2596 = vmax.f32 %v2566, %v2568
    %v2597 = vmax.f32 %v2570, %v2572
    %v2598 = vmax.f32 %v2576, %v2578
    %v2599 = vmax.f32 %v2580, %v2582
    %2600 = vst [vmem:[#allocation3] sm:$0xff] %v2584
    %2601 = vst [vmem:[#allocation3 + $0x8] sm:$0xff] %v2585
    %2602 = vst [vmem:[#allocation3 + $0x10] sm:$0xff] %v2586
    %2603 = vst [vmem:[#allocation3 + $0x18] sm:$0xff] %v2587
    %2604 = vst [vmem:[#allocation3 + $0x20] sm:$0xff] %v2588
    %2605 = vst [vmem:[#allocation3 + $0x28] sm:$0xff] %v2589
    %2606 = vst [vmem:[#allocation3 + $0x30] sm:$0xff] %v2590
    %2607 = vst [vmem:[#allocation3 + $0x38] sm:$0xff] %v2591
    %2608 = vst [vmem:[#allocation3 + $0x40] sm:$0xff] %v2592
    %2609 = vst [vmem:[#allocation3 + $0x48] sm:$0xff] %v2593
    %2610 = vst [vmem:[#allocation3 + $0x50] sm:$0xff] %v2594
    %2611 = vst [vmem:[#allocation3 + $0x58] sm:$0xff] %v2595
    %2612 = vst [vmem:[#allocation3 + $0x60] sm:$0xff] %v2596
    %2613 = vst [vmem:[#allocation3 + $0x68] sm:$0xff] %v2597
    %2614 = vst [vmem:[#allocation3 + $0x70] sm:$0xff] %v2598
    %2615 = vst [vmem:[#allocation3 + $0x78] sm:$0xff] %v2599
    %v2616 = vld [vmem:[%s5] sm:$0x1]
    %v2617 = vld [vmem:[#allocation3] sm:$0x1]
    %v2618 = vld [vmem:[#allocation3 + $0x8] sm:$0x1]
    %v2619 = vld [vmem:[#allocation3 + $0x10] sm:$0x1]
    %v2620 = vld [vmem:[#allocation3 + $0x18] sm:$0x1]
    %v2621 = vld [vmem:[#allocation3 + $0x20] sm:$0x1]
    %v2622 = vld [vmem:[#allocation3 + $0x28] sm:$0x1]
    %v2623 = vld [vmem:[#allocation3 + $0x30] sm:$0x1]
    %v2624 = vld [vmem:[#allocation3 + $0x38] sm:$0x1]
    %v2625 = vld [vmem:[#allocation3 + $0x40] sm:$0x1]
    %v2626 = vld [vmem:[#allocation3 + $0x48] sm:$0x1]
    %v2627 = vld [vmem:[#allocation3 + $0x50] sm:$0x1]
    %v2628 = vld [vmem:[#allocation3 + $0x58] sm:$0x1]
    %v2629 = vld [vmem:[#allocation3 + $0x60] sm:$0x1]
    %v2630 = vld [vmem:[#allocation3 + $0x68] sm:$0x1]
    %v2631 = vld [vmem:[#allocation3 + $0x70] sm:$0x1]
    %v2632 = vld [vmem:[#allocation3 + $0x78] sm:$0x1]
    %v2633 = vld [vmem:[#allocation3 + $0x1] sm:$0x1]
    %v2634 = vld [vmem:[#allocation3 + $0x9] sm:$0x1]
    %v2635 = vld [vmem:[#allocation3 + $0x11] sm:$0x1]
    %v2636 = vld [vmem:[#allocation3 + $0x19] sm:$0x1]
    %v2637 = vld [vmem:[#allocation3 + $0x21] sm:$0x1]
    %v2638 = vld [vmem:[#allocation3 + $0x29] sm:$0x1]
    %v2639 = vld [vmem:[#allocation3 + $0x31] sm:$0x1]
    %v2640 = vld [vmem:[#allocation3 + $0x39] sm:$0x1]
    %v2641 = vld [vmem:[#allocation3 + $0x41] sm:$0x1]
    %v2642 = vld [vmem:[#allocation3 + $0x49] sm:$0x1]
    %v2643 = vld [vmem:[#allocation3 + $0x51] sm:$0x1]
    %v2644 = vld [vmem:[#allocation3 + $0x59] sm:$0x1]
    %v2645 = vld [vmem:[#allocation3 + $0x61] sm:$0x1]
    %v2646 = vld [vmem:[#allocation3 + $0x69] sm:$0x1]
    %v2647 = vld [vmem:[#allocation3 + $0x71] sm:$0x1]
    %v2648 = vld [vmem:[#allocation3 + $0x79] sm:$0x1]
    %v2649 = vmax.f32 %v2617, %v2633
    %v2650 = vmax.f32 %v2618, %v2634
    %v2651 = vmax.f32 %v2619, %v2635
    %v2652 = vmax.f32 %v2620, %v2636
    %v2653 = vmax.f32 %v2621, %v2637
    %v2654 = vmax.f32 %v2622, %v2638
    %v2655 = vmax.f32 %v2623, %v2639
    %v2656 = vmax.f32 %v2624, %v2640
    %v2657 = vmax.f32 %v2625, %v2641
    %v2658 = vmax.f32 %v2626, %v2642
    %v2659 = vmax.f32 %v2627, %v2643
    %v2660 = vmax.f32 %v2628, %v2644
    %v2661 = vmax.f32 %v2629, %v2645
    %v2662 = vmax.f32 %v2630, %v2646
    %v2663 = vmax.f32 %v2631, %v2647
    %v2664 = vmax.f32 %v2632, %v2648
    %v2666 = vlaneseq
    %v2667 = vshrl.u32 %v2666, 7
    %v2668 = vsub.s32 0, %v2667
    %v2669 = vrot.slane %v2616, %v2668
    %v2671 = vadd.f32 %v2649, %v2669
    %v2672 = vadd.f32 %v2650, %v2669
    %v2673 = vadd.f32 %v2651, %v2669
    %v2674 = vadd.f32 %v2652, %v2669
    %v2675 = vadd.f32 %v2653, %v2669
    %v2676 = vadd.f32 %v2654, %v2669
    %v2677 = vadd.f32 %v2655, %v2669
    %v2678 = vadd.f32 %v2656, %v2669
    %v2679 = vadd.f32 %v2657, %v2669
    %v2680 = vadd.f32 %v2658, %v2669
    %v2681 = vadd.f32 %v2659, %v2669
    %v2682 = vadd.f32 %v2660, %v2669
    %v2683 = vadd.f32 %v2661, %v2669
    %v2684 = vadd.f32 %v2662, %v2669
    %v2685 = vadd.f32 %v2663, %v2669
    %v2686 = vadd.f32 %v2664, %v2669
    %v2687 = vmax.f32 %v2671, 0.0
    %v2688 = vmax.f32 %v2672, 0.0
    %v2689 = vmax.f32 %v2673, 0.0
    %v2690 = vmax.f32 %v2674, 0.0
    %v2691 = vmax.f32 %v2675, 0.0
    %v2692 = vmax.f32 %v2676, 0.0
    %v2693 = vmax.f32 %v2677, 0.0
    %v2694 = vmax.f32 %v2678, 0.0
    %v2695 = vmax.f32 %v2679, 0.0
    %v2696 = vmax.f32 %v2680, 0.0
    %v2697 = vmax.f32 %v2681, 0.0
    %v2698 = vmax.f32 %v2682, 0.0
    %v2699 = vmax.f32 %v2683, 0.0
    %v2700 = vmax.f32 %v2684, 0.0
    %v2701 = vmax.f32 %v2685, 0.0
    %v2702 = vmax.f32 %v2686, 0.0
    %v2703 = vpack.c.bf16 %v2687, %v2687
    %v2704 = vpack.c.bf16 %v2688, %v2688
    %v2705 = vpack.c.bf16 %v2689, %v2689
    %v2706 = vpack.c.bf16 %v2690, %v2690
    %v2707 = vpack.c.bf16 %v2691, %v2691
    %v2708 = vpack.c.bf16 %v2692, %v2692
    %v2709 = vpack.c.bf16 %v2693, %v2693
    %v2710 = vpack.c.bf16 %v2694, %v2694
    %v2711 = vpack.c.bf16 %v2695, %v2695
    %v2712 = vpack.c.bf16 %v2696, %v2696
    %v2713 = vpack.c.bf16 %v2697, %v2697
    %v2714 = vpack.c.bf16 %v2698, %v2698
    %v2715 = vpack.c.bf16 %v2699, %v2699
    %v2716 = vpack.c.bf16 %v2700, %v2700
    %v2717 = vpack.c.bf16 %v2701, %v2701
    %v2718 = vpack.c.bf16 %v2702, %v2702
    %v2719 = vld [vmem:[%s6] sm:$0xf]
    %v2720 = vld [vmem:[%s6 + $0x4] sm:$0xf]
    %v2721 = vld [vmem:[%s6 + $0x8] sm:$0xf]
    %v2722 = vld [vmem:[%s6 + $0xc] sm:$0xf]
    %v2723 = vld [vmem:[%s6 + $0x10] sm:$0xf]
    %v2724 = vld [vmem:[%s6 + $0x14] sm:$0xf]
    %v2725 = vld [vmem:[%s6 + $0x18] sm:$0xf]
    %v2726 = vld [vmem:[%s6 + $0x1c] sm:$0xf]
    %v2727 = vld [vmem:[%s6 + $0x20] sm:$0xf]
    %v2728 = vld [vmem:[%s6 + $0x24] sm:$0xf]
    %v2729 = vld [vmem:[%s6 + $0x28] sm:$0xf]
    %v2730 = vld [vmem:[%s6 + $0x2c] sm:$0xf]
    %v2731 = vld [vmem:[%s6 + $0x30] sm:$0xf]
    %v2732 = vld [vmem:[%s6 + $0x34] sm:$0xf]
    %v2733 = vld [vmem:[%s6 + $0x38] sm:$0xf]
    %v2734 = vld [vmem:[%s6 + $0x3c] sm:$0xf]
    %v2735 = vld [vmem:[#allocation3 + $0x2] sm:$0x1]
    %v2736 = vld [vmem:[#allocation3 + $0xa] sm:$0x1]
    %v2737 = vld [vmem:[#allocation3 + $0x12] sm:$0x1]
    %v2738 = vld [vmem:[#allocation3 + $0x1a] sm:$0x1]
    %v2739 = vld [vmem:[#allocation3 + $0x22] sm:$0x1]
    %v2740 = vld [vmem:[#allocation3 + $0x2a] sm:$0x1]
    %v2741 = vld [vmem:[#allocation3 + $0x32] sm:$0x1]
    %v2742 = vld [vmem:[#allocation3 + $0x3a] sm:$0x1]
    %v2743 = vld [vmem:[#allocation3 + $0x42] sm:$0x1]
    %v2744 = vld [vmem:[#allocation3 + $0x4a] sm:$0x1]
    %v2745 = vld [vmem:[#allocation3 + $0x52] sm:$0x1]
    %v2746 = vld [vmem:[#allocation3 + $0x5a] sm:$0x1]
    %v2747 = vld [vmem:[#allocation3 + $0x62] sm:$0x1]
    %v2748 = vld [vmem:[#allocation3 + $0x6a] sm:$0x1]
    %v2749 = vld [vmem:[#allocation3 + $0x72] sm:$0x1]
    %v2750 = vld [vmem:[#allocation3 + $0x7a] sm:$0x1]
    %v2751 = vld [vmem:[#allocation3 + $0x3] sm:$0x1]
    %v2752 = vld [vmem:[#allocation3 + $0xb] sm:$0x1]
    %v2753 = vld [vmem:[#allocation3 + $0x13] sm:$0x1]
    %v2754 = vld [vmem:[#allocation3 + $0x1b] sm:$0x1]
    %v2755 = vld [vmem:[#allocation3 + $0x23] sm:$0x1]
    %v2756 = vld [vmem:[#allocation3 + $0x2b] sm:$0x1]
    %v2757 = vld [vmem:[#allocation3 + $0x33] sm:$0x1]
    %v2758 = vld [vmem:[#allocation3 + $0x3b] sm:$0x1]
    %v2759 = vld [vmem:[#allocation3 + $0x43] sm:$0x1]
    %v2760 = vld [vmem:[#allocation3 + $0x4b] sm:$0x1]
    %v2761 = vld [vmem:[#allocation3 + $0x53] sm:$0x1]
    %v2762 = vld [vmem:[#allocation3 + $0x5b] sm:$0x1]
    %v2763 = vld [vmem:[#allocation3 + $0x63] sm:$0x1]
    %v2764 = vld [vmem:[#allocation3 + $0x6b] sm:$0x1]
    %v2765 = vld [vmem:[#allocation3 + $0x73] sm:$0x1]
    %v2766 = vld [vmem:[#allocation3 + $0x7b] sm:$0x1]
    %v2767 = vmax.f32 %v2735, %v2751
    %v2768 = vmax.f32 %v2736, %v2752
    %v2769 = vmax.f32 %v2737, %v2753
    %v2770 = vmax.f32 %v2738, %v2754
    %v2771 = vmax.f32 %v2739, %v2755
    %v2772 = vmax.f32 %v2740, %v2756
    %v2773 = vmax.f32 %v2741, %v2757
    %v2774 = vmax.f32 %v2742, %v2758
    %v2775 = vmax.f32 %v2743, %v2759
    %v2776 = vmax.f32 %v2744, %v2760
    %v2777 = vmax.f32 %v2745, %v2761
    %v2778 = vmax.f32 %v2746, %v2762
    %v2779 = vmax.f32 %v2747, %v2763
    %v2780 = vmax.f32 %v2748, %v2764
    %v2781 = vmax.f32 %v2749, %v2765
    %v2782 = vmax.f32 %v2750, %v2766
    %v2783 = vadd.f32 %v2767, %v2669
    %v2784 = vadd.f32 %v2768, %v2669
    %v2785 = vadd.f32 %v2769, %v2669
    %v2786 = vadd.f32 %v2770, %v2669
    %v2787 = vadd.f32 %v2771, %v2669
    %v2788 = vadd.f32 %v2772, %v2669
    %v2789 = vadd.f32 %v2773, %v2669
    %v2790 = vadd.f32 %v2774, %v2669
    %v2791 = vadd.f32 %v2775, %v2669
    %v2792 = vadd.f32 %v2776, %v2669
    %v2793 = vadd.f32 %v2777, %v2669
    %v2794 = vadd.f32 %v2778, %v2669
    %v2795 = vadd.f32 %v2779, %v2669
    %v2796 = vadd.f32 %v2780, %v2669
    %v2797 = vadd.f32 %v2781, %v2669
    %v2798 = vadd.f32 %v2782, %v2669
    %v2799 = vmax.f32 %v2783, 0.0
    %v2800 = vmax.f32 %v2784, 0.0
    %v2801 = vmax.f32 %v2785, 0.0
    %v2802 = vmax.f32 %v2786, 0.0
    %v2803 = vmax.f32 %v2787, 0.0
    %v2804 = vmax.f32 %v2788, 0.0
    %v2805 = vmax.f32 %v2789, 0.0
    %v2806 = vmax.f32 %v2790, 0.0
    %v2807 = vmax.f32 %v2791, 0.0
    %v2808 = vmax.f32 %v2792, 0.0
    %v2809 = vmax.f32 %v2793, 0.0
    %v2810 = vmax.f32 %v2794, 0.0
    %v2811 = vmax.f32 %v2795, 0.0
    %v2812 = vmax.f32 %v2796, 0.0
    %v2813 = vmax.f32 %v2797, 0.0
    %v2814 = vmax.f32 %v2798, 0.0
    %v2815 = vpack.c.bf16 %v2799, %v2799
    %v2816 = vpack.c.bf16 %v2800, %v2800
    %v2817 = vpack.c.bf16 %v2801, %v2801
    %v2818 = vpack.c.bf16 %v2802, %v2802
    %v2819 = vpack.c.bf16 %v2803, %v2803
    %v2820 = vpack.c.bf16 %v2804, %v2804
    %v2821 = vpack.c.bf16 %v2805, %v2805
    %v2822 = vpack.c.bf16 %v2806, %v2806
    %v2823 = vpack.c.bf16 %v2807, %v2807
    %v2824 = vpack.c.bf16 %v2808, %v2808
    %v2825 = vpack.c.bf16 %v2809, %v2809
    %v2826 = vpack.c.bf16 %v2810, %v2810
    %v2827 = vpack.c.bf16 %v2811, %v2811
    %v2828 = vpack.c.bf16 %v2812, %v2812
    %v2829 = vpack.c.bf16 %v2813, %v2813
    %v2830 = vpack.c.bf16 %v2814, %v2814
    %s2831 = scalar_lea.vmem %s6, 64
    %v2832 = vld [vmem:[%s2831] sm:$0xf]
    %v2833 = vld [vmem:[%s2831 + $0x4] sm:$0xf]
    %v2834 = vld [vmem:[%s2831 + $0x8] sm:$0xf]
    %v2835 = vld [vmem:[%s2831 + $0xc] sm:$0xf]
    %v2836 = vld [vmem:[%s2831 + $0x10] sm:$0xf]
    %v2837 = vld [vmem:[%s2831 + $0x14] sm:$0xf]
    %v2838 = vld [vmem:[%s2831 + $0x18] sm:$0xf]
    %v2839 = vld [vmem:[%s2831 + $0x1c] sm:$0xf]
    %v2840 = vld [vmem:[%s2831 + $0x20] sm:$0xf]
    %v2841 = vld [vmem:[%s2831 + $0x24] sm:$0xf]
    %v2842 = vld [vmem:[%s2831 + $0x28] sm:$0xf]
    %v2843 = vld [vmem:[%s2831 + $0x2c] sm:$0xf]
    %v2844 = vld [vmem:[%s2831 + $0x30] sm:$0xf]
    %v2845 = vld [vmem:[%s2831 + $0x34] sm:$0xf]
    %v2846 = vld [vmem:[%s2831 + $0x38] sm:$0xf]
    %v2847 = vld [vmem:[%s2831 + $0x3c] sm:$0xf]
    %v2864 = vunpack.c.l.b16 %v2815
    %v2865 = vunpack.c.l.b16 %v2816
    %v2866 = vunpack.c.l.b16 %v2817
    %v2867 = vunpack.c.l.b16 %v2818
    %v2868 = vunpack.c.l.b16 %v2819
    %v2869 = vunpack.c.l.b16 %v2820
    %v2870 = vunpack.c.l.b16 %v2821
    %v2871 = vunpack.c.l.b16 %v2822
    %v2872 = vunpack.c.l.b16 %v2823
    %v2873 = vunpack.c.l.b16 %v2824
    %v2874 = vunpack.c.l.b16 %v2825
    %v2875 = vunpack.c.l.b16 %v2826
    %v2876 = vunpack.c.l.b16 %v2827
    %v2877 = vunpack.c.l.b16 %v2828
    %v2878 = vunpack.c.l.b16 %v2829
    %v2879 = vunpack.c.l.b16 %v2830
    %v2880 = vrot.slane %v2865, 7
    %vm2881 = vcmask 1041409
    %v2882 = vsel %vm2881, %v2880, %v2864
    %v2883 = vrot.slane %v2866, 6
    %vm2884 = vcmask 1042434
    %v2885 = vsel %vm2884, %v2883, %v2882
    %v2886 = vrot.slane %v2867, 5
    %vm2887 = vcmask 1043459
    %v2888 = vsel %vm2887, %v2886, %v2885
    %v2889 = vrot.slane %v2868, 4
    %vm2890 = vcmask 1044484
    %v2891 = vsel %vm2890, %v2889, %v2888
    %v2892 = vrot.slane %v2869, 3
    %vm2893 = vcmask 1045509
    %v2894 = vsel %vm2893, %v2892, %v2891
    %v2895 = vrot.slane %v2870, 2
    %vm2896 = vcmask 1046534
    %v2897 = vsel %vm2896, %v2895, %v2894
    %v2898 = vrot.slane %v2871, 1
    %vm2899 = vcmask 1047559
    %v2900 = vsel %vm2899, %v2898, %v2897
    %v2901 = vrot.slane %v2873, 7
    %v2902 = vsel %vm2881, %v2901, %v2872
    %v2903 = vrot.slane %v2874, 6
    %v2904 = vsel %vm2884, %v2903, %v2902
    %v2905 = vrot.slane %v2875, 5
    %v2906 = vsel %vm2887, %v2905, %v2904
    %v2907 = vrot.slane %v2876, 4
    %v2908 = vsel %vm2890, %v2907, %v2906
    %v2909 = vrot.slane %v2877, 3
    %v2910 = vsel %vm2893, %v2909, %v2908
    %v2911 = vrot.slane %v2878, 2
    %v2912 = vsel %vm2896, %v2911, %v2910
    %v2913 = vrot.slane %v2879, 1
    %v2914 = vsel %vm2899, %v2913, %v2912
    %v2915 = vpack.c.b16 %v2914, %v2900
    %v2933 = vunpack.c.l.b16 %v2832
    %v2934 = vunpack.c.l.b16 %v2833
    %v2935 = vunpack.c.l.b16 %v2834
    %v2936 = vunpack.c.l.b16 %v2835
    %v2937 = vunpack.c.l.b16 %v2836
    %v2938 = vunpack.c.l.b16 %v2837
    %v2939 = vunpack.c.l.b16 %v2838
    %v2940 = vunpack.c.l.b16 %v2839
    %v2941 = vunpack.c.l.b16 %v2840
    %v2942 = vunpack.c.l.b16 %v2841
    %v2943 = vunpack.c.l.b16 %v2842
    %v2944 = vunpack.c.l.b16 %v2843
    %v2945 = vunpack.c.l.b16 %v2844
    %v2946 = vunpack.c.l.b16 %v2845
    %v2947 = vunpack.c.l.b16 %v2846
    %v2948 = vunpack.c.l.b16 %v2847
    %v2949 = vpack.c.b16 %v2934, %v2933
    %v2950 = vpack.c.b16 %v2936, %v2935
    %v2951 = vpack.c.b16 %v2938, %v2937
    %v2952 = vpack.c.b16 %v2940, %v2939
    %v2953 = vpack.c.b16 %v2942, %v2941
    %v2954 = vpack.c.b16 %v2944, %v2943
    %v2955 = vpack.c.b16 %v2946, %v2945
    %v2956 = vpack.c.b16 %v2948, %v2947
    %2965 = vmatprep.subr.bf16.mxu0 0
    %2966 = vmatpush1.bf16.msra.mxu0 %v2949
    %2967 = vmatprep.subr.bf16.mxu0 0
    %2968 = vmatpush1.bf16.msra.mxu0 %v2950
    %2969 = vmatprep.subr.bf16.mxu0 0
    %2970 = vmatpush1.bf16.msra.mxu0 %v2951
    %2971 = vmatprep.subr.bf16.mxu0 0
    %2972 = vmatpush1.bf16.msra.mxu0 %v2952
    %2973 = vmatprep.subr.bf16.mxu0 0
    %2974 = vmatpush1.bf16.msra.mxu0 %v2953
    %2975 = vmatprep.subr.bf16.mxu0 0
    %2976 = vmatpush1.bf16.msra.mxu0 %v2954
    %2977 = vmatprep.subr.bf16.mxu0 0
    %2978 = vmatpush1.bf16.msra.mxu0 %v2955
    %2979 = vmatprep.subr.bf16.mxu0 0
    %2980 = vmatpush1.bf16.msra.mxu0 %v2956
    %2981 = vmatprep.subr.bf16.mxu0 0
    %2982 = vmatpush1.bf16.msra.mxu0 0
    %2983 = vmatprep.subr.bf16.mxu0 0
    %2984 = vmatpush1.bf16.msra.mxu0 0
    %2985 = vmatprep.subr.bf16.mxu0 0
    %2986 = vmatpush1.bf16.msra.mxu0 0
    %2987 = vmatprep.subr.bf16.mxu0 0
    %2988 = vmatpush1.bf16.msra.mxu0 0
    %2989 = vmatprep.subr.bf16.mxu0 0
    %2990 = vmatpush1.bf16.msra.mxu0 0
    %2991 = vmatprep.subr.bf16.mxu0 0
    %2992 = vmatpush1.bf16.msra.mxu0 0
    %2993 = vmatprep.subr.bf16.mxu0 0
    %2994 = vmatpush1.bf16.msra.mxu0 0
    %2995 = vmatprep.subr.bf16.mxu0 0
    %2996 = vmatpush1.bf16.msra.mxu0 0
    %2997 = vmatprep.mubr.bf16.mxu0 0
    %2998 = vmatmul.mubr.bf16.gmra.mrb[0].mxu0 %v2915
    %v2999 = vpop.f32.mrb[0].mxu0
    %v3000 = vadd.f32 0.0, %v2999
    %v3001 = vpop.f32.mrb[0].mxu0
    %v3002 = vpop.f32.mrb[0].mxu0
    %v3003 = vadd.f32 0.0, %v3002
    %v3004 = vpop.f32.mrb[0].mxu0
    %3005 = vdwg.mxu0
    %v3022 = vunpack.c.l.b16 %v2703
    %v3023 = vunpack.c.l.b16 %v2704
    %v3024 = vunpack.c.l.b16 %v2705
    %v3025 = vunpack.c.l.b16 %v2706
    %v3026 = vunpack.c.l.b16 %v2707
    %v3027 = vunpack.c.l.b16 %v2708
    %v3028 = vunpack.c.l.b16 %v2709
    %v3029 = vunpack.c.l.b16 %v2710
    %v3030 = vunpack.c.l.b16 %v2711
    %v3031 = vunpack.c.l.b16 %v2712
    %v3032 = vunpack.c.l.b16 %v2713
    %v3033 = vunpack.c.l.b16 %v2714
    %v3034 = vunpack.c.l.b16 %v2715
    %v3035 = vunpack.c.l.b16 %v2716
    %v3036 = vunpack.c.l.b16 %v2717
    %v3037 = vunpack.c.l.b16 %v2718
    %v3038 = vrot.slane %v3023, 7
    %v3039 = vsel %vm2881, %v3038, %v3022
    %v3040 = vrot.slane %v3024, 6
    %v3041 = vsel %vm2884, %v3040, %v3039
    %v3042 = vrot.slane %v3025, 5
    %v3043 = vsel %vm2887, %v3042, %v3041
    %v3044 = vrot.slane %v3026, 4
    %v3045 = vsel %vm2890, %v3044, %v3043
    %v3046 = vrot.slane %v3027, 3
    %v3047 = vsel %vm2893, %v3046, %v3045
    %v3048 = vrot.slane %v3028, 2
    %v3049 = vsel %vm2896, %v3048, %v3047
    %v3050 = vrot.slane %v3029, 1
    %v3051 = vsel %vm2899, %v3050, %v3049
    %v3052 = vrot.slane %v3031, 7
    %v3053 = vsel %vm2881, %v3052, %v3030
    %v3054 = vrot.slane %v3032, 6
    %v3055 = vsel %vm2884, %v3054, %v3053
    %v3056 = vrot.slane %v3033, 5
    %v3057 = vsel %vm2887, %v3056, %v3055
    %v3058 = vrot.slane %v3034, 4
    %v3059 = vsel %vm2890, %v3058, %v3057
    %v3060 = vrot.slane %v3035, 3
    %v3061 = vsel %vm2893, %v3060, %v3059
    %v3062 = vrot.slane %v3036, 2
    %v3063 = vsel %vm2896, %v3062, %v3061
    %v3064 = vrot.slane %v3037, 1
    %v3065 = vsel %vm2899, %v3064, %v3063
    %v3066 = vpack.c.b16 %v3065, %v3051
    %v3084 = vunpack.c.l.b16 %v2719
    %v3085 = vunpack.c.l.b16 %v2720
    %v3086 = vunpack.c.l.b16 %v2721
    %v3087 = vunpack.c.l.b16 %v2722
    %v3088 = vunpack.c.l.b16 %v2723
    %v3089 = vunpack.c.l.b16 %v2724
    %v3090 = vunpack.c.l.b16 %v2725
    %v3091 = vunpack.c.l.b16 %v2726
    %v3092 = vunpack.c.l.b16 %v2727
    %v3093 = vunpack.c.l.b16 %v2728
    %v3094 = vunpack.c.l.b16 %v2729
    %v3095 = vunpack.c.l.b16 %v2730
    %v3096 = vunpack.c.l.b16 %v2731
    %v3097 = vunpack.c.l.b16 %v2732
    %v3098 = vunpack.c.l.b16 %v2733
    %v3099 = vunpack.c.l.b16 %v2734
    %v3100 = vpack.c.b16 %v3085, %v3084
    %v3101 = vpack.c.b16 %v3087, %v3086
    %v3102 = vpack.c.b16 %v3089, %v3088
    %v3103 = vpack.c.b16 %v3091, %v3090
    %v3104 = vpack.c.b16 %v3093, %v3092
    %v3105 = vpack.c.b16 %v3095, %v3094
    %v3106 = vpack.c.b16 %v3097, %v3096
    %v3107 = vpack.c.b16 %v3099, %v3098
    %3116 = vmatprep.subr.bf16.mxu0 0
    %3117 = vmatpush1.bf16.msra.mxu0 %v3100
    %3118 = vmatprep.subr.bf16.mxu0 0
    %3119 = vmatpush1.bf16.msra.mxu0 %v3101
    %3120 = vmatprep.subr.bf16.mxu0 0
    %3121 = vmatpush1.bf16.msra.mxu0 %v3102
    %3122 = vmatprep.subr.bf16.mxu0 0
    %3123 = vmatpush1.bf16.msra.mxu0 %v3103
    %3124 = vmatprep.subr.bf16.mxu0 0
    %3125 = vmatpush1.bf16.msra.mxu0 %v3104
    %3126 = vmatprep.subr.bf16.mxu0 0
    %3127 = vmatpush1.bf16.msra.mxu0 %v3105
    %3128 = vmatprep.subr.bf16.mxu0 0
    %3129 = vmatpush1.bf16.msra.mxu0 %v3106
    %3130 = vmatprep.subr.bf16.mxu0 0
    %3131 = vmatpush1.bf16.msra.mxu0 %v3107
    %3132 = vmatprep.subr.bf16.mxu0 0
    %3133 = vmatpush1.bf16.msra.mxu0 0
    %3134 = vmatprep.subr.bf16.mxu0 0
    %3135 = vmatpush1.bf16.msra.mxu0 0
    %3136 = vmatprep.subr.bf16.mxu0 0
    %3137 = vmatpush1.bf16.msra.mxu0 0
    %3138 = vmatprep.subr.bf16.mxu0 0
    %3139 = vmatpush1.bf16.msra.mxu0 0
    %3140 = vmatprep.subr.bf16.mxu0 0
    %3141 = vmatpush1.bf16.msra.mxu0 0
    %3142 = vmatprep.subr.bf16.mxu0 0
    %3143 = vmatpush1.bf16.msra.mxu0 0
    %3144 = vmatprep.subr.bf16.mxu0 0
    %3145 = vmatpush1.bf16.msra.mxu0 0
    %3146 = vmatprep.subr.bf16.mxu0 0
    %3147 = vmatpush1.bf16.msra.mxu0 0
    %3148 = vmatprep.mubr.bf16.mxu0 0
    %3149 = vmatmul.mubr.bf16.gmra.mrb[0].mxu0 %v3066
    %v3150 = vpop.f32.mrb[0].mxu0
    %v3151 = vadd.f32 %v3000, %v3150
    %v3152 = vpop.f32.mrb[0].mxu0
    %v3153 = vpop.f32.mrb[0].mxu0
    %v3154 = vadd.f32 %v3003, %v3153
    %v3155 = vpop.f32.mrb[0].mxu0
    %3156 = vdwg.mxu0
    %v3157 = vld [vmem:[#allocation3 + $0x4] sm:$0x1]
    %v3158 = vld [vmem:[#allocation3 + $0xc] sm:$0x1]
    %v3159 = vld [vmem:[#allocation3 + $0x14] sm:$0x1]
    %v3160 = vld [vmem:[#allocation3 + $0x1c] sm:$0x1]
    %v3161 = vld [vmem:[#allocation3 + $0x24] sm:$0x1]
    %v3162 = vld [vmem:[#allocation3 + $0x2c] sm:$0x1]
    %v3163 = vld [vmem:[#allocation3 + $0x34] sm:$0x1]
    %v3164 = vld [vmem:[#allocation3 + $0x3c] sm:$0x1]
    %v3165 = vld [vmem:[#allocation3 + $0x44] sm:$0x1]
    %v3166 = vld [vmem:[#allocation3 + $0x4c] sm:$0x1]
    %v3167 = vld [vmem:[#allocation3 + $0x54] sm:$0x1]
    %v3168 = vld [vmem:[#allocation3 + $0x5c] sm:$0x1]
    %v3169 = vld [vmem:[#allocation3 + $0x64] sm:$0x1]
    %v3170 = vld [vmem:[#allocation3 + $0x6c] sm:$0x1]
    %v3171 = vld [vmem:[#allocation3 + $0x74] sm:$0x1]
    %v3172 = vld [vmem:[#allocation3 + $0x7c] sm:$0x1]
    %v3173 = vld [vmem:[#allocation3 + $0x5] sm:$0x1]
    %v3174 = vld [vmem:[#allocation3 + $0xd] sm:$0x1]
    %v3175 = vld [vmem:[#allocation3 + $0x15] sm:$0x1]
    %v3176 = vld [vmem:[#allocation3 + $0x1d] sm:$0x1]
    %v3177 = vld [vmem:[#allocation3 + $0x25] sm:$0x1]
    %v3178 = vld [vmem:[#allocation3 + $0x2d] sm:$0x1]
    %v3179 = vld [vmem:[#allocation3 + $0x35] sm:$0x1]
    %v3180 = vld [vmem:[#allocation3 + $0x3d] sm:$0x1]
    %v3181 = vld [vmem:[#allocation3 + $0x45] sm:$0x1]
    %v3182 = vld [vmem:[#allocation3 + $0x4d] sm:$0x1]
    %v3183 = vld [vmem:[#allocation3 + $0x55] sm:$0x1]
    %v3184 = vld [vmem:[#allocation3 + $0x5d] sm:$0x1]
    %v3185 = vld [vmem:[#allocation3 + $0x65] sm:$0x1]
    %v3186 = vld [vmem:[#allocation3 + $0x6d] sm:$0x1]
    %v3187 = vld [vmem:[#allocation3 + $0x75] sm:$0x1]
    %v3188 = vld [vmem:[#allocation3 + $0x7d] sm:$0x1]
    %v3189 = vmax.f32 %v3157, %v3173
    %v3190 = vmax.f32 %v3158, %v3174
    %v3191 = vmax.f32 %v3159, %v3175
    %v3192 = vmax.f32 %v3160, %v3176
    %v3193 = vmax.f32 %v3161, %v3177
    %v3194 = vmax.f32 %v3162, %v3178
    %v3195 = vmax.f32 %v3163, %v3179
    %v3196 = vmax.f32 %v3164, %v3180
    %v3197 = vmax.f32 %v3165, %v3181
    %v3198 = vmax.f32 %v3166, %v3182
    %v3199 = vmax.f32 %v3167, %v3183
    %v3200 = vmax.f32 %v3168, %v3184
    %v3201 = vmax.f32 %v3169, %v3185
    %v3202 = vmax.f32 %v3170, %v3186
    %v3203 = vmax.f32 %v3171, %v3187
    %v3204 = vmax.f32 %v3172, %v3188
    %v3205 = vadd.f32 %v3189, %v2669
    %v3206 = vadd.f32 %v3190, %v2669
    %v3207 = vadd.f32 %v3191, %v2669
    %v3208 = vadd.f32 %v3192, %v2669
    %v3209 = vadd.f32 %v3193, %v2669
    %v3210 = vadd.f32 %v3194, %v2669
    %v3211 = vadd.f32 %v3195, %v2669
    %v3212 = vadd.f32 %v3196, %v2669
    %v3213 = vadd.f32 %v3197, %v2669
    %v3214 = vadd.f32 %v3198, %v2669
    %v3215 = vadd.f32 %v3199, %v2669
    %v3216 = vadd.f32 %v3200, %v2669
    %v3217 = vadd.f32 %v3201, %v2669
    %v3218 = vadd.f32 %v3202, %v2669
    %v3219 = vadd.f32 %v3203, %v2669
    %v3220 = vadd.f32 %v3204, %v2669
    %v3221 = vmax.f32 %v3205, 0.0
    %v3222 = vmax.f32 %v3206, 0.0
    %v3223 = vmax.f32 %v3207, 0.0
    %v3224 = vmax.f32 %v3208, 0.0
    %v3225 = vmax.f32 %v3209, 0.0
    %v3226 = vmax.f32 %v3210, 0.0
    %v3227 = vmax.f32 %v3211, 0.0
    %v3228 = vmax.f32 %v3212, 0.0
    %v3229 = vmax.f32 %v3213, 0.0
    %v3230 = vmax.f32 %v3214, 0.0
    %v3231 = vmax.f32 %v3215, 0.0
    %v3232 = vmax.f32 %v3216, 0.0
    %v3233 = vmax.f32 %v3217, 0.0
    %v3234 = vmax.f32 %v3218, 0.0
    %v3235 = vmax.f32 %v3219, 0.0
    %v3236 = vmax.f32 %v3220, 0.0
    %v3237 = vpack.c.bf16 %v3221, %v3221
    %v3238 = vpack.c.bf16 %v3222, %v3222
    %v3239 = vpack.c.bf16 %v3223, %v3223
    %v3240 = vpack.c.bf16 %v3224, %v3224
    %v3241 = vpack.c.bf16 %v3225, %v3225
    %v3242 = vpack.c.bf16 %v3226, %v3226
    %v3243 = vpack.c.bf16 %v3227, %v3227
    %v3244 = vpack.c.bf16 %v3228, %v3228
    %v3245 = vpack.c.bf16 %v3229, %v3229
    %v3246 = vpack.c.bf16 %v3230, %v3230
    %v3247 = vpack.c.bf16 %v3231, %v3231
    %v3248 = vpack.c.bf16 %v3232, %v3232
    %v3249 = vpack.c.bf16 %v3233, %v3233
    %v3250 = vpack.c.bf16 %v3234, %v3234
    %v3251 = vpack.c.bf16 %v3235, %v3235
    %v3252 = vpack.c.bf16 %v3236, %v3236
    %s3253 = scalar_lea.vmem %s6, 128
    %v3254 = vld [vmem:[%s3253] sm:$0xf]
    %v3255 = vld [vmem:[%s3253 + $0x4] sm:$0xf]
    %v3256 = vld [vmem:[%s3253 + $0x8] sm:$0xf]
    %v3257 = vld [vmem:[%s3253 + $0xc] sm:$0xf]
    %v3258 = vld [vmem:[%s3253 + $0x10] sm:$0xf]
    %v3259 = vld [vmem:[%s3253 + $0x14] sm:$0xf]
    %v3260 = vld [vmem:[%s3253 + $0x18] sm:$0xf]
    %v3261 = vld [vmem:[%s3253 + $0x1c] sm:$0xf]
    %v3262 = vld [vmem:[%s3253 + $0x20] sm:$0xf]
    %v3263 = vld [vmem:[%s3253 + $0x24] sm:$0xf]
    %v3264 = vld [vmem:[%s3253 + $0x28] sm:$0xf]
    %v3265 = vld [vmem:[%s3253 + $0x2c] sm:$0xf]
    %v3266 = vld [vmem:[%s3253 + $0x30] sm:$0xf]
    %v3267 = vld [vmem:[%s3253 + $0x34] sm:$0xf]
    %v3268 = vld [vmem:[%s3253 + $0x38] sm:$0xf]
    %v3269 = vld [vmem:[%s3253 + $0x3c] sm:$0xf]
    %v3286 = vunpack.c.l.b16 %v3237
    %v3287 = vunpack.c.l.b16 %v3238
    %v3288 = vunpack.c.l.b16 %v3239
    %v3289 = vunpack.c.l.b16 %v3240
    %v3290 = vunpack.c.l.b16 %v3241
    %v3291 = vunpack.c.l.b16 %v3242
    %v3292 = vunpack.c.l.b16 %v3243
    %v3293 = vunpack.c.l.b16 %v3244
    %v3294 = vunpack.c.l.b16 %v3245
    %v3295 = vunpack.c.l.b16 %v3246
    %v3296 = vunpack.c.l.b16 %v3247
    %v3297 = vunpack.c.l.b16 %v3248
    %v3298 = vunpack.c.l.b16 %v3249
    %v3299 = vunpack.c.l.b16 %v3250
    %v3300 = vunpack.c.l.b16 %v3251
    %v3301 = vunpack.c.l.b16 %v3252
    %v3302 = vrot.slane %v3287, 7
    %v3303 = vsel %vm2881, %v3302, %v3286
    %v3304 = vrot.slane %v3288, 6
    %v3305 = vsel %vm2884, %v3304, %v3303
    %v3306 = vrot.slane %v3289, 5
    %v3307 = vsel %vm2887, %v3306, %v3305
    %v3308 = vrot.slane %v3290, 4
    %v3309 = vsel %vm2890, %v3308, %v3307
    %v3310 = vrot.slane %v3291, 3
    %v3311 = vsel %vm2893, %v3310, %v3309
    %v3312 = vrot.slane %v3292, 2
    %v3313 = vsel %vm2896, %v3312, %v3311
    %v3314 = vrot.slane %v3293, 1
    %v3315 = vsel %vm2899, %v3314, %v3313
    %v3316 = vrot.slane %v3295, 7
    %v3317 = vsel %vm2881, %v3316, %v3294
    %v3318 = vrot.slane %v3296, 6
    %v3319 = vsel %vm2884, %v3318, %v3317
    %v3320 = vrot.slane %v3297, 5
    %v3321 = vsel %vm2887, %v3320, %v3319
    %v3322 = vrot.slane %v3298, 4
    %v3323 = vsel %vm2890, %v3322, %v3321
    %v3324 = vrot.slane %v3299, 3
    %v3325 = vsel %vm2893, %v3324, %v3323
    %v3326 = vrot.slane %v3300, 2
    %v3327 = vsel %vm2896, %v3326, %v3325
    %v3328 = vrot.slane %v3301, 1
    %v3329 = vsel %vm2899, %v3328, %v3327
    %v3330 = vpack.c.b16 %v3329, %v3315
    %v3348 = vunpack.c.l.b16 %v3254
    %v3349 = vunpack.c.l.b16 %v3255
    %v3350 = vunpack.c.l.b16 %v3256
    %v3351 = vunpack.c.l.b16 %v3257
    %v3352 = vunpack.c.l.b16 %v3258
    %v3353 = vunpack.c.l.b16 %v3259
    %v3354 = vunpack.c.l.b16 %v3260
    %v3355 = vunpack.c.l.b16 %v3261
    %v3356 = vunpack.c.l.b16 %v3262
    %v3357 = vunpack.c.l.b16 %v3263
    %v3358 = vunpack.c.l.b16 %v3264
    %v3359 = vunpack.c.l.b16 %v3265
    %v3360 = vunpack.c.l.b16 %v3266
    %v3361 = vunpack.c.l.b16 %v3267
    %v3362 = vunpack.c.l.b16 %v3268
    %v3363 = vunpack.c.l.b16 %v3269
    %v3364 = vpack.c.b16 %v3349, %v3348
    %v3365 = vpack.c.b16 %v3351, %v3350
    %v3366 = vpack.c.b16 %v3353, %v3352
    %v3367 = vpack.c.b16 %v3355, %v3354
    %v3368 = vpack.c.b16 %v3357, %v3356
    %v3369 = vpack.c.b16 %v3359, %v3358
    %v3370 = vpack.c.b16 %v3361, %v3360
    %v3371 = vpack.c.b16 %v3363, %v3362
    %3380 = vmatprep.subr.bf16.mxu0 0
    %3381 = vmatpush1.bf16.msra.mxu0 %v3364
    %3382 = vmatprep.subr.bf16.mxu0 0
    %3383 = vmatpush1.bf16.msra.mxu0 %v3365
    %3384 = vmatprep.subr.bf16.mxu0 0
    %3385 = vmatpush1.bf16.msra.mxu0 %v3366
    %3386 = vmatprep.subr.bf16.mxu0 0
    %3387 = vmatpush1.bf16.msra.mxu0 %v3367
    %3388 = vmatprep.subr.bf16.mxu0 0
    %3389 = vmatpush1.bf16.msra.mxu0 %v3368
    %3390 = vmatprep.subr.bf16.mxu0 0
    %3391 = vmatpush1.bf16.msra.mxu0 %v3369
    %3392 = vmatprep.subr.bf16.mxu0 0
    %3393 = vmatpush1.bf16.msra.mxu0 %v3370
    %3394 = vmatprep.subr.bf16.mxu0 0
    %3395 = vmatpush1.bf16.msra.mxu0 %v3371
    %3396 = vmatprep.subr.bf16.mxu0 0
    %3397 = vmatpush1.bf16.msra.mxu0 0
    %3398 = vmatprep.subr.bf16.mxu0 0
    %3399 = vmatpush1.bf16.msra.mxu0 0
    %3400 = vmatprep.subr.bf16.mxu0 0
    %3401 = vmatpush1.bf16.msra.mxu0 0
    %3402 = vmatprep.subr.bf16.mxu0 0
    %3403 = vmatpush1.bf16.msra.mxu0 0
    %3404 = vmatprep.subr.bf16.mxu0 0
    %3405 = vmatpush1.bf16.msra.mxu0 0
    %3406 = vmatprep.subr.bf16.mxu0 0
    %3407 = vmatpush1.bf16.msra.mxu0 0
    %3408 = vmatprep.subr.bf16.mxu0 0
    %3409 = vmatpush1.bf16.msra.mxu0 0
    %3410 = vmatprep.subr.bf16.mxu0 0
    %3411 = vmatpush1.bf16.msra.mxu0 0
    %3412 = vmatprep.mubr.bf16.mxu0 0
    %3413 = vmatmul.mubr.bf16.gmra.mrb[0].mxu0 %v3330
    %v3414 = vpop.f32.mrb[0].mxu0
    %v3415 = vadd.f32 0.0, %v3414
    %v3416 = vpop.f32.mrb[0].mxu0
    %v3417 = vpop.f32.mrb[0].mxu0
    %v3418 = vadd.f32 0.0, %v3417
    %v3419 = vpop.f32.mrb[0].mxu0
    %3420 = vdwg.mxu0
    %v3421 = vadd.f32 %v3151, %v3415
    %v3422 = vadd.f32 %v3154, %v3418
    %v3423 = vld [vmem:[#allocation3 + $0x6] sm:$0x1]
    %v3424 = vld [vmem:[#allocation3 + $0xe] sm:$0x1]
    %v3425 = vld [vmem:[#allocation3 + $0x16] sm:$0x1]
    %v3426 = vld [vmem:[#allocation3 + $0x1e] sm:$0x1]
    %v3427 = vld [vmem:[#allocation3 + $0x26] sm:$0x1]
    %v3428 = vld [vmem:[#allocation3 + $0x2e] sm:$0x1]
    %v3429 = vld [vmem:[#allocation3 + $0x36] sm:$0x1]
    %v3430 = vld [vmem:[#allocation3 + $0x3e] sm:$0x1]
    %v3431 = vld [vmem:[#allocation3 + $0x46] sm:$0x1]
    %v3432 = vld [vmem:[#allocation3 + $0x4e] sm:$0x1]
    %v3433 = vld [vmem:[#allocation3 + $0x56] sm:$0x1]
    %v3434 = vld [vmem:[#allocation3 + $0x5e] sm:$0x1]
    %v3435 = vld [vmem:[#allocation3 + $0x66] sm:$0x1]
    %v3436 = vld [vmem:[#allocation3 + $0x6e] sm:$0x1]
    %v3437 = vld [vmem:[#allocation3 + $0x76] sm:$0x1]
    %v3438 = vld [vmem:[#allocation3 + $0x7e] sm:$0x1]
    %v3439 = vld [vmem:[#allocation3 + $0x7] sm:$0x1]
    %v3440 = vld [vmem:[#allocation3 + $0xf] sm:$0x1]
    %v3441 = vld [vmem:[#allocation3 + $0x17] sm:$0x1]
    %v3442 = vld [vmem:[#allocation3 + $0x1f] sm:$0x1]
    %v3443 = vld [vmem:[#allocation3 + $0x27] sm:$0x1]
    %v3444 = vld [vmem:[#allocation3 + $0x2f] sm:$0x1]
    %v3445 = vld [vmem:[#allocation3 + $0x37] sm:$0x1]
    %v3446 = vld [vmem:[#allocation3 + $0x3f] sm:$0x1]
    %v3447 = vld [vmem:[#allocation3 + $0x47] sm:$0x1]
    %v3448 = vld [vmem:[#allocation3 + $0x4f] sm:$0x1]
    %v3449 = vld [vmem:[#allocation3 + $0x57] sm:$0x1]
    %v3450 = vld [vmem:[#allocation3 + $0x5f] sm:$0x1]
    %v3451 = vld [vmem:[#allocation3 + $0x67] sm:$0x1]
    %v3452 = vld [vmem:[#allocation3 + $0x6f] sm:$0x1]
    %v3453 = vld [vmem:[#allocation3 + $0x77] sm:$0x1]
    %v3454 = vld [vmem:[#allocation3 + $0x7f] sm:$0x1]
    %v3455 = vmax.f32 %v3423, %v3439
    %v3456 = vmax.f32 %v3424, %v3440
    %v3457 = vmax.f32 %v3425, %v3441
    %v3458 = vmax.f32 %v3426, %v3442
    %v3459 = vmax.f32 %v3427, %v3443
    %v3460 = vmax.f32 %v3428, %v3444
    %v3461 = vmax.f32 %v3429, %v3445
    %v3462 = vmax.f32 %v3430, %v3446
    %v3463 = vmax.f32 %v3431, %v3447
    %v3464 = vmax.f32 %v3432, %v3448
    %v3465 = vmax.f32 %v3433, %v3449
    %v3466 = vmax.f32 %v3434, %v3450
    %v3467 = vmax.f32 %v3435, %v3451
    %v3468 = vmax.f32 %v3436, %v3452
    %v3469 = vmax.f32 %v3437, %v3453
    %v3470 = vmax.f32 %v3438, %v3454
    %v3471 = vadd.f32 %v3455, %v2669
    %v3472 = vadd.f32 %v3456, %v2669
    %v3473 = vadd.f32 %v3457, %v2669
    %v3474 = vadd.f32 %v3458, %v2669
    %v3475 = vadd.f32 %v3459, %v2669
    %v3476 = vadd.f32 %v3460, %v2669
    %v3477 = vadd.f32 %v3461, %v2669
    %v3478 = vadd.f32 %v3462, %v2669
    %v3479 = vadd.f32 %v3463, %v2669
    %v3480 = vadd.f32 %v3464, %v2669
    %v3481 = vadd.f32 %v3465, %v2669
    %v3482 = vadd.f32 %v3466, %v2669
    %v3483 = vadd.f32 %v3467, %v2669
    %v3484 = vadd.f32 %v3468, %v2669
    %v3485 = vadd.f32 %v3469, %v2669
    %v3486 = vadd.f32 %v3470, %v2669
    %v3487 = vmax.f32 %v3471, 0.0
    %v3488 = vmax.f32 %v3472, 0.0
    %v3489 = vmax.f32 %v3473, 0.0
    %v3490 = vmax.f32 %v3474, 0.0
    %v3491 = vmax.f32 %v3475, 0.0
    %v3492 = vmax.f32 %v3476, 0.0
    %v3493 = vmax.f32 %v3477, 0.0
    %v3494 = vmax.f32 %v3478, 0.0
    %v3495 = vmax.f32 %v3479, 0.0
    %v3496 = vmax.f32 %v3480, 0.0
    %v3497 = vmax.f32 %v3481, 0.0
    %v3498 = vmax.f32 %v3482, 0.0
    %v3499 = vmax.f32 %v3483, 0.0
    %v3500 = vmax.f32 %v3484, 0.0
    %v3501 = vmax.f32 %v3485, 0.0
    %v3502 = vmax.f32 %v3486, 0.0
    %v3503 = vpack.c.bf16 %v3487, %v3487
    %v3504 = vpack.c.bf16 %v3488, %v3488
    %v3505 = vpack.c.bf16 %v3489, %v3489
    %v3506 = vpack.c.bf16 %v3490, %v3490
    %v3507 = vpack.c.bf16 %v3491, %v3491
    %v3508 = vpack.c.bf16 %v3492, %v3492
    %v3509 = vpack.c.bf16 %v3493, %v3493
    %v3510 = vpack.c.bf16 %v3494, %v3494
    %v3511 = vpack.c.bf16 %v3495, %v3495
    %v3512 = vpack.c.bf16 %v3496, %v3496
    %v3513 = vpack.c.bf16 %v3497, %v3497
    %v3514 = vpack.c.bf16 %v3498, %v3498
    %v3515 = vpack.c.bf16 %v3499, %v3499
    %v3516 = vpack.c.bf16 %v3500, %v3500
    %v3517 = vpack.c.bf16 %v3501, %v3501
    %v3518 = vpack.c.bf16 %v3502, %v3502
    %s3519 = scalar_lea.vmem %s6, 192
    %v3520 = vld [vmem:[%s3519] sm:$0xf]
    %v3521 = vld [vmem:[%s3519 + $0x4] sm:$0xf]
    %v3522 = vld [vmem:[%s3519 + $0x8] sm:$0xf]
    %v3523 = vld [vmem:[%s3519 + $0xc] sm:$0xf]
    %v3524 = vld [vmem:[%s3519 + $0x10] sm:$0xf]
    %v3525 = vld [vmem:[%s3519 + $0x14] sm:$0xf]
    %v3526 = vld [vmem:[%s3519 + $0x18] sm:$0xf]
    %v3527 = vld [vmem:[%s3519 + $0x1c] sm:$0xf]
    %v3528 = vld [vmem:[%s3519 + $0x20] sm:$0xf]
    %v3529 = vld [vmem:[%s3519 + $0x24] sm:$0xf]
    %v3530 = vld [vmem:[%s3519 + $0x28] sm:$0xf]
    %v3531 = vld [vmem:[%s3519 + $0x2c] sm:$0xf]
    %v3532 = vld [vmem:[%s3519 + $0x30] sm:$0xf]
    %v3533 = vld [vmem:[%s3519 + $0x34] sm:$0xf]
    %v3534 = vld [vmem:[%s3519 + $0x38] sm:$0xf]
    %v3535 = vld [vmem:[%s3519 + $0x3c] sm:$0xf]
    %v3552 = vunpack.c.l.b16 %v3503
    %v3553 = vunpack.c.l.b16 %v3504
    %v3554 = vunpack.c.l.b16 %v3505
    %v3555 = vunpack.c.l.b16 %v3506
    %v3556 = vunpack.c.l.b16 %v3507
    %v3557 = vunpack.c.l.b16 %v3508
    %v3558 = vunpack.c.l.b16 %v3509
    %v3559 = vunpack.c.l.b16 %v3510
    %v3560 = vunpack.c.l.b16 %v3511
    %v3561 = vunpack.c.l.b16 %v3512
    %v3562 = vunpack.c.l.b16 %v3513
    %v3563 = vunpack.c.l.b16 %v3514
    %v3564 = vunpack.c.l.b16 %v3515
    %v3565 = vunpack.c.l.b16 %v3516
    %v3566 = vunpack.c.l.b16 %v3517
    %v3567 = vunpack.c.l.b16 %v3518
    %v3568 = vrot.slane %v3553, 7
    %v3569 = vsel %vm2881, %v3568, %v3552
    %v3570 = vrot.slane %v3554, 6
    %v3571 = vsel %vm2884, %v3570, %v3569
    %v3572 = vrot.slane %v3555, 5
    %v3573 = vsel %vm2887, %v3572, %v3571
    %v3574 = vrot.slane %v3556, 4
    %v3575 = vsel %vm2890, %v3574, %v3573
    %v3576 = vrot.slane %v3557, 3
    %v3577 = vsel %vm2893, %v3576, %v3575
    %v3578 = vrot.slane %v3558, 2
    %v3579 = vsel %vm2896, %v3578, %v3577
    %v3580 = vrot.slane %v3559, 1
    %v3581 = vsel %vm2899, %v3580, %v3579
    %v3582 = vrot.slane %v3561, 7
    %v3583 = vsel %vm2881, %v3582, %v3560
    %v3584 = vrot.slane %v3562, 6
    %v3585 = vsel %vm2884, %v3584, %v3583
    %v3586 = vrot.slane %v3563, 5
    %v3587 = vsel %vm2887, %v3586, %v3585
    %v3588 = vrot.slane %v3564, 4
    %v3589 = vsel %vm2890, %v3588, %v3587
    %v3590 = vrot.slane %v3565, 3
    %v3591 = vsel %vm2893, %v3590, %v3589
    %v3592 = vrot.slane %v3566, 2
    %v3593 = vsel %vm2896, %v3592, %v3591
    %v3594 = vrot.slane %v3567, 1
    %v3595 = vsel %vm2899, %v3594, %v3593
    %v3596 = vpack.c.b16 %v3595, %v3581
    %v3614 = vunpack.c.l.b16 %v3520
    %v3615 = vunpack.c.l.b16 %v3521
    %v3616 = vunpack.c.l.b16 %v3522
    %v3617 = vunpack.c.l.b16 %v3523
    %v3618 = vunpack.c.l.b16 %v3524
    %v3619 = vunpack.c.l.b16 %v3525
    %v3620 = vunpack.c.l.b16 %v3526
    %v3621 = vunpack.c.l.b16 %v3527
    %v3622 = vunpack.c.l.b16 %v3528
    %v3623 = vunpack.c.l.b16 %v3529
    %v3624 = vunpack.c.l.b16 %v3530
    %v3625 = vunpack.c.l.b16 %v3531
    %v3626 = vunpack.c.l.b16 %v3532
    %v3627 = vunpack.c.l.b16 %v3533
    %v3628 = vunpack.c.l.b16 %v3534
    %v3629 = vunpack.c.l.b16 %v3535
    %v3630 = vpack.c.b16 %v3615, %v3614
    %v3631 = vpack.c.b16 %v3617, %v3616
    %v3632 = vpack.c.b16 %v3619, %v3618
    %v3633 = vpack.c.b16 %v3621, %v3620
    %v3634 = vpack.c.b16 %v3623, %v3622
    %v3635 = vpack.c.b16 %v3625, %v3624
    %v3636 = vpack.c.b16 %v3627, %v3626
    %v3637 = vpack.c.b16 %v3629, %v3628
    %3646 = vmatprep.subr.bf16.mxu0 0
    %3647 = vmatpush1.bf16.msra.mxu0 %v3630
    %3648 = vmatprep.subr.bf16.mxu0 0
    %3649 = vmatpush1.bf16.msra.mxu0 %v3631
    %3650 = vmatprep.subr.bf16.mxu0 0
    %3651 = vmatpush1.bf16.msra.mxu0 %v3632
    %3652 = vmatprep.subr.bf16.mxu0 0
    %3653 = vmatpush1.bf16.msra.mxu0 %v3633
    %3654 = vmatprep.subr.bf16.mxu0 0
    %3655 = vmatpush1.bf16.msra.mxu0 %v3634
    %3656 = vmatprep.subr.bf16.mxu0 0
    %3657 = vmatpush1.bf16.msra.mxu0 %v3635
    %3658 = vmatprep.subr.bf16.mxu0 0
    %3659 = vmatpush1.bf16.msra.mxu0 %v3636
    %3660 = vmatprep.subr.bf16.mxu0 0
    %3661 = vmatpush1.bf16.msra.mxu0 %v3637
    %3662 = vmatprep.subr.bf16.mxu0 0
    %3663 = vmatpush1.bf16.msra.mxu0 0
    %3664 = vmatprep.subr.bf16.mxu0 0
    %3665 = vmatpush1.bf16.msra.mxu0 0
    %3666 = vmatprep.subr.bf16.mxu0 0
    %3667 = vmatpush1.bf16.msra.mxu0 0
    %3668 = vmatprep.subr.bf16.mxu0 0
    %3669 = vmatpush1.bf16.msra.mxu0 0
    %3670 = vmatprep.subr.bf16.mxu0 0
    %3671 = vmatpush1.bf16.msra.mxu0 0
    %3672 = vmatprep.subr.bf16.mxu0 0
    %3673 = vmatpush1.bf16.msra.mxu0 0
    %3674 = vmatprep.subr.bf16.mxu0 0
    %3675 = vmatpush1.bf16.msra.mxu0 0
    %3676 = vmatprep.subr.bf16.mxu0 0
    %3677 = vmatpush1.bf16.msra.mxu0 0
    %3678 = vmatprep.mubr.bf16.mxu0 0
    %3679 = vmatmul.mubr.bf16.gmra.mrb[0].mxu0 %v3596
    %v3680 = vpop.f32.mrb[0].mxu0
    %v3681 = vadd.f32 0.0, %v3680
    %v3682 = vpop.f32.mrb[0].mxu0
    %v3683 = vpop.f32.mrb[0].mxu0
    %v3684 = vadd.f32 0.0, %v3683
    %v3685 = vpop.f32.mrb[0].mxu0
    %3686 = vdwg.mxu0
    %v3687 = vadd.f32 %v3421, %v3681
    %v3688 = vadd.f32 %v3422, %v3684
    %v3689 = vld [vmem:[%s7] sm:$0x1]
    %v3691 = vlaneseq
    %v3692 = vshrl.u32 %v3691, 7
    %v3693 = vsub.s32 0, %v3692
    %v3694 = vrot.slane %v3689, %v3693
    %v3696 = vadd.f32 %v3687, %v3694
    %v3697 = vadd.f32 %v3688, %v3694
    %v3698 = vmax.f32 %v3696, 0.0
    %v3699 = vmax.f32 %v3697, 0.0
    %v3700 = vpack.c.bf16 %v3699, %v3698
    %v3701 = vld [vmem:[%s8] sm:$0xf]
    %v3702 = vld [vmem:[%s8 + $0x4] sm:$0xf]
    %v3703 = vld [vmem:[%s8 + $0x8] sm:$0xf]
    %v3704 = vld [vmem:[%s8 + $0xc] sm:$0xf]
    %v3705 = vld [vmem:[%s8 + $0x10] sm:$0xf]
    %v3706 = vld [vmem:[%s8 + $0x14] sm:$0xf]
    %v3707 = vld [vmem:[%s8 + $0x18] sm:$0x1]
    %v3708 = vld [vmem:[%s9] sm:$0x1]
    %v3710 = vlaneseq
    %v3711 = vshrl.u32 %v3710, 7
    %v3712 = vsub.s32 0, %v3711
    %v3713 = vrot.slane %v3708, %v3712
    %v3722 = vunpack.c.l.b16 %v3701
    %v3723 = vunpack.c.l.b16 %v3702
    %v3724 = vunpack.c.l.b16 %v3703
    %v3725 = vunpack.c.l.b16 %v3704
    %v3726 = vunpack.c.l.b16 %v3705
    %v3727 = vunpack.c.l.b16 %v3706
    %v3728 = vunpack.c.l.b16 %v3707
    %v3729 = vpack.c.b16 %v3723, %v3722
    %v3730 = vpack.c.b16 %v3725, %v3724
    %v3731 = vpack.c.b16 %v3727, %v3726
    %v3732 = vpack.c.b16 %v3728, %v3728
    %vm3736 = vcmask 408576
    %v3738 = vsel %vm3736, %v3700, 0
    %vm3740 = vcmask 1040384
    %v3742 = vsel %vm3740, %v3732, 0
    %3744 = vmatprep.subr.bf16.mxu0 0
    %3745 = vmatpush1.bf16.msra.mxu0 %v3729
    %3746 = vmatprep.subr.bf16.mxu0 0
    %3747 = vmatpush1.bf16.msra.mxu0 %v3730
    %3748 = vmatprep.subr.bf16.mxu0 0
    %3749 = vmatpush1.bf16.msra.mxu0 %v3731
    %3750 = vmatprep.subr.bf16.mxu0 0
    %3751 = vmatpush1.bf16.msra.mxu0 %v3742
    %3752 = vmatprep.subr.bf16.mxu0 0
    %3753 = vmatpush1.bf16.msra.mxu0 0
    %3754 = vmatprep.subr.bf16.mxu0 0
    %3755 = vmatpush1.bf16.msra.mxu0 0
    %3756 = vmatprep.subr.bf16.mxu0 0
    %3757 = vmatpush1.bf16.msra.mxu0 0
    %3758 = vmatprep.subr.bf16.mxu0 0
    %3759 = vmatpush1.bf16.msra.mxu0 0
    %3760 = vmatprep.subr.bf16.mxu0 0
    %3761 = vmatpush1.bf16.msra.mxu0 0
    %3762 = vmatprep.subr.bf16.mxu0 0
    %3763 = vmatpush1.bf16.msra.mxu0 0
    %3764 = vmatprep.subr.bf16.mxu0 0
    %3765 = vmatpush1.bf16.msra.mxu0 0
    %3766 = vmatprep.subr.bf16.mxu0 0
    %3767 = vmatpush1.bf16.msra.mxu0 0
    %3768 = vmatprep.subr.bf16.mxu0 0
    %3769 = vmatpush1.bf16.msra.mxu0 0
    %3770 = vmatprep.subr.bf16.mxu0 0
    %3771 = vmatpush1.bf16.msra.mxu0 0
    %3772 = vmatprep.subr.bf16.mxu0 0
    %3773 = vmatpush1.bf16.msra.mxu0 0
    %3774 = vmatprep.subr.bf16.mxu0 0
    %3775 = vmatpush1.bf16.msra.mxu0 0
    %3776 = vmatprep.mubr.bf16.mxu0 0
    %3777 = vmatmul.mubr.bf16.gmra.mrb[0].mxu0 %v3738
    %v3778 = vpop.f32.mrb[0].mxu0
    %v3779 = vadd.f32 %v3713, %v3778
    %v3780 = vpop.f32.mrb[0].mxu0
    %v3781 = vpop.f32.mrb[0].mxu0
    %v3782 = vadd.f32 %v3713, %v3781
    %v3783 = vpop.f32.mrb[0].mxu0
    %3784 = vdwg.mxu0
    %vm3785 = vcmask 80896
    %v3786 = vsel %vm3785, %v3779, -inf
    %3787 = vmax.xlane.f32.xlu0 %v3786
    %v3788 = vpop.xlane.xlu0 %3787
    %v3789 = vsel %vm3785, %v3782, -inf
    %3790 = vmax.xlane.f32.xlu0 %v3789
    %v3791 = vpop.xlane.xlu0 %3790
    %v3792 = vsub.f32 %v3779, %v3788
    %v3793 = vsub.f32 %v3782, %v3791
    %v3794 = vmul.f32 %v3792, 1.442695
    %v3795 = vpow.pop %v3794
    %v3796 = vmul.f32 %v3793, 1.442695
    %v3797 = vpow.pop %v3796
    %v3798 = vsel %vm3785, %v3795, 0.0
    %3799 = vadd.xlane.f32.xlu0 %v3798
    %v3800 = vpop.xlane.xlu0 %3799
    %v3801 = vsel %vm3785, %v3797, 0.0
    %3802 = vadd.xlane.f32.xlu0 %v3801
    %v3803 = vpop.xlane.xlu0 %3802
    %v3804 = vlog2.pop %v3800
    %v3805 = vmul.f32 %v3804, 0.6931472
    %v3806 = vlog2.pop %v3803
    %v3807 = vmul.f32 %v3806, 0.6931472
    %v3808 = vadd.f32 %v3788, %v3805
    %v3809 = vadd.f32 %v3791, %v3807
    %v3810 = vsub.f32 %v3779, %v3808
    %v3811 = vsub.f32 %v3782, %v3809
    %3812 = vst.msk [vmem:[#allocation4] sm:$0xff] %vm3785, %v3810
    %3813 = vst.msk [vmem:[#allocation4 + $0x8] sm:$0xff] %vm3785, %v3811
    // Predicated region
    $region42: #{net_forward.1} parent=1 // pred_check
      _
    $region43: #{net_forward.1} parent=1 // pred_check_branch
      %3815 = sbr.rel (0) target = $region45
    $region44: #{net_forward.1} parent=1 // pred_region
      %s3817 = ssub.s32 256, 256
      %3818 = vsyncadd [#allocation5], %s3817
      %s3819 = sshll.u32 [#allocation4], 4
      %s3820 = int_to_ptr.vmem [resolvable:$true] %s3819
      %3825 = dma.vmem_to_hbm [thread:$0]  %s3820, 256, %s10, [#allocation5], 128, 128, 8
    $region45: #{net_forward.1} parent=1 // pred_fallthru
      _
    // Predicated region
    $region46: #{net_forward.1} parent=1 // pred_check
      _
    $region47: #{net_forward.1} parent=1 // pred_check_branch
      %3827 = sbr.rel (0) target = $region49
    $region48: #{net_forward.1} parent=1 // pred_region
      %3828 = dma.done [#allocation5], 256
    $region49: #{net_forward.1} parent=1 // pred_fallthru
      _
    %3829 = vsyncpa [#allocation5], 1

</llo_original>
